<compile_context>
chip_gen: v6e
topology: v6e:2x2x1
jax: 0.10.0
libtpu: 0.0.40
codegen_flags: <defaults>
</compile_context>

<pallas_src>
import math

import jax
import jax.numpy as jnp
from jax.experimental import pallas as pl
from jax.experimental.pallas import tpu as pltpu

# Problem sizes (small, consistent with an SD3 joint transformer block).
B = 2          # batch
SX = 16        # image-token sequence length (hidden_states)
SC = 8         # text-token sequence length (encoder_hidden_states)
SJ = SX + SC   # joint sequence length
D = 32         # hidden dim
H = 2          # attention heads
HD = D // H    # head dim
EPS = 1e-6
LANE = 128
assert 4 * D == LANE, "layout below assumes the FF inner dim (4D) == 128 lanes"

BATCH_BLOCK = B   # fold the whole (tiny) batch into one grid step (v5e/v6e);
                  # set to 1 to split the batch across TensorCores on v7x.

# ---- packed-parameter column layout (every slice start is 128-lane aligned) -----------
# WD slab: (D, WD_COLS) bf16 -- all matmuls whose contraction dim is D.
ADA_OFF   = 0                         # fused adaLN-Zero, 12 segments of 128 lanes
QKV_X_OFF = ADA_OFF + 12 * LANE       # head-major [Qh|Kh|Vh] x H, 128 lanes each
QKV_C_OFF = QKV_X_OFF + 3 * H * LANE
FF1_X_OFF = QKV_C_OFF + 3 * H * LANE  # (D, 4D), 4D == 128
FF1_C_OFF = FF1_X_OFF + LANE
WD_COLS   = FF1_C_OFF + LANE
# W4 slab: (4D, W4_COLS) bf16 -- all matmuls whose contraction dim is 128
# (FF down-projections + per-head attention output projections with zero-padded rows).
FF2_X_OFF = 0
FF2_C_OFF = FF2_X_OFF + LANE
OUT_X_OFF = FF2_C_OFF + LANE          # H segments of 128 lanes
OUT_C_OFF = OUT_X_OFF + H * LANE
W4_COLS   = OUT_C_OFF + H * LANE
# One f32 bias row shared by both slabs: [WD biases | W4 biases].
BIAS_COLS = WD_COLS + W4_COLS


# ---- shared per-sample math (used by the kernel body and the XLA reference) -----------
def _sd3_sample_math(x, c, temb, get_wd, get_w4, get_b, recip):
    """One batch element of the SD3 joint transformer block.

    x: (SX, D) f32, c: (SC, D) f32, temb: (1, D) f32.
    get_wd(off, n) -> (D, n) bf16;  get_w4(off, n) -> (4D, n) bf16;
    get_b(off, n)  -> (1, n) f32;   recip(s) -> 1/s.
    """
    bf16 = jnp.bfloat16

    def mm_d(v, off, n):     # (M, D) @ (D, n) + bias, bf16 MXU operands, f32 accumulation
        return jnp.dot(v.astype(bf16), get_wd(off, n),
                       preferred_element_type=jnp.float32) + get_b(off, n)

    def mm_4(v, off, n):     # (M, 4D) @ (4D, n) + bias
        return jnp.dot(v.astype(bf16), get_w4(off, n),
                       preferred_element_type=jnp.float32) + get_b(WD_COLS + off, n)

    def layer_norm(v):
        mu = jnp.mean(v, axis=-1, keepdims=True)
        var = jnp.mean(jnp.square(v - mu), axis=-1, keepdims=True)
        return (v - mu) * jax.lax.rsqrt(var + EPS)

    def gelu_tanh(v):        # torch GELU(approximate='tanh')
        return 0.5 * v * (1.0 + jnp.tanh(0.7978845608028654 * (v + 0.044715 * v * v * v)))

    # ---- adaLN-Zero: one fused (D -> 12*128) projection; chunks at 128-aligned lanes ---
    silu_t = temb * jax.nn.sigmoid(temb)                            # (1, D)
    mod = mm_d(silu_t, ADA_OFF, 12 * LANE)                          # (1, 12*128)
    mchunk = lambda i: mod[:, i * LANE: i * LANE + D]               # live lanes 0..D-1
    sh_msa, sc_msa, g_msa, sh_mlp, sc_mlp, g_mlp = [mchunk(i) for i in range(6)]
    csh_msa, csc_msa, cg_msa, csh_mlp, csc_mlp, cg_mlp = [mchunk(6 + i) for i in range(6)]

    norm_x = layer_norm(x) * (1.0 + sc_msa) + sh_msa                # (SX, D)
    norm_c = layer_norm(c) * (1.0 + csc_msa) + csh_msa              # (SC, D)

    # ---- joint attention over [sample ; context] tokens, head-major padded layout ------
    qkv_x = mm_d(norm_x, QKV_X_OFF, 3 * H * LANE)                   # (SX, 3*H*128)
    qkv_c = mm_d(norm_c, QKV_C_OFF, 3 * H * LANE)                   # (SC, 3*H*128)
    qkv = jnp.concatenate([qkv_x, qkv_c], axis=0)                   # (SJ, 3*H*128)

    attn_x = None
    attn_c = None
    for h in range(H):
        base = 3 * h * LANE
        q = qkv[:, base:            base + LANE]      # (SJ, 128); scale folded into W/b
        k = qkv[:, base + LANE:     base + 2 * LANE]  # lanes >= HD are exactly zero
        v = qkv[:, base + 2 * LANE: base + 3 * LANE]
        logits = jax.lax.dot_general(                  # q @ k^T (NT matmul, no .T relayout)
            q.astype(bf16), k.astype(bf16),
            (((1,), (1,)), ((), ())), preferred_element_type=jnp.float32)  # (SJ, SJ)
        m = jnp.max(logits, axis=-1, keepdims=True)
        p = jnp.exp(logits - m)                                     # f32 softmax
        attn = p * recip(jnp.sum(p, axis=-1, keepdims=True))
        o = jnp.dot(attn.astype(bf16), v.astype(bf16),
                    preferred_element_type=jnp.float32)             # (SJ, 128), live 0..HD-1
        # Per-head output projections (zero rows beyond HD) accumulated in f32; the
        # projection bias is packed only in head 0's segment so it is added exactly once.
        px = mm_4(o[:SX], OUT_X_OFF + h * LANE, D)                  # attn.to_out[0]
        pc = mm_4(o[SX:], OUT_C_OFF + h * LANE, D)                  # attn.to_add_out
        attn_x = px if attn_x is None else attn_x + px
        attn_c = pc if attn_c is None else attn_c + pc

    # ---- sample stream: gated residual + modulated LayerNorm + MLP --------------------
    x = x + g_msa * attn_x
    n2_x = layer_norm(x) * (1.0 + sc_mlp) + sh_mlp
    x = x + g_mlp * mm_4(gelu_tanh(mm_d(n2_x, FF1_X_OFF, 4 * D)), FF2_X_OFF, D)

    # ---- context stream ----------------------------------------------------------------
    c = c + cg_msa * attn_c
    n2_c = layer_norm(c) * (1.0 + csc_mlp) + csh_mlp
    c = c + cg_mlp * mm_4(gelu_tanh(mm_d(n2_c, FF1_C_OFF, 4 * D)), FF2_C_OFF, D)

    # SD3Block.forward returns (encoder_hidden_states, hidden_states) for idx != 23.
    return c, x


# ---- Pallas kernel ---------------------------------------------------------------------
def sd3_block_kernel(x_ref, c_ref, t_ref, wd_ref, w4_ref, b_ref, out_ref):
    get_wd = lambda off, n: wd_ref[:, off:off + n]
    get_w4 = lambda off, n: w4_ref[:, off:off + n]
    get_b = lambda off, n: b_ref[:, off:off + n]
    recip = lambda s: pl.reciprocal(s, approx=True)
    for bb in range(BATCH_BLOCK):                      # static unroll over the batch block
        c_out, x_out = _sd3_sample_math(x_ref[bb], c_ref[bb], t_ref[bb],
                                        get_wd, get_w4, get_b, recip)
        out_ref[bb, :SX, :] = x_out                    # merged (SJ, D) output slab
        out_ref[bb, SX:, :] = c_out


@jax.jit
def sd3_block(hidden_states, encoder_hidden_states, temb, wd, w4, bias):
    temb3 = temb[:, None, :]                           # (B, 1, D)
    per_b = lambda i: (i, 0, 0)
    const = lambda i: (0, 0)
    out = pl.pallas_call(
        sd3_block_kernel,
        out_shape=jax.ShapeDtypeStruct((B, SJ, D), jnp.float32),
        grid=(B // BATCH_BLOCK,),
        in_specs=[
            pl.BlockSpec((BATCH_BLOCK, SX, D), per_b),     # hidden_states
            pl.BlockSpec((BATCH_BLOCK, SC, D), per_b),     # encoder_hidden_states
            pl.BlockSpec((BATCH_BLOCK, 1, D), per_b),      # temb
            pl.BlockSpec((D, WD_COLS), const),             # packed (in=D) weights, bf16
            pl.BlockSpec((4 * D, W4_COLS), const),         # packed (in=4D) weights, bf16
            pl.BlockSpec((1, BIAS_COLS), const),           # packed biases, f32
        ],
        out_specs=pl.BlockSpec((BATCH_BLOCK, SJ, D), per_b),
        compiler_params=pltpu.CompilerParams(
            dimension_semantics=("parallel",)),            # 2-TC split when BATCH_BLOCK=1
    )(hidden_states, encoder_hidden_states, temb3, wd, w4, bias)
    # Module returns (encoder_hidden_states, hidden_states).
    return out[:, SX:, :], out[:, :SX, :]


# ---- host-side parameter packing (one-time) --------------------------------------------
def pack_params(params):
    """Pre-transpose to (in, out), fuse adaLN, head-major-pad QKV / out-proj, fold the
    softmax scale into Q, and pack everything into 3 tensors with 128-aligned columns."""
    (w_ada_x, b_ada_x, w_ada_c, b_ada_c,
     w_qkv_x, b_qkv_x, w_qkv_c, b_qkv_c,
     w_out_x, b_out_x, w_out_c, b_out_c,
     w_ff1_x, b_ff1_x, w_ff2_x, b_ff2_x,
     w_ff1_c, b_ff1_c, w_ff2_c, b_ff2_c) = params

    def pad_cols(a, width):
        return jnp.pad(a, ((0, 0), (0, width - a.shape[1])))

    # adaLN: (D, 6D) per stream -> 12 chunks, each zero-padded to its own 128-lane block.
    def pack_ada(w, b):
        wt = w.T
        ws = [pad_cols(wt[:, i * D:(i + 1) * D], LANE) for i in range(6)]
        bs = [pad_cols(b[:, i * D:(i + 1) * D], LANE) for i in range(6)]
        return jnp.concatenate(ws, 1), jnp.concatenate(bs, 1)

    # QKV: head-major [Qh|Kh|Vh] per head, each padded to 128 lanes; Q pre-scaled.
    att_scale = 1.0 / math.sqrt(HD)
    def pack_qkv(w, b):
        wt = w.T                                           # (D, 3D): [q | k | v] columns
        ws, bs = [], []
        for h in range(H):
            for part, s in ((0, att_scale), (1, 1.0), (2, 1.0)):
                lo = part * D + h * HD
                ws.append(pad_cols(wt[:, lo:lo + HD] * s, LANE))
                bs.append(pad_cols(b[:, lo:lo + HD] * s, LANE))
        return jnp.concatenate(ws, 1), jnp.concatenate(bs, 1)

    # Output projections: per-head (128, 128) blocks with zero rows beyond HD; the bias is
    # stored only in head 0's segment so the per-head accumulation adds it exactly once.
    def pack_out(w, b):
        wt = w.T                                           # (D, D); rows = head-major feats
        ws, bs = [], []
        for h in range(H):
            blk = jnp.zeros((4 * D, LANE), w.dtype)
            blk = blk.at[:HD, :D].set(wt[h * HD:(h + 1) * HD, :])
            ws.append(blk)
            bs.append(pad_cols(b, LANE) if h == 0 else jnp.zeros((1, LANE), b.dtype))
        return jnp.concatenate(ws, 1), jnp.concatenate(bs, 1)

    ada_w, ada_b = pack_ada(jnp.concatenate([w_ada_x, w_ada_c], axis=0).reshape(2, 6 * D, D)[0],
                            b_ada_x)  # placeholder, replaced below for clarity
    # (build sample and context adaLN separately, then concatenate in segment order)
    ada_xw, ada_xb = pack_ada(w_ada_x, b_ada_x)
    ada_cw, ada_cb = pack_ada(w_ada_c, b_ada_c)
    qkv_xw, qkv_xb = pack_qkv(w_qkv_x, b_qkv_x)
    qkv_cw, qkv_cb = pack_qkv(w_qkv_c, b_qkv_c)
    ff1_xw, ff1_xb = w_ff1_x.T, b_ff1_x                    # (D, 128), (1, 128)
    ff1_cw, ff1_cb = w_ff1_c.T, b_ff1_c

    wd = jnp.concatenate([ada_xw, ada_cw, qkv_xw, qkv_cw, ff1_xw, ff1_cw], axis=1)
    bd = jnp.concatenate([ada_xb, ada_cb, qkv_xb, qkv_cb, ff1_xb, ff1_cb], axis=1)

    ff2_xw, ff2_xb = pad_cols(w_ff2_x.T, LANE), pad_cols(b_ff2_x, LANE)
    ff2_cw, ff2_cb = pad_cols(w_ff2_c.T, LANE), pad_cols(b_ff2_c, LANE)
    out_xw, out_xb = pack_out(w_out_x, b_out_x)
    out_cw, out_cb = pack_out(w_out_c, b_out_c)

    w4 = jnp.concatenate([ff2_xw, ff2_cw, out_xw, out_cw], axis=1)
    b4 = jnp.concatenate([ff2_xb, ff2_cb, out_xb, out_cb], axis=1)

    assert wd.shape == (D, WD_COLS) and w4.shape == (4 * D, W4_COLS)
    bias = jnp.concatenate([bd, b4], axis=1)
    assert bias.shape == (1, BIAS_COLS)
    return wd.astype(jnp.bfloat16), w4.astype(jnp.bfloat16), bias.astype(jnp.float32)


# ---- references for validation ----------------------------------------------------------
def sd3_block_reference(x, c, temb, wd, w4, bias):
    """Identical (bf16-matmul, packed-param) math as the kernel, run through plain XLA."""
    def one(xb, cb, tb):
        return _sd3_sample_math(
            xb, cb, tb[None, :],
            lambda off, n: wd[:, off:off + n],
            lambda off, n: w4[:, off:off + n],
            lambda off, n: bias[:, off:off + n],
            lambda s: 1.0 / s)
    return jax.vmap(one)(x, c, temb)


def sd3_block_fp32_reference(x, c, temb, params):
    """Full-f32, per-tensor (diffusers-style) reference of the joint block."""
    (w_ada_x, b_ada_x, w_ada_c, b_ada_c,
     w_qkv_x, b_qkv_x, w_qkv_c, b_qkv_c,
     w_out_x, b_out_x, w_out_c, b_out_c,
     w_ff1_x, b_ff1_x, w_ff2_x, b_ff2_x,
     w_ff1_c, b_ff1_c, w_ff2_c, b_ff2_c) = params

    def linear(v, w, bvec):
        return jnp.dot(v, w.T, preferred_element_type=jnp.float32) + bvec

    def layer_norm(v):
        mu = jnp.mean(v, axis=-1, keepdims=True)
        var = jnp.mean(jnp.square(v - mu), axis=-1, keepdims=True)
        return (v - mu) * jax.lax.rsqrt(var + EPS)

    def gelu_tanh(v):
        return 0.5 * v * (1.0 + jnp.tanh(0.7978845608028654 * (v + 0.044715 * v * v * v)))

    silu_t = temb * jax.nn.sigmoid(temb)
    mod_x = linear(silu_t, w_ada_x, b_ada_x)
    mod_c = linear(silu_t, w_ada_c, b_ada_c)
    sh_msa, sc_msa, g_msa, sh_mlp, sc_mlp, g_mlp = [mod_x[:, i * D:(i + 1) * D] for i in range(6)]
    csh_msa, csc_msa, cg_msa, csh_mlp, csc_mlp, cg_mlp = [mod_c[:, i * D:(i + 1) * D] for i in range(6)]

    norm_x = layer_norm(x) * (1.0 + sc_msa[:, None, :]) + sh_msa[:, None, :]
    norm_c = layer_norm(c) * (1.0 + csc_msa[:, None, :]) + csh_msa[:, None, :]

    qkv_x = linear(norm_x.reshape(B * SX, D), w_qkv_x, b_qkv_x).reshape(B, SX, 3 * D)
    qkv_c = linear(norm_c.reshape(B * SC, D), w_qkv_c, b_qkv_c).reshape(B, SC, 3 * D)

    scale = 1.0 / math.sqrt(HD)
    o_heads = []
    for h in range(H):
        def head(qkv, which):
            lo = which * D + h * HD
            return qkv[:, :, lo:lo + HD]
        q = jnp.concatenate([head(qkv_x, 0), head(qkv_c, 0)], axis=1)
        k = jnp.concatenate([head(qkv_x, 1), head(qkv_c, 1)], axis=1)
        v = jnp.concatenate([head(qkv_x, 2), head(qkv_c, 2)], axis=1)
        logits = jnp.einsum('bqd,bkd->bqk', q, k, preferred_element_type=jnp.float32) * scale
        m = jnp.max(logits, axis=-1, keepdims=True)
        p = jnp.exp(logits - m)
        attn = p / jnp.sum(p, axis=-1, keepdims=True)
        o_heads.append(jnp.einsum('bqk,bkd->bqd', attn, v, preferred_element_type=jnp.float32))
    o = jnp.concatenate(o_heads, axis=-1)
    o_x, o_c = o[:, :SX, :], o[:, SX:, :]

    attn_x = linear(o_x.reshape(B * SX, D), w_out_x, b_out_x).reshape(B, SX, D)
    attn_c = linear(o_c.reshape(B * SC, D), w_out_c, b_out_c).reshape(B, SC, D)

    x = x + g_msa[:, None, :] * attn_x
    n2_x = layer_norm(x) * (1.0 + sc_mlp[:, None, :]) + sh_mlp[:, None, :]
    h1 = gelu_tanh(linear(n2_x.reshape(B * SX, D), w_ff1_x, b_ff1_x))
    x = x + g_mlp[:, None, :] * linear(h1, w_ff2_x, b_ff2_x).reshape(B, SX, D)

    c = c + cg_msa[:, None, :] * attn_c
    n2_c = layer_norm(c) * (1.0 + csc_mlp[:, None, :]) + csh_mlp[:, None, :]
    h1c = gelu_tanh(linear(n2_c.reshape(B * SC, D), w_ff1_c, b_ff1_c))
    c = c + cg_mlp[:, None, :] * linear(h1c, w_ff2_c, b_ff2_c).reshape(B, SC, D)

    return c, x


def init_params(key):
    """Deterministic synthetic parameters (shapes follow the SD3 joint block)."""
    shapes = [
        ((6 * D, D), (1, 6 * D)),   # norm1.linear          (adaLN-Zero, sample)
        ((6 * D, D), (1, 6 * D)),   # norm1_context.linear  (adaLN-Zero, context)
        ((3 * D, D), (1, 3 * D)),   # fused to_q/to_k/to_v
        ((3 * D, D), (1, 3 * D)),   # fused add_q/add_k/add_v_proj
        ((D, D), (1, D)),           # attn.to_out[0]
        ((D, D), (1, D)),           # attn.to_add_out
        ((4 * D, D), (1, 4 * D)),   # ff.net[0].proj
        ((D, 4 * D), (1, D)),       # ff.net[2]
        ((4 * D, D), (1, 4 * D)),   # ff_context.net[0].proj
        ((D, 4 * D), (1, D)),       # ff_context.net[2]
    ]
    params = []
    for w_shape, b_shape in shapes:
        key, kw, kb = jax.random.split(key, 3)
        params.append(jax.random.normal(kw, w_shape, jnp.float32) * 0.05)
        params.append(jax.random.normal(kb, b_shape, jnp.float32) * 0.02)
    return tuple(params)


if __name__ == "__main__":
    root = jax.random.PRNGKey(0)
    k_x, k_c, k_t, k_p = jax.random.split(root, 4)

    hidden_states = jax.random.normal(k_x, (B, SX, D), jnp.float32)
    encoder_hidden_states = jax.random.normal(k_c, (B, SC, D), jnp.float32)
    temb = jax.random.normal(k_t, (B, D), jnp.float32)
    raw_params = init_params(k_p)
    wd, w4, bias = pack_params(raw_params)   # one-time host-side packing / transpose

    c_out, x_out = sd3_block(hidden_states, encoder_hidden_states, temb, wd, w4, bias)
    jax.block_until_ready((c_out, x_out))

    # 1) Same math (bf16 matmuls, packed params) through plain XLA — tight tolerance.
    c_ref, x_ref = jax.jit(sd3_block_reference)(
        hidden_states, encoder_hidden_states, temb, wd, w4, bias)
    assert jnp.allclose(c_out, c_ref, rtol=5e-3, atol=5e-3)
    assert jnp.allclose(x_out, x_ref, rtol=5e-3, atol=5e-3)

    # 2) Full-f32 diffusers-style reference from the original per-tensor params —
    #    confirms the head-major packing / fused adaLN / folded softmax scale preserve
    #    module semantics (looser tolerance only because the kernel feeds the MXU bf16).
    c_f32, x_f32 = jax.jit(sd3_block_fp32_reference)(
        hidden_states, encoder_hidden_states, temb, raw_params)
    assert jnp.allclose(c_out, c_f32, rtol=3e-2, atol=3e-2)
    assert jnp.allclose(x_out, x_f32, rtol=3e-2, atol=3e-2)

    print("KERNEL_OK")
</pallas_src>

<mosaic_0001>
module attributes {stable_mosaic.version = 11 : i64} {
  func.func @sd3_block_kernel(%arg0: i32, %arg1: memref<2x16x32xf32, #tpu.memory_space<vmem>>, %arg2: memref<2x8x32xf32, #tpu.memory_space<vmem>>, %arg3: memref<2x1x32xf32, #tpu.memory_space<vmem>>, %arg4: memref<32x3328xbf16, #tpu.memory_space<vmem>>, %arg5: memref<128x768xbf16, #tpu.memory_space<vmem>>, %arg6: memref<1x4096xf32, #tpu.memory_space<vmem>>, %arg7: memref<2x24x32xf32, #tpu.memory_space<vmem>>) attributes {dimension_semantics = [#tpu.dimension_semantics<parallel>], iteration_bounds = array<i64: 1>, scalar_prefetch = 0 : i64, scratch_operands = 0 : i64, tpu.core_type = #tpu.core_type<tc>, window_params = [{transform_indices = @transform_0, window_bounds = array<i64: 2, 16, 32>}, {transform_indices = @transform_1, window_bounds = array<i64: 2, 8, 32>}, {transform_indices = @transform_2, window_bounds = array<i64: 2, 1, 32>}, {pipeline_mode = #tpu.pipeline_mode<synchronous>, transform_indices = @transform_3, window_bounds = array<i64: 32, 3328>}, {pipeline_mode = #tpu.pipeline_mode<synchronous>, transform_indices = @transform_4, window_bounds = array<i64: 128, 768>}, {pipeline_mode = #tpu.pipeline_mode<synchronous>, transform_indices = @transform_5, window_bounds = array<i64: 1, 4096>}, {transform_indices = @transform_6, window_bounds = array<i64: 2, 24, 32>}]} {
    %c0 = arith.constant 0 : index
    %c0_0 = arith.constant 0 : index
    %c0_1 = arith.constant 0 : index
    %0 = vector.load %arg1[%c0, %c0_0, %c0_1] : memref<2x16x32xf32, #tpu.memory_space<vmem>>, vector<1x16x32xf32>
    %1 = vector.shape_cast %0 : vector<1x16x32xf32> to vector<16x32xf32>
    %c0_2 = arith.constant 0 : index
    %c0_3 = arith.constant 0 : index
    %c0_4 = arith.constant 0 : index
    %2 = vector.load %arg2[%c0_2, %c0_3, %c0_4] : memref<2x8x32xf32, #tpu.memory_space<vmem>>, vector<1x8x32xf32>
    %3 = vector.shape_cast %2 : vector<1x8x32xf32> to vector<8x32xf32>
    %c0_5 = arith.constant 0 : index
    %c0_6 = arith.constant 0 : index
    %c0_7 = arith.constant 0 : index
    %4 = vector.load %arg3[%c0_5, %c0_6, %c0_7] : memref<2x1x32xf32, #tpu.memory_space<vmem>>, vector<1x1x32xf32>
    %5 = vector.shape_cast %4 : vector<1x1x32xf32> to vector<1x32xf32>
    %6 = arith.negf %5 : vector<1x32xf32>
    %7 = math.exp %6 : vector<1x32xf32>
    %cst = arith.constant 1.000000e+00 : f32
    %8 = vector.broadcast %cst : f32 to vector<1x32xf32>
    %9 = arith.addf %8, %7 : vector<1x32xf32>
    %10 = arith.divf %8, %9 : vector<1x32xf32>
    %11 = arith.mulf %5, %10 : vector<1x32xf32>
    %12 = arith.truncf %11 : vector<1x32xf32> to vector<1x32xbf16>
    %c0_8 = arith.constant 0 : index
    %c0_9 = arith.constant 0 : index
    %13 = vector.load %arg4[%c0_8, %c0_9] : memref<32x3328xbf16, #tpu.memory_space<vmem>>, vector<32x1536xbf16>
    %cst_10 = arith.constant dense<0.000000e+00> : vector<1x1536xf32>
    %14 = tpu.matmul %12, %13, %cst_10 {dimension_numbers = #tpu.dot_dimension_numbers<[1], [0], [0], [1], [0, 0, 1, 1], [], []>} : vector<1x32xbf16>, vector<32x1536xbf16>, vector<1x1536xf32> -> vector<1x1536xf32>
    %c0_11 = arith.constant 0 : index
    %c0_12 = arith.constant 0 : index
    %15 = vector.load %arg6[%c0_11, %c0_12] : memref<1x4096xf32, #tpu.memory_space<vmem>>, vector<1x1536xf32>
    %16 = arith.addf %14, %15 : vector<1x1536xf32>
    %17 = vector.extract_strided_slice %16 {offsets = [0, 0], sizes = [1, 32], strides = [1, 1]} : vector<1x1536xf32> to vector<1x32xf32>
    %18 = vector.extract_strided_slice %16 {offsets = [0, 128], sizes = [1, 32], strides = [1, 1]} : vector<1x1536xf32> to vector<1x32xf32>
    %19 = vector.extract_strided_slice %16 {offsets = [0, 256], sizes = [1, 32], strides = [1, 1]} : vector<1x1536xf32> to vector<1x32xf32>
    %20 = vector.extract_strided_slice %16 {offsets = [0, 384], sizes = [1, 32], strides = [1, 1]} : vector<1x1536xf32> to vector<1x32xf32>
    %21 = vector.extract_strided_slice %16 {offsets = [0, 512], sizes = [1, 32], strides = [1, 1]} : vector<1x1536xf32> to vector<1x32xf32>
    %22 = vector.extract_strided_slice %16 {offsets = [0, 640], sizes = [1, 32], strides = [1, 1]} : vector<1x1536xf32> to vector<1x32xf32>
    %23 = vector.extract_strided_slice %16 {offsets = [0, 768], sizes = [1, 32], strides = [1, 1]} : vector<1x1536xf32> to vector<1x32xf32>
    %24 = vector.extract_strided_slice %16 {offsets = [0, 896], sizes = [1, 32], strides = [1, 1]} : vector<1x1536xf32> to vector<1x32xf32>
    %25 = vector.extract_strided_slice %16 {offsets = [0, 1024], sizes = [1, 32], strides = [1, 1]} : vector<1x1536xf32> to vector<1x32xf32>
    %26 = vector.extract_strided_slice %16 {offsets = [0, 1152], sizes = [1, 32], strides = [1, 1]} : vector<1x1536xf32> to vector<1x32xf32>
    %27 = vector.extract_strided_slice %16 {offsets = [0, 1280], sizes = [1, 32], strides = [1, 1]} : vector<1x1536xf32> to vector<1x32xf32>
    %28 = vector.extract_strided_slice %16 {offsets = [0, 1408], sizes = [1, 32], strides = [1, 1]} : vector<1x1536xf32> to vector<1x32xf32>
    %cst_13 = arith.constant dense<0.000000e+00> : vector<16xf32>
    %29 = vector.multi_reduction <add>, %1, %cst_13 [1] : vector<16x32xf32> to vector<16xf32>
    %30 = vector.shape_cast %29 : vector<16xf32> to vector<16x1xf32>
    %cst_14 = arith.constant 3.200000e+01 : f32
    %31 = vector.broadcast %cst_14 : f32 to vector<16x1xf32>
    %32 = arith.divf %30, %31 : vector<16x1xf32>
    %33 = vector.broadcast %32 : vector<16x1xf32> to vector<16x32xf32>
    %34 = arith.subf %1, %33 : vector<16x32xf32>
    %35 = arith.mulf %34, %34 : vector<16x32xf32>
    %cst_15 = arith.constant dense<0.000000e+00> : vector<16xf32>
    %36 = vector.multi_reduction <add>, %35, %cst_15 [1] : vector<16x32xf32> to vector<16xf32>
    %37 = vector.shape_cast %36 : vector<16xf32> to vector<16x1xf32>
    %cst_16 = arith.constant 3.200000e+01 : f32
    %38 = vector.broadcast %cst_16 : f32 to vector<16x1xf32>
    %39 = arith.divf %37, %38 : vector<16x1xf32>
    %40 = vector.broadcast %32 : vector<16x1xf32> to vector<16x32xf32>
    %41 = arith.subf %1, %40 : vector<16x32xf32>
    %cst_17 = arith.constant 9.99999997E-7 : f32
    %42 = vector.broadcast %cst_17 : f32 to vector<16x1xf32>
    %43 = arith.addf %39, %42 : vector<16x1xf32>
    %44 = math.rsqrt %43 : vector<16x1xf32>
    %45 = vector.broadcast %44 : vector<16x1xf32> to vector<16x32xf32>
    %46 = arith.mulf %41, %45 : vector<16x32xf32>
    %cst_18 = arith.constant 1.000000e+00 : f32
    %47 = vector.broadcast %cst_18 : f32 to vector<1x32xf32>
    %48 = arith.addf %47, %18 : vector<1x32xf32>
    %49 = vector.broadcast %48 : vector<1x32xf32> to vector<16x32xf32>
    %50 = arith.mulf %46, %49 : vector<16x32xf32>
    %51 = vector.broadcast %17 : vector<1x32xf32> to vector<16x32xf32>
    %52 = arith.addf %50, %51 : vector<16x32xf32>
    %cst_19 = arith.constant dense<0.000000e+00> : vector<8xf32>
    %53 = vector.multi_reduction <add>, %3, %cst_19 [1] : vector<8x32xf32> to vector<8xf32>
    %54 = vector.shape_cast %53 : vector<8xf32> to vector<8x1xf32>
    %cst_20 = arith.constant 3.200000e+01 : f32
    %55 = vector.broadcast %cst_20 : f32 to vector<8x1xf32>
    %56 = arith.divf %54, %55 : vector<8x1xf32>
    %57 = vector.broadcast %56 : vector<8x1xf32> to vector<8x32xf32>
    %58 = arith.subf %3, %57 : vector<8x32xf32>
    %59 = arith.mulf %58, %58 : vector<8x32xf32>
    %cst_21 = arith.constant dense<0.000000e+00> : vector<8xf32>
    %60 = vector.multi_reduction <add>, %59, %cst_21 [1] : vector<8x32xf32> to vector<8xf32>
    %61 = vector.shape_cast %60 : vector<8xf32> to vector<8x1xf32>
    %cst_22 = arith.constant 3.200000e+01 : f32
    %62 = vector.broadcast %cst_22 : f32 to vector<8x1xf32>
    %63 = arith.divf %61, %62 : vector<8x1xf32>
    %64 = vector.broadcast %56 : vector<8x1xf32> to vector<8x32xf32>
    %65 = arith.subf %3, %64 : vector<8x32xf32>
    %cst_23 = arith.constant 9.99999997E-7 : f32
    %66 = vector.broadcast %cst_23 : f32 to vector<8x1xf32>
    %67 = arith.addf %63, %66 : vector<8x1xf32>
    %68 = math.rsqrt %67 : vector<8x1xf32>
    %69 = vector.broadcast %68 : vector<8x1xf32> to vector<8x32xf32>
    %70 = arith.mulf %65, %69 : vector<8x32xf32>
    %cst_24 = arith.constant 1.000000e+00 : f32
    %71 = vector.broadcast %cst_24 : f32 to vector<1x32xf32>
    %72 = arith.addf %71, %24 : vector<1x32xf32>
    %73 = vector.broadcast %72 : vector<1x32xf32> to vector<8x32xf32>
    %74 = arith.mulf %70, %73 : vector<8x32xf32>
    %75 = vector.broadcast %23 : vector<1x32xf32> to vector<8x32xf32>
    %76 = arith.addf %74, %75 : vector<8x32xf32>
    %77 = arith.truncf %52 : vector<16x32xf32> to vector<16x32xbf16>
    %c0_25 = arith.constant 0 : index
    %c1536 = arith.constant 1536 : index
    %78 = vector.load %arg4[%c0_25, %c1536] : memref<32x3328xbf16, #tpu.memory_space<vmem>>, vector<32x768xbf16>
    %cst_26 = arith.constant dense<0.000000e+00> : vector<16x768xf32>
    %79 = tpu.matmul %77, %78, %cst_26 {dimension_numbers = #tpu.dot_dimension_numbers<[1], [0], [0], [1], [0, 0, 1, 1], [], []>} : vector<16x32xbf16>, vector<32x768xbf16>, vector<16x768xf32> -> vector<16x768xf32>
    %c0_27 = arith.constant 0 : index
    %c1536_28 = arith.constant 1536 : index
    %80 = vector.load %arg6[%c0_27, %c1536_28] : memref<1x4096xf32, #tpu.memory_space<vmem>>, vector<1x768xf32>
    %81 = vector.broadcast %80 : vector<1x768xf32> to vector<16x768xf32>
    %82 = arith.addf %79, %81 : vector<16x768xf32>
    %83 = arith.truncf %76 : vector<8x32xf32> to vector<8x32xbf16>
    %c0_29 = arith.constant 0 : index
    %c2304 = arith.constant 2304 : index
    %84 = vector.load %arg4[%c0_29, %c2304] : memref<32x3328xbf16, #tpu.memory_space<vmem>>, vector<32x768xbf16>
    %cst_30 = arith.constant dense<0.000000e+00> : vector<8x768xf32>
    %85 = tpu.matmul %83, %84, %cst_30 {dimension_numbers = #tpu.dot_dimension_numbers<[1], [0], [0], [1], [0, 0, 1, 1], [], []>} : vector<8x32xbf16>, vector<32x768xbf16>, vector<8x768xf32> -> vector<8x768xf32>
    %c0_31 = arith.constant 0 : index
    %c2304_32 = arith.constant 2304 : index
    %86 = vector.load %arg6[%c0_31, %c2304_32] : memref<1x4096xf32, #tpu.memory_space<vmem>>, vector<1x768xf32>
    %87 = vector.broadcast %86 : vector<1x768xf32> to vector<8x768xf32>
    %88 = arith.addf %85, %87 : vector<8x768xf32>
    %89 = tpu.concatenate %82, %88 in 0 : vector<16x768xf32>, vector<8x768xf32> -> vector<24x768xf32>
    %90 = vector.extract_strided_slice %89 {offsets = [0, 0], sizes = [24, 128], strides = [1, 1]} : vector<24x768xf32> to vector<24x128xf32>
    %91 = vector.extract_strided_slice %89 {offsets = [0, 128], sizes = [24, 128], strides = [1, 1]} : vector<24x768xf32> to vector<24x128xf32>
    %92 = vector.extract_strided_slice %89 {offsets = [0, 256], sizes = [24, 128], strides = [1, 1]} : vector<24x768xf32> to vector<24x128xf32>
    %93 = arith.truncf %90 : vector<24x128xf32> to vector<24x128xbf16>
    %94 = arith.truncf %91 : vector<24x128xf32> to vector<24x128xbf16>
    %cst_33 = arith.constant dense<0.000000e+00> : vector<24x24xf32>
    %95 = tpu.matmul %93, %94, %cst_33 {dimension_numbers = #tpu.dot_dimension_numbers<[1], [1], [0], [0], [0, 0, 1, 0], [], []>} : vector<24x128xbf16>, vector<24x128xbf16>, vector<24x24xf32> -> vector<24x24xf32>
    %cst_34 = arith.constant dense<0xFF800000> : vector<24xf32>
    %96 = vector.multi_reduction <maximumf>, %95, %cst_34 [1] : vector<24x24xf32> to vector<24xf32>
    %97 = vector.shape_cast %96 : vector<24xf32> to vector<24x1xf32>
    %98 = vector.broadcast %97 : vector<24x1xf32> to vector<24x24xf32>
    %99 = arith.subf %95, %98 : vector<24x24xf32>
    %100 = math.exp %99 : vector<24x24xf32>
    %cst_35 = arith.constant dense<0.000000e+00> : vector<24xf32>
    %101 = vector.multi_reduction <add>, %100, %cst_35 [1] : vector<24x24xf32> to vector<24xf32>
    %102 = vector.shape_cast %101 : vector<24xf32> to vector<24x1xf32>
    %103 = tpu.reciprocal %102 {approx = true} : vector<24x1xf32> -> vector<24x1xf32>
    %104 = vector.broadcast %103 : vector<24x1xf32> to vector<24x24xf32>
    %105 = arith.mulf %100, %104 : vector<24x24xf32>
    %106 = arith.truncf %105 : vector<24x24xf32> to vector<24x24xbf16>
    %107 = arith.truncf %92 : vector<24x128xf32> to vector<24x128xbf16>
    %cst_36 = arith.constant dense<0.000000e+00> : vector<24x128xf32>
    %108 = tpu.matmul %106, %107, %cst_36 {dimension_numbers = #tpu.dot_dimension_numbers<[1], [0], [0], [1], [0, 0, 1, 1], [], []>} : vector<24x24xbf16>, vector<24x128xbf16>, vector<24x128xf32> -> vector<24x128xf32>
    %109 = vector.extract_strided_slice %108 {offsets = [0, 0], sizes = [16, 128], strides = [1, 1]} : vector<24x128xf32> to vector<16x128xf32>
    %110 = arith.truncf %109 : vector<16x128xf32> to vector<16x128xbf16>
    %c0_37 = arith.constant 0 : index
    %c256 = arith.constant 256 : index
    %111 = vector.load %arg5[%c0_37, %c256] : memref<128x768xbf16, #tpu.memory_space<vmem>>, vector<128x32xbf16>
    %cst_38 = arith.constant dense<0.000000e+00> : vector<16x32xf32>
    %112 = tpu.matmul %110, %111, %cst_38 {dimension_numbers = #tpu.dot_dimension_numbers<[1], [0], [0], [1], [0, 0, 1, 1], [], []>} : vector<16x128xbf16>, vector<128x32xbf16>, vector<16x32xf32> -> vector<16x32xf32>
    %c0_39 = arith.constant 0 : index
    %c3584 = arith.constant 3584 : index
    %113 = vector.load %arg6[%c0_39, %c3584] : memref<1x4096xf32, #tpu.memory_space<vmem>>, vector<1x32xf32>
    %114 = vector.broadcast %113 : vector<1x32xf32> to vector<16x32xf32>
    %115 = arith.addf %112, %114 : vector<16x32xf32>
    %116 = vector.extract_strided_slice %108 {offsets = [16, 0], sizes = [8, 128], strides = [1, 1]} : vector<24x128xf32> to vector<8x128xf32>
    %117 = arith.truncf %116 : vector<8x128xf32> to vector<8x128xbf16>
    %c0_40 = arith.constant 0 : index
    %c512 = arith.constant 512 : index
    %118 = vector.load %arg5[%c0_40, %c512] : memref<128x768xbf16, #tpu.memory_space<vmem>>, vector<128x32xbf16>
    %cst_41 = arith.constant dense<0.000000e+00> : vector<8x32xf32>
    %119 = tpu.matmul %117, %118, %cst_41 {dimension_numbers = #tpu.dot_dimension_numbers<[1], [0], [0], [1], [0, 0, 1, 1], [], []>} : vector<8x128xbf16>, vector<128x32xbf16>, vector<8x32xf32> -> vector<8x32xf32>
    %c0_42 = arith.constant 0 : index
    %c3840 = arith.constant 3840 : index
    %120 = vector.load %arg6[%c0_42, %c3840] : memref<1x4096xf32, #tpu.memory_space<vmem>>, vector<1x32xf32>
    %121 = vector.broadcast %120 : vector<1x32xf32> to vector<8x32xf32>
    %122 = arith.addf %119, %121 : vector<8x32xf32>
    %123 = vector.extract_strided_slice %89 {offsets = [0, 384], sizes = [24, 128], strides = [1, 1]} : vector<24x768xf32> to vector<24x128xf32>
    %124 = vector.extract_strided_slice %89 {offsets = [0, 512], sizes = [24, 128], strides = [1, 1]} : vector<24x768xf32> to vector<24x128xf32>
    %125 = vector.extract_strided_slice %89 {offsets = [0, 640], sizes = [24, 128], strides = [1, 1]} : vector<24x768xf32> to vector<24x128xf32>
    %126 = arith.truncf %123 : vector<24x128xf32> to vector<24x128xbf16>
    %127 = arith.truncf %124 : vector<24x128xf32> to vector<24x128xbf16>
    %cst_43 = arith.constant dense<0.000000e+00> : vector<24x24xf32>
    %128 = tpu.matmul %126, %127, %cst_43 {dimension_numbers = #tpu.dot_dimension_numbers<[1], [1], [0], [0], [0, 0, 1, 0], [], []>} : vector<24x128xbf16>, vector<24x128xbf16>, vector<24x24xf32> -> vector<24x24xf32>
    %cst_44 = arith.constant dense<0xFF800000> : vector<24xf32>
    %129 = vector.multi_reduction <maximumf>, %128, %cst_44 [1] : vector<24x24xf32> to vector<24xf32>
    %130 = vector.shape_cast %129 : vector<24xf32> to vector<24x1xf32>
    %131 = vector.broadcast %130 : vector<24x1xf32> to vector<24x24xf32>
    %132 = arith.subf %128, %131 : vector<24x24xf32>
    %133 = math.exp %132 : vector<24x24xf32>
    %cst_45 = arith.constant dense<0.000000e+00> : vector<24xf32>
    %134 = vector.multi_reduction <add>, %133, %cst_45 [1] : vector<24x24xf32> to vector<24xf32>
    %135 = vector.shape_cast %134 : vector<24xf32> to vector<24x1xf32>
    %136 = tpu.reciprocal %135 {approx = true} : vector<24x1xf32> -> vector<24x1xf32>
    %137 = vector.broadcast %136 : vector<24x1xf32> to vector<24x24xf32>
    %138 = arith.mulf %133, %137 : vector<24x24xf32>
    %139 = arith.truncf %138 : vector<24x24xf32> to vector<24x24xbf16>
    %140 = arith.truncf %125 : vector<24x128xf32> to vector<24x128xbf16>
    %cst_46 = arith.constant dense<0.000000e+00> : vector<24x128xf32>
    %141 = tpu.matmul %139, %140, %cst_46 {dimension_numbers = #tpu.dot_dimension_numbers<[1], [0], [0], [1], [0, 0, 1, 1], [], []>} : vector<24x24xbf16>, vector<24x128xbf16>, vector<24x128xf32> -> vector<24x128xf32>
    %142 = vector.extract_strided_slice %141 {offsets = [0, 0], sizes = [16, 128], strides = [1, 1]} : vector<24x128xf32> to vector<16x128xf32>
    %143 = arith.truncf %142 : vector<16x128xf32> to vector<16x128xbf16>
    %c0_47 = arith.constant 0 : index
    %c384 = arith.constant 384 : index
    %144 = vector.load %arg5[%c0_47, %c384] : memref<128x768xbf16, #tpu.memory_space<vmem>>, vector<128x32xbf16>
    %cst_48 = arith.constant dense<0.000000e+00> : vector<16x32xf32>
    %145 = tpu.matmul %143, %144, %cst_48 {dimension_numbers = #tpu.dot_dimension_numbers<[1], [0], [0], [1], [0, 0, 1, 1], [], []>} : vector<16x128xbf16>, vector<128x32xbf16>, vector<16x32xf32> -> vector<16x32xf32>
    %c0_49 = arith.constant 0 : index
    %c3712 = arith.constant 3712 : index
    %146 = vector.load %arg6[%c0_49, %c3712] : memref<1x4096xf32, #tpu.memory_space<vmem>>, vector<1x32xf32>
    %147 = vector.broadcast %146 : vector<1x32xf32> to vector<16x32xf32>
    %148 = arith.addf %145, %147 : vector<16x32xf32>
    %149 = vector.extract_strided_slice %141 {offsets = [16, 0], sizes = [8, 128], strides = [1, 1]} : vector<24x128xf32> to vector<8x128xf32>
    %150 = arith.truncf %149 : vector<8x128xf32> to vector<8x128xbf16>
    %c0_50 = arith.constant 0 : index
    %c640 = arith.constant 640 : index
    %151 = vector.load %arg5[%c0_50, %c640] : memref<128x768xbf16, #tpu.memory_space<vmem>>, vector<128x32xbf16>
    %cst_51 = arith.constant dense<0.000000e+00> : vector<8x32xf32>
    %152 = tpu.matmul %150, %151, %cst_51 {dimension_numbers = #tpu.dot_dimension_numbers<[1], [0], [0], [1], [0, 0, 1, 1], [], []>} : vector<8x128xbf16>, vector<128x32xbf16>, vector<8x32xf32> -> vector<8x32xf32>
    %c0_52 = arith.constant 0 : index
    %c3968 = arith.constant 3968 : index
    %153 = vector.load %arg6[%c0_52, %c3968] : memref<1x4096xf32, #tpu.memory_space<vmem>>, vector<1x32xf32>
    %154 = vector.broadcast %153 : vector<1x32xf32> to vector<8x32xf32>
    %155 = arith.addf %152, %154 : vector<8x32xf32>
    %156 = arith.addf %115, %148 : vector<16x32xf32>
    %157 = arith.addf %122, %155 : vector<8x32xf32>
    %158 = vector.broadcast %19 : vector<1x32xf32> to vector<16x32xf32>
    %159 = arith.mulf %158, %156 : vector<16x32xf32>
    %160 = arith.addf %1, %159 : vector<16x32xf32>
    %cst_53 = arith.constant dense<0.000000e+00> : vector<16xf32>
    %161 = vector.multi_reduction <add>, %160, %cst_53 [1] : vector<16x32xf32> to vector<16xf32>
    %162 = vector.shape_cast %161 : vector<16xf32> to vector<16x1xf32>
    %cst_54 = arith.constant 3.200000e+01 : f32
    %163 = vector.broadcast %cst_54 : f32 to vector<16x1xf32>
    %164 = arith.divf %162, %163 : vector<16x1xf32>
    %165 = vector.broadcast %164 : vector<16x1xf32> to vector<16x32xf32>
    %166 = arith.subf %160, %165 : vector<16x32xf32>
    %167 = arith.mulf %166, %166 : vector<16x32xf32>
    %cst_55 = arith.constant dense<0.000000e+00> : vector<16xf32>
    %168 = vector.multi_reduction <add>, %167, %cst_55 [1] : vector<16x32xf32> to vector<16xf32>
    %169 = vector.shape_cast %168 : vector<16xf32> to vector<16x1xf32>
    %cst_56 = arith.constant 3.200000e+01 : f32
    %170 = vector.broadcast %cst_56 : f32 to vector<16x1xf32>
    %171 = arith.divf %169, %170 : vector<16x1xf32>
    %172 = vector.broadcast %164 : vector<16x1xf32> to vector<16x32xf32>
    %173 = arith.subf %160, %172 : vector<16x32xf32>
    %cst_57 = arith.constant 9.99999997E-7 : f32
    %174 = vector.broadcast %cst_57 : f32 to vector<16x1xf32>
    %175 = arith.addf %171, %174 : vector<16x1xf32>
    %176 = math.rsqrt %175 : vector<16x1xf32>
    %177 = vector.broadcast %176 : vector<16x1xf32> to vector<16x32xf32>
    %178 = arith.mulf %173, %177 : vector<16x32xf32>
    %cst_58 = arith.constant 1.000000e+00 : f32
    %179 = vector.broadcast %cst_58 : f32 to vector<1x32xf32>
    %180 = arith.addf %179, %21 : vector<1x32xf32>
    %181 = vector.broadcast %180 : vector<1x32xf32> to vector<16x32xf32>
    %182 = arith.mulf %178, %181 : vector<16x32xf32>
    %183 = vector.broadcast %20 : vector<1x32xf32> to vector<16x32xf32>
    %184 = arith.addf %182, %183 : vector<16x32xf32>
    %185 = arith.truncf %184 : vector<16x32xf32> to vector<16x32xbf16>
    %c0_59 = arith.constant 0 : index
    %c3072 = arith.constant 3072 : index
    %186 = vector.load %arg4[%c0_59, %c3072] : memref<32x3328xbf16, #tpu.memory_space<vmem>>, vector<32x128xbf16>
    %cst_60 = arith.constant dense<0.000000e+00> : vector<16x128xf32>
    %187 = tpu.matmul %185, %186, %cst_60 {dimension_numbers = #tpu.dot_dimension_numbers<[1], [0], [0], [1], [0, 0, 1, 1], [], []>} : vector<16x32xbf16>, vector<32x128xbf16>, vector<16x128xf32> -> vector<16x128xf32>
    %c0_61 = arith.constant 0 : index
    %c3072_62 = arith.constant 3072 : index
    %188 = vector.load %arg6[%c0_61, %c3072_62] : memref<1x4096xf32, #tpu.memory_space<vmem>>, vector<1x128xf32>
    %189 = vector.broadcast %188 : vector<1x128xf32> to vector<16x128xf32>
    %190 = arith.addf %187, %189 : vector<16x128xf32>
    %cst_63 = arith.constant 5.000000e-01 : f32
    %191 = vector.broadcast %cst_63 : f32 to vector<16x128xf32>
    %192 = arith.mulf %191, %190 : vector<16x128xf32>
    %cst_64 = arith.constant 4.471500e-02 : f32
    %193 = vector.broadcast %cst_64 : f32 to vector<16x128xf32>
    %194 = arith.mulf %193, %190 : vector<16x128xf32>
    %195 = arith.mulf %194, %190 : vector<16x128xf32>
    %196 = arith.mulf %195, %190 : vector<16x128xf32>
    %197 = arith.addf %190, %196 : vector<16x128xf32>
    %cst_65 = arith.constant 0.797884583 : f32
    %198 = vector.broadcast %cst_65 : f32 to vector<16x128xf32>
    %199 = arith.mulf %198, %197 : vector<16x128xf32>
    %200 = math.tanh %199 : vector<16x128xf32>
    %cst_66 = arith.constant 1.000000e+00 : f32
    %201 = vector.broadcast %cst_66 : f32 to vector<16x128xf32>
    %202 = arith.addf %201, %200 : vector<16x128xf32>
    %203 = arith.mulf %192, %202 : vector<16x128xf32>
    %204 = arith.truncf %203 : vector<16x128xf32> to vector<16x128xbf16>
    %c0_67 = arith.constant 0 : index
    %c0_68 = arith.constant 0 : index
    %205 = vector.load %arg5[%c0_67, %c0_68] : memref<128x768xbf16, #tpu.memory_space<vmem>>, vector<128x32xbf16>
    %cst_69 = arith.constant dense<0.000000e+00> : vector<16x32xf32>
    %206 = tpu.matmul %204, %205, %cst_69 {dimension_numbers = #tpu.dot_dimension_numbers<[1], [0], [0], [1], [0, 0, 1, 1], [], []>} : vector<16x128xbf16>, vector<128x32xbf16>, vector<16x32xf32> -> vector<16x32xf32>
    %c0_70 = arith.constant 0 : index
    %c3328 = arith.constant 3328 : index
    %207 = vector.load %arg6[%c0_70, %c3328] : memref<1x4096xf32, #tpu.memory_space<vmem>>, vector<1x32xf32>
    %208 = vector.broadcast %207 : vector<1x32xf32> to vector<16x32xf32>
    %209 = arith.addf %206, %208 : vector<16x32xf32>
    %210 = vector.broadcast %22 : vector<1x32xf32> to vector<16x32xf32>
    %211 = arith.mulf %210, %209 : vector<16x32xf32>
    %212 = arith.addf %160, %211 : vector<16x32xf32>
    %213 = vector.broadcast %25 : vector<1x32xf32> to vector<8x32xf32>
    %214 = arith.mulf %213, %157 : vector<8x32xf32>
    %215 = arith.addf %3, %214 : vector<8x32xf32>
    %cst_71 = arith.constant dense<0.000000e+00> : vector<8xf32>
    %216 = vector.multi_reduction <add>, %215, %cst_71 [1] : vector<8x32xf32> to vector<8xf32>
    %217 = vector.shape_cast %216 : vector<8xf32> to vector<8x1xf32>
    %cst_72 = arith.constant 3.200000e+01 : f32
    %218 = vector.broadcast %cst_72 : f32 to vector<8x1xf32>
    %219 = arith.divf %217, %218 : vector<8x1xf32>
    %220 = vector.broadcast %219 : vector<8x1xf32> to vector<8x32xf32>
    %221 = arith.subf %215, %220 : vector<8x32xf32>
    %222 = arith.mulf %221, %221 : vector<8x32xf32>
    %cst_73 = arith.constant dense<0.000000e+00> : vector<8xf32>
    %223 = vector.multi_reduction <add>, %222, %cst_73 [1] : vector<8x32xf32> to vector<8xf32>
    %224 = vector.shape_cast %223 : vector<8xf32> to vector<8x1xf32>
    %cst_74 = arith.constant 3.200000e+01 : f32
    %225 = vector.broadcast %cst_74 : f32 to vector<8x1xf32>
    %226 = arith.divf %224, %225 : vector<8x1xf32>
    %227 = vector.broadcast %219 : vector<8x1xf32> to vector<8x32xf32>
    %228 = arith.subf %215, %227 : vector<8x32xf32>
    %cst_75 = arith.constant 9.99999997E-7 : f32
    %229 = vector.broadcast %cst_75 : f32 to vector<8x1xf32>
    %230 = arith.addf %226, %229 : vector<8x1xf32>
    %231 = math.rsqrt %230 : vector<8x1xf32>
    %232 = vector.broadcast %231 : vector<8x1xf32> to vector<8x32xf32>
    %233 = arith.mulf %228, %232 : vector<8x32xf32>
    %cst_76 = arith.constant 1.000000e+00 : f32
    %234 = vector.broadcast %cst_76 : f32 to vector<1x32xf32>
    %235 = arith.addf %234, %27 : vector<1x32xf32>
    %236 = vector.broadcast %235 : vector<1x32xf32> to vector<8x32xf32>
    %237 = arith.mulf %233, %236 : vector<8x32xf32>
    %238 = vector.broadcast %26 : vector<1x32xf32> to vector<8x32xf32>
    %239 = arith.addf %237, %238 : vector<8x32xf32>
    %240 = arith.truncf %239 : vector<8x32xf32> to vector<8x32xbf16>
    %c0_77 = arith.constant 0 : index
    %c3200 = arith.constant 3200 : index
    %241 = vector.load %arg4[%c0_77, %c3200] : memref<32x3328xbf16, #tpu.memory_space<vmem>>, vector<32x128xbf16>
    %cst_78 = arith.constant dense<0.000000e+00> : vector<8x128xf32>
    %242 = tpu.matmul %240, %241, %cst_78 {dimension_numbers = #tpu.dot_dimension_numbers<[1], [0], [0], [1], [0, 0, 1, 1], [], []>} : vector<8x32xbf16>, vector<32x128xbf16>, vector<8x128xf32> -> vector<8x128xf32>
    %c0_79 = arith.constant 0 : index
    %c3200_80 = arith.constant 3200 : index
    %243 = vector.load %arg6[%c0_79, %c3200_80] : memref<1x4096xf32, #tpu.memory_space<vmem>>, vector<1x128xf32>
    %244 = vector.broadcast %243 : vector<1x128xf32> to vector<8x128xf32>
    %245 = arith.addf %242, %244 : vector<8x128xf32>
    %cst_81 = arith.constant 5.000000e-01 : f32
    %246 = vector.broadcast %cst_81 : f32 to vector<8x128xf32>
    %247 = arith.mulf %246, %245 : vector<8x128xf32>
    %cst_82 = arith.constant 4.471500e-02 : f32
    %248 = vector.broadcast %cst_82 : f32 to vector<8x128xf32>
    %249 = arith.mulf %248, %245 : vector<8x128xf32>
    %250 = arith.mulf %249, %245 : vector<8x128xf32>
    %251 = arith.mulf %250, %245 : vector<8x128xf32>
    %252 = arith.addf %245, %251 : vector<8x128xf32>
    %cst_83 = arith.constant 0.797884583 : f32
    %253 = vector.broadcast %cst_83 : f32 to vector<8x128xf32>
    %254 = arith.mulf %253, %252 : vector<8x128xf32>
    %255 = math.tanh %254 : vector<8x128xf32>
    %cst_84 = arith.constant 1.000000e+00 : f32
    %256 = vector.broadcast %cst_84 : f32 to vector<8x128xf32>
    %257 = arith.addf %256, %255 : vector<8x128xf32>
    %258 = arith.mulf %247, %257 : vector<8x128xf32>
    %259 = arith.truncf %258 : vector<8x128xf32> to vector<8x128xbf16>
    %c0_85 = arith.constant 0 : index
    %c128 = arith.constant 128 : index
    %260 = vector.load %arg5[%c0_85, %c128] : memref<128x768xbf16, #tpu.memory_space<vmem>>, vector<128x32xbf16>
    %cst_86 = arith.constant dense<0.000000e+00> : vector<8x32xf32>
    %261 = tpu.matmul %259, %260, %cst_86 {dimension_numbers = #tpu.dot_dimension_numbers<[1], [0], [0], [1], [0, 0, 1, 1], [], []>} : vector<8x128xbf16>, vector<128x32xbf16>, vector<8x32xf32> -> vector<8x32xf32>
    %c0_87 = arith.constant 0 : index
    %c3456 = arith.constant 3456 : index
    %262 = vector.load %arg6[%c0_87, %c3456] : memref<1x4096xf32, #tpu.memory_space<vmem>>, vector<1x32xf32>
    %263 = vector.broadcast %262 : vector<1x32xf32> to vector<8x32xf32>
    %264 = arith.addf %261, %263 : vector<8x32xf32>
    %265 = vector.broadcast %28 : vector<1x32xf32> to vector<8x32xf32>
    %266 = arith.mulf %265, %264 : vector<8x32xf32>
    %267 = arith.addf %215, %266 : vector<8x32xf32>
    %c0_88 = arith.constant 0 : index
    %c0_89 = arith.constant 0 : index
    %c0_90 = arith.constant 0 : index
    %268 = vector.load %arg7[%c0_88, %c0_89, %c0_90] : memref<2x24x32xf32, #tpu.memory_space<vmem>>, vector<1x16x32xf32>
    %269 = vector.shape_cast %268 : vector<1x16x32xf32> to vector<16x32xf32>
    %270 = vector.shape_cast %212 : vector<16x32xf32> to vector<1x16x32xf32>
    tpu.vector_store %arg7[%c0_88, %c0_89, %c0_90], %270 {strides = array<i32>} : memref<2x24x32xf32, #tpu.memory_space<vmem>>, vector<1x16x32xf32>,
    %c0_91 = arith.constant 0 : index
    %c16 = arith.constant 16 : index
    %c0_92 = arith.constant 0 : index
    %271 = vector.load %arg7[%c0_91, %c16, %c0_92] : memref<2x24x32xf32, #tpu.memory_space<vmem>>, vector<1x8x32xf32>
    %272 = vector.shape_cast %271 : vector<1x8x32xf32> to vector<8x32xf32>
    %273 = vector.shape_cast %267 : vector<8x32xf32> to vector<1x8x32xf32>
    tpu.vector_store %arg7[%c0_91, %c16, %c0_92], %273 {strides = array<i32>} : memref<2x24x32xf32, #tpu.memory_space<vmem>>, vector<1x8x32xf32>,
    %c1 = arith.constant 1 : index
    %c0_93 = arith.constant 0 : index
    %c0_94 = arith.constant 0 : index
    %274 = vector.load %arg1[%c1, %c0_93, %c0_94] : memref<2x16x32xf32, #tpu.memory_space<vmem>>, vector<1x16x32xf32>
    %275 = vector.shape_cast %274 : vector<1x16x32xf32> to vector<16x32xf32>
    %c1_95 = arith.constant 1 : index
    %c0_96 = arith.constant 0 : index
    %c0_97 = arith.constant 0 : index
    %276 = vector.load %arg2[%c1_95, %c0_96, %c0_97] : memref<2x8x32xf32, #tpu.memory_space<vmem>>, vector<1x8x32xf32>
    %277 = vector.shape_cast %276 : vector<1x8x32xf32> to vector<8x32xf32>
    %c1_98 = arith.constant 1 : index
    %c0_99 = arith.constant 0 : index
    %c0_100 = arith.constant 0 : index
    %278 = vector.load %arg3[%c1_98, %c0_99, %c0_100] : memref<2x1x32xf32, #tpu.memory_space<vmem>>, vector<1x1x32xf32>
    %279 = vector.shape_cast %278 : vector<1x1x32xf32> to vector<1x32xf32>
    %280 = arith.negf %279 : vector<1x32xf32>
    %281 = math.exp %280 : vector<1x32xf32>
    %cst_101 = arith.constant 1.000000e+00 : f32
    %282 = vector.broadcast %cst_101 : f32 to vector<1x32xf32>
    %283 = arith.addf %282, %281 : vector<1x32xf32>
    %284 = arith.divf %282, %283 : vector<1x32xf32>
    %285 = arith.mulf %279, %284 : vector<1x32xf32>
    %286 = arith.truncf %285 : vector<1x32xf32> to vector<1x32xbf16>
    %c0_102 = arith.constant 0 : index
    %c0_103 = arith.constant 0 : index
    %287 = vector.load %arg4[%c0_102, %c0_103] : memref<32x3328xbf16, #tpu.memory_space<vmem>>, vector<32x1536xbf16>
    %cst_104 = arith.constant dense<0.000000e+00> : vector<1x1536xf32>
    %288 = tpu.matmul %286, %287, %cst_104 {dimension_numbers = #tpu.dot_dimension_numbers<[1], [0], [0], [1], [0, 0, 1, 1], [], []>} : vector<1x32xbf16>, vector<32x1536xbf16>, vector<1x1536xf32> -> vector<1x1536xf32>
    %c0_105 = arith.constant 0 : index
    %c0_106 = arith.constant 0 : index
    %289 = vector.load %arg6[%c0_105, %c0_106] : memref<1x4096xf32, #tpu.memory_space<vmem>>, vector<1x1536xf32>
    %290 = arith.addf %288, %289 : vector<1x1536xf32>
    %291 = vector.extract_strided_slice %290 {offsets = [0, 0], sizes = [1, 32], strides = [1, 1]} : vector<1x1536xf32> to vector<1x32xf32>
    %292 = vector.extract_strided_slice %290 {offsets = [0, 128], sizes = [1, 32], strides = [1, 1]} : vector<1x1536xf32> to vector<1x32xf32>
    %293 = vector.extract_strided_slice %290 {offsets = [0, 256], sizes = [1, 32], strides = [1, 1]} : vector<1x1536xf32> to vector<1x32xf32>
    %294 = vector.extract_strided_slice %290 {offsets = [0, 384], sizes = [1, 32], strides = [1, 1]} : vector<1x1536xf32> to vector<1x32xf32>
    %295 = vector.extract_strided_slice %290 {offsets = [0, 512], sizes = [1, 32], strides = [1, 1]} : vector<1x1536xf32> to vector<1x32xf32>
    %296 = vector.extract_strided_slice %290 {offsets = [0, 640], sizes = [1, 32], strides = [1, 1]} : vector<1x1536xf32> to vector<1x32xf32>
    %297 = vector.extract_strided_slice %290 {offsets = [0, 768], sizes = [1, 32], strides = [1, 1]} : vector<1x1536xf32> to vector<1x32xf32>
    %298 = vector.extract_strided_slice %290 {offsets = [0, 896], sizes = [1, 32], strides = [1, 1]} : vector<1x1536xf32> to vector<1x32xf32>
    %299 = vector.extract_strided_slice %290 {offsets = [0, 1024], sizes = [1, 32], strides = [1, 1]} : vector<1x1536xf32> to vector<1x32xf32>
    %300 = vector.extract_strided_slice %290 {offsets = [0, 1152], sizes = [1, 32], strides = [1, 1]} : vector<1x1536xf32> to vector<1x32xf32>
    %301 = vector.extract_strided_slice %290 {offsets = [0, 1280], sizes = [1, 32], strides = [1, 1]} : vector<1x1536xf32> to vector<1x32xf32>
    %302 = vector.extract_strided_slice %290 {offsets = [0, 1408], sizes = [1, 32], strides = [1, 1]} : vector<1x1536xf32> to vector<1x32xf32>
    %cst_107 = arith.constant dense<0.000000e+00> : vector<16xf32>
    %303 = vector.multi_reduction <add>, %275, %cst_107 [1] : vector<16x32xf32> to vector<16xf32>
    %304 = vector.shape_cast %303 : vector<16xf32> to vector<16x1xf32>
    %cst_108 = arith.constant 3.200000e+01 : f32
    %305 = vector.broadcast %cst_108 : f32 to vector<16x1xf32>
    %306 = arith.divf %304, %305 : vector<16x1xf32>
    %307 = vector.broadcast %306 : vector<16x1xf32> to vector<16x32xf32>
    %308 = arith.subf %275, %307 : vector<16x32xf32>
    %309 = arith.mulf %308, %308 : vector<16x32xf32>
    %cst_109 = arith.constant dense<0.000000e+00> : vector<16xf32>
    %310 = vector.multi_reduction <add>, %309, %cst_109 [1] : vector<16x32xf32> to vector<16xf32>
    %311 = vector.shape_cast %310 : vector<16xf32> to vector<16x1xf32>
    %cst_110 = arith.constant 3.200000e+01 : f32
    %312 = vector.broadcast %cst_110 : f32 to vector<16x1xf32>
    %313 = arith.divf %311, %312 : vector<16x1xf32>
    %314 = vector.broadcast %306 : vector<16x1xf32> to vector<16x32xf32>
    %315 = arith.subf %275, %314 : vector<16x32xf32>
    %cst_111 = arith.constant 9.99999997E-7 : f32
    %316 = vector.broadcast %cst_111 : f32 to vector<16x1xf32>
    %317 = arith.addf %313, %316 : vector<16x1xf32>
    %318 = math.rsqrt %317 : vector<16x1xf32>
    %319 = vector.broadcast %318 : vector<16x1xf32> to vector<16x32xf32>
    %320 = arith.mulf %315, %319 : vector<16x32xf32>
    %cst_112 = arith.constant 1.000000e+00 : f32
    %321 = vector.broadcast %cst_112 : f32 to vector<1x32xf32>
    %322 = arith.addf %321, %292 : vector<1x32xf32>
    %323 = vector.broadcast %322 : vector<1x32xf32> to vector<16x32xf32>
    %324 = arith.mulf %320, %323 : vector<16x32xf32>
    %325 = vector.broadcast %291 : vector<1x32xf32> to vector<16x32xf32>
    %326 = arith.addf %324, %325 : vector<16x32xf32>
    %cst_113 = arith.constant dense<0.000000e+00> : vector<8xf32>
    %327 = vector.multi_reduction <add>, %277, %cst_113 [1] : vector<8x32xf32> to vector<8xf32>
    %328 = vector.shape_cast %327 : vector<8xf32> to vector<8x1xf32>
    %cst_114 = arith.constant 3.200000e+01 : f32
    %329 = vector.broadcast %cst_114 : f32 to vector<8x1xf32>
    %330 = arith.divf %328, %329 : vector<8x1xf32>
    %331 = vector.broadcast %330 : vector<8x1xf32> to vector<8x32xf32>
    %332 = arith.subf %277, %331 : vector<8x32xf32>
    %333 = arith.mulf %332, %332 : vector<8x32xf32>
    %cst_115 = arith.constant dense<0.000000e+00> : vector<8xf32>
    %334 = vector.multi_reduction <add>, %333, %cst_115 [1] : vector<8x32xf32> to vector<8xf32>
    %335 = vector.shape_cast %334 : vector<8xf32> to vector<8x1xf32>
    %cst_116 = arith.constant 3.200000e+01 : f32
    %336 = vector.broadcast %cst_116 : f32 to vector<8x1xf32>
    %337 = arith.divf %335, %336 : vector<8x1xf32>
    %338 = vector.broadcast %330 : vector<8x1xf32> to vector<8x32xf32>
    %339 = arith.subf %277, %338 : vector<8x32xf32>
    %cst_117 = arith.constant 9.99999997E-7 : f32
    %340 = vector.broadcast %cst_117 : f32 to vector<8x1xf32>
    %341 = arith.addf %337, %340 : vector<8x1xf32>
    %342 = math.rsqrt %341 : vector<8x1xf32>
    %343 = vector.broadcast %342 : vector<8x1xf32> to vector<8x32xf32>
    %344 = arith.mulf %339, %343 : vector<8x32xf32>
    %cst_118 = arith.constant 1.000000e+00 : f32
    %345 = vector.broadcast %cst_118 : f32 to vector<1x32xf32>
    %346 = arith.addf %345, %298 : vector<1x32xf32>
    %347 = vector.broadcast %346 : vector<1x32xf32> to vector<8x32xf32>
    %348 = arith.mulf %344, %347 : vector<8x32xf32>
    %349 = vector.broadcast %297 : vector<1x32xf32> to vector<8x32xf32>
    %350 = arith.addf %348, %349 : vector<8x32xf32>
    %351 = arith.truncf %326 : vector<16x32xf32> to vector<16x32xbf16>
    %c0_119 = arith.constant 0 : index
    %c1536_120 = arith.constant 1536 : index
    %352 = vector.load %arg4[%c0_119, %c1536_120] : memref<32x3328xbf16, #tpu.memory_space<vmem>>, vector<32x768xbf16>
    %cst_121 = arith.constant dense<0.000000e+00> : vector<16x768xf32>
    %353 = tpu.matmul %351, %352, %cst_121 {dimension_numbers = #tpu.dot_dimension_numbers<[1], [0], [0], [1], [0, 0, 1, 1], [], []>} : vector<16x32xbf16>, vector<32x768xbf16>, vector<16x768xf32> -> vector<16x768xf32>
    %c0_122 = arith.constant 0 : index
    %c1536_123 = arith.constant 1536 : index
    %354 = vector.load %arg6[%c0_122, %c1536_123] : memref<1x4096xf32, #tpu.memory_space<vmem>>, vector<1x768xf32>
    %355 = vector.broadcast %354 : vector<1x768xf32> to vector<16x768xf32>
    %356 = arith.addf %353, %355 : vector<16x768xf32>
    %357 = arith.truncf %350 : vector<8x32xf32> to vector<8x32xbf16>
    %c0_124 = arith.constant 0 : index
    %c2304_125 = arith.constant 2304 : index
    %358 = vector.load %arg4[%c0_124, %c2304_125] : memref<32x3328xbf16, #tpu.memory_space<vmem>>, vector<32x768xbf16>
    %cst_126 = arith.constant dense<0.000000e+00> : vector<8x768xf32>
    %359 = tpu.matmul %357, %358, %cst_126 {dimension_numbers = #tpu.dot_dimension_numbers<[1], [0], [0], [1], [0, 0, 1, 1], [], []>} : vector<8x32xbf16>, vector<32x768xbf16>, vector<8x768xf32> -> vector<8x768xf32>
    %c0_127 = arith.constant 0 : index
    %c2304_128 = arith.constant 2304 : index
    %360 = vector.load %arg6[%c0_127, %c2304_128] : memref<1x4096xf32, #tpu.memory_space<vmem>>, vector<1x768xf32>
    %361 = vector.broadcast %360 : vector<1x768xf32> to vector<8x768xf32>
    %362 = arith.addf %359, %361 : vector<8x768xf32>
    %363 = tpu.concatenate %356, %362 in 0 : vector<16x768xf32>, vector<8x768xf32> -> vector<24x768xf32>
    %364 = vector.extract_strided_slice %363 {offsets = [0, 0], sizes = [24, 128], strides = [1, 1]} : vector<24x768xf32> to vector<24x128xf32>
    %365 = vector.extract_strided_slice %363 {offsets = [0, 128], sizes = [24, 128], strides = [1, 1]} : vector<24x768xf32> to vector<24x128xf32>
    %366 = vector.extract_strided_slice %363 {offsets = [0, 256], sizes = [24, 128], strides = [1, 1]} : vector<24x768xf32> to vector<24x128xf32>
    %367 = arith.truncf %364 : vector<24x128xf32> to vector<24x128xbf16>
    %368 = arith.truncf %365 : vector<24x128xf32> to vector<24x128xbf16>
    %cst_129 = arith.constant dense<0.000000e+00> : vector<24x24xf32>
    %369 = tpu.matmul %367, %368, %cst_129 {dimension_numbers = #tpu.dot_dimension_numbers<[1], [1], [0], [0], [0, 0, 1, 0], [], []>} : vector<24x128xbf16>, vector<24x128xbf16>, vector<24x24xf32> -> vector<24x24xf32>
    %cst_130 = arith.constant dense<0xFF800000> : vector<24xf32>
    %370 = vector.multi_reduction <maximumf>, %369, %cst_130 [1] : vector<24x24xf32> to vector<24xf32>
    %371 = vector.shape_cast %370 : vector<24xf32> to vector<24x1xf32>
    %372 = vector.broadcast %371 : vector<24x1xf32> to vector<24x24xf32>
    %373 = arith.subf %369, %372 : vector<24x24xf32>
    %374 = math.exp %373 : vector<24x24xf32>
    %cst_131 = arith.constant dense<0.000000e+00> : vector<24xf32>
    %375 = vector.multi_reduction <add>, %374, %cst_131 [1] : vector<24x24xf32> to vector<24xf32>
    %376 = vector.shape_cast %375 : vector<24xf32> to vector<24x1xf32>
    %377 = tpu.reciprocal %376 {approx = true} : vector<24x1xf32> -> vector<24x1xf32>
    %378 = vector.broadcast %377 : vector<24x1xf32> to vector<24x24xf32>
    %379 = arith.mulf %374, %378 : vector<24x24xf32>
    %380 = arith.truncf %379 : vector<24x24xf32> to vector<24x24xbf16>
    %381 = arith.truncf %366 : vector<24x128xf32> to vector<24x128xbf16>
    %cst_132 = arith.constant dense<0.000000e+00> : vector<24x128xf32>
    %382 = tpu.matmul %380, %381, %cst_132 {dimension_numbers = #tpu.dot_dimension_numbers<[1], [0], [0], [1], [0, 0, 1, 1], [], []>} : vector<24x24xbf16>, vector<24x128xbf16>, vector<24x128xf32> -> vector<24x128xf32>
    %383 = vector.extract_strided_slice %382 {offsets = [0, 0], sizes = [16, 128], strides = [1, 1]} : vector<24x128xf32> to vector<16x128xf32>
    %384 = arith.truncf %383 : vector<16x128xf32> to vector<16x128xbf16>
    %c0_133 = arith.constant 0 : index
    %c256_134 = arith.constant 256 : index
    %385 = vector.load %arg5[%c0_133, %c256_134] : memref<128x768xbf16, #tpu.memory_space<vmem>>, vector<128x32xbf16>
    %cst_135 = arith.constant dense<0.000000e+00> : vector<16x32xf32>
    %386 = tpu.matmul %384, %385, %cst_135 {dimension_numbers = #tpu.dot_dimension_numbers<[1], [0], [0], [1], [0, 0, 1, 1], [], []>} : vector<16x128xbf16>, vector<128x32xbf16>, vector<16x32xf32> -> vector<16x32xf32>
    %c0_136 = arith.constant 0 : index
    %c3584_137 = arith.constant 3584 : index
    %387 = vector.load %arg6[%c0_136, %c3584_137] : memref<1x4096xf32, #tpu.memory_space<vmem>>, vector<1x32xf32>
    %388 = vector.broadcast %387 : vector<1x32xf32> to vector<16x32xf32>
    %389 = arith.addf %386, %388 : vector<16x32xf32>
    %390 = vector.extract_strided_slice %382 {offsets = [16, 0], sizes = [8, 128], strides = [1, 1]} : vector<24x128xf32> to vector<8x128xf32>
    %391 = arith.truncf %390 : vector<8x128xf32> to vector<8x128xbf16>
    %c0_138 = arith.constant 0 : index
    %c512_139 = arith.constant 512 : index
    %392 = vector.load %arg5[%c0_138, %c512_139] : memref<128x768xbf16, #tpu.memory_space<vmem>>, vector<128x32xbf16>
    %cst_140 = arith.constant dense<0.000000e+00> : vector<8x32xf32>
    %393 = tpu.matmul %391, %392, %cst_140 {dimension_numbers = #tpu.dot_dimension_numbers<[1], [0], [0], [1], [0, 0, 1, 1], [], []>} : vector<8x128xbf16>, vector<128x32xbf16>, vector<8x32xf32> -> vector<8x32xf32>
    %c0_141 = arith.constant 0 : index
    %c3840_142 = arith.constant 3840 : index
    %394 = vector.load %arg6[%c0_141, %c3840_142] : memref<1x4096xf32, #tpu.memory_space<vmem>>, vector<1x32xf32>
    %395 = vector.broadcast %394 : vector<1x32xf32> to vector<8x32xf32>
    %396 = arith.addf %393, %395 : vector<8x32xf32>
    %397 = vector.extract_strided_slice %363 {offsets = [0, 384], sizes = [24, 128], strides = [1, 1]} : vector<24x768xf32> to vector<24x128xf32>
    %398 = vector.extract_strided_slice %363 {offsets = [0, 512], sizes = [24, 128], strides = [1, 1]} : vector<24x768xf32> to vector<24x128xf32>
    %399 = vector.extract_strided_slice %363 {offsets = [0, 640], sizes = [24, 128], strides = [1, 1]} : vector<24x768xf32> to vector<24x128xf32>
    %400 = arith.truncf %397 : vector<24x128xf32> to vector<24x128xbf16>
    %401 = arith.truncf %398 : vector<24x128xf32> to vector<24x128xbf16>
    %cst_143 = arith.constant dense<0.000000e+00> : vector<24x24xf32>
    %402 = tpu.matmul %400, %401, %cst_143 {dimension_numbers = #tpu.dot_dimension_numbers<[1], [1], [0], [0], [0, 0, 1, 0], [], []>} : vector<24x128xbf16>, vector<24x128xbf16>, vector<24x24xf32> -> vector<24x24xf32>
    %cst_144 = arith.constant dense<0xFF800000> : vector<24xf32>
    %403 = vector.multi_reduction <maximumf>, %402, %cst_144 [1] : vector<24x24xf32> to vector<24xf32>
    %404 = vector.shape_cast %403 : vector<24xf32> to vector<24x1xf32>
    %405 = vector.broadcast %404 : vector<24x1xf32> to vector<24x24xf32>
    %406 = arith.subf %402, %405 : vector<24x24xf32>
    %407 = math.exp %406 : vector<24x24xf32>
    %cst_145 = arith.constant dense<0.000000e+00> : vector<24xf32>
    %408 = vector.multi_reduction <add>, %407, %cst_145 [1] : vector<24x24xf32> to vector<24xf32>
    %409 = vector.shape_cast %408 : vector<24xf32> to vector<24x1xf32>
    %410 = tpu.reciprocal %409 {approx = true} : vector<24x1xf32> -> vector<24x1xf32>
    %411 = vector.broadcast %410 : vector<24x1xf32> to vector<24x24xf32>
    %412 = arith.mulf %407, %411 : vector<24x24xf32>
    %413 = arith.truncf %412 : vector<24x24xf32> to vector<24x24xbf16>
    %414 = arith.truncf %399 : vector<24x128xf32> to vector<24x128xbf16>
    %cst_146 = arith.constant dense<0.000000e+00> : vector<24x128xf32>
    %415 = tpu.matmul %413, %414, %cst_146 {dimension_numbers = #tpu.dot_dimension_numbers<[1], [0], [0], [1], [0, 0, 1, 1], [], []>} : vector<24x24xbf16>, vector<24x128xbf16>, vector<24x128xf32> -> vector<24x128xf32>
    %416 = vector.extract_strided_slice %415 {offsets = [0, 0], sizes = [16, 128], strides = [1, 1]} : vector<24x128xf32> to vector<16x128xf32>
    %417 = arith.truncf %416 : vector<16x128xf32> to vector<16x128xbf16>
    %c0_147 = arith.constant 0 : index
    %c384_148 = arith.constant 384 : index
    %418 = vector.load %arg5[%c0_147, %c384_148] : memref<128x768xbf16, #tpu.memory_space<vmem>>, vector<128x32xbf16>
    %cst_149 = arith.constant dense<0.000000e+00> : vector<16x32xf32>
    %419 = tpu.matmul %417, %418, %cst_149 {dimension_numbers = #tpu.dot_dimension_numbers<[1], [0], [0], [1], [0, 0, 1, 1], [], []>} : vector<16x128xbf16>, vector<128x32xbf16>, vector<16x32xf32> -> vector<16x32xf32>
    %c0_150 = arith.constant 0 : index
    %c3712_151 = arith.constant 3712 : index
    %420 = vector.load %arg6[%c0_150, %c3712_151] : memref<1x4096xf32, #tpu.memory_space<vmem>>, vector<1x32xf32>
    %421 = vector.broadcast %420 : vector<1x32xf32> to vector<16x32xf32>
    %422 = arith.addf %419, %421 : vector<16x32xf32>
    %423 = vector.extract_strided_slice %415 {offsets = [16, 0], sizes = [8, 128], strides = [1, 1]} : vector<24x128xf32> to vector<8x128xf32>
    %424 = arith.truncf %423 : vector<8x128xf32> to vector<8x128xbf16>
    %c0_152 = arith.constant 0 : index
    %c640_153 = arith.constant 640 : index
    %425 = vector.load %arg5[%c0_152, %c640_153] : memref<128x768xbf16, #tpu.memory_space<vmem>>, vector<128x32xbf16>
    %cst_154 = arith.constant dense<0.000000e+00> : vector<8x32xf32>
    %426 = tpu.matmul %424, %425, %cst_154 {dimension_numbers = #tpu.dot_dimension_numbers<[1], [0], [0], [1], [0, 0, 1, 1], [], []>} : vector<8x128xbf16>, vector<128x32xbf16>, vector<8x32xf32> -> vector<8x32xf32>
    %c0_155 = arith.constant 0 : index
    %c3968_156 = arith.constant 3968 : index
    %427 = vector.load %arg6[%c0_155, %c3968_156] : memref<1x4096xf32, #tpu.memory_space<vmem>>, vector<1x32xf32>
    %428 = vector.broadcast %427 : vector<1x32xf32> to vector<8x32xf32>
    %429 = arith.addf %426, %428 : vector<8x32xf32>
    %430 = arith.addf %389, %422 : vector<16x32xf32>
    %431 = arith.addf %396, %429 : vector<8x32xf32>
    %432 = vector.broadcast %293 : vector<1x32xf32> to vector<16x32xf32>
    %433 = arith.mulf %432, %430 : vector<16x32xf32>
    %434 = arith.addf %275, %433 : vector<16x32xf32>
    %cst_157 = arith.constant dense<0.000000e+00> : vector<16xf32>
    %435 = vector.multi_reduction <add>, %434, %cst_157 [1] : vector<16x32xf32> to vector<16xf32>
    %436 = vector.shape_cast %435 : vector<16xf32> to vector<16x1xf32>
    %cst_158 = arith.constant 3.200000e+01 : f32
    %437 = vector.broadcast %cst_158 : f32 to vector<16x1xf32>
    %438 = arith.divf %436, %437 : vector<16x1xf32>
    %439 = vector.broadcast %438 : vector<16x1xf32> to vector<16x32xf32>
    %440 = arith.subf %434, %439 : vector<16x32xf32>
    %441 = arith.mulf %440, %440 : vector<16x32xf32>
    %cst_159 = arith.constant dense<0.000000e+00> : vector<16xf32>
    %442 = vector.multi_reduction <add>, %441, %cst_159 [1] : vector<16x32xf32> to vector<16xf32>
    %443 = vector.shape_cast %442 : vector<16xf32> to vector<16x1xf32>
    %cst_160 = arith.constant 3.200000e+01 : f32
    %444 = vector.broadcast %cst_160 : f32 to vector<16x1xf32>
    %445 = arith.divf %443, %444 : vector<16x1xf32>
    %446 = vector.broadcast %438 : vector<16x1xf32> to vector<16x32xf32>
    %447 = arith.subf %434, %446 : vector<16x32xf32>
    %cst_161 = arith.constant 9.99999997E-7 : f32
    %448 = vector.broadcast %cst_161 : f32 to vector<16x1xf32>
    %449 = arith.addf %445, %448 : vector<16x1xf32>
    %450 = math.rsqrt %449 : vector<16x1xf32>
    %451 = vector.broadcast %450 : vector<16x1xf32> to vector<16x32xf32>
    %452 = arith.mulf %447, %451 : vector<16x32xf32>
    %cst_162 = arith.constant 1.000000e+00 : f32
    %453 = vector.broadcast %cst_162 : f32 to vector<1x32xf32>
    %454 = arith.addf %453, %295 : vector<1x32xf32>
    %455 = vector.broadcast %454 : vector<1x32xf32> to vector<16x32xf32>
    %456 = arith.mulf %452, %455 : vector<16x32xf32>
    %457 = vector.broadcast %294 : vector<1x32xf32> to vector<16x32xf32>
    %458 = arith.addf %456, %457 : vector<16x32xf32>
    %459 = arith.truncf %458 : vector<16x32xf32> to vector<16x32xbf16>
    %c0_163 = arith.constant 0 : index
    %c3072_164 = arith.constant 3072 : index
    %460 = vector.load %arg4[%c0_163, %c3072_164] : memref<32x3328xbf16, #tpu.memory_space<vmem>>, vector<32x128xbf16>
    %cst_165 = arith.constant dense<0.000000e+00> : vector<16x128xf32>
    %461 = tpu.matmul %459, %460, %cst_165 {dimension_numbers = #tpu.dot_dimension_numbers<[1], [0], [0], [1], [0, 0, 1, 1], [], []>} : vector<16x32xbf16>, vector<32x128xbf16>, vector<16x128xf32> -> vector<16x128xf32>
    %c0_166 = arith.constant 0 : index
    %c3072_167 = arith.constant 3072 : index
    %462 = vector.load %arg6[%c0_166, %c3072_167] : memref<1x4096xf32, #tpu.memory_space<vmem>>, vector<1x128xf32>
    %463 = vector.broadcast %462 : vector<1x128xf32> to vector<16x128xf32>
    %464 = arith.addf %461, %463 : vector<16x128xf32>
    %cst_168 = arith.constant 5.000000e-01 : f32
    %465 = vector.broadcast %cst_168 : f32 to vector<16x128xf32>
    %466 = arith.mulf %465, %464 : vector<16x128xf32>
    %cst_169 = arith.constant 4.471500e-02 : f32
    %467 = vector.broadcast %cst_169 : f32 to vector<16x128xf32>
    %468 = arith.mulf %467, %464 : vector<16x128xf32>
    %469 = arith.mulf %468, %464 : vector<16x128xf32>
    %470 = arith.mulf %469, %464 : vector<16x128xf32>
    %471 = arith.addf %464, %470 : vector<16x128xf32>
    %cst_170 = arith.constant 0.797884583 : f32
    %472 = vector.broadcast %cst_170 : f32 to vector<16x128xf32>
    %473 = arith.mulf %472, %471 : vector<16x128xf32>
    %474 = math.tanh %473 : vector<16x128xf32>
    %cst_171 = arith.constant 1.000000e+00 : f32
    %475 = vector.broadcast %cst_171 : f32 to vector<16x128xf32>
    %476 = arith.addf %475, %474 : vector<16x128xf32>
    %477 = arith.mulf %466, %476 : vector<16x128xf32>
    %478 = arith.truncf %477 : vector<16x128xf32> to vector<16x128xbf16>
    %c0_172 = arith.constant 0 : index
    %c0_173 = arith.constant 0 : index
    %479 = vector.load %arg5[%c0_172, %c0_173] : memref<128x768xbf16, #tpu.memory_space<vmem>>, vector<128x32xbf16>
    %cst_174 = arith.constant dense<0.000000e+00> : vector<16x32xf32>
    %480 = tpu.matmul %478, %479, %cst_174 {dimension_numbers = #tpu.dot_dimension_numbers<[1], [0], [0], [1], [0, 0, 1, 1], [], []>} : vector<16x128xbf16>, vector<128x32xbf16>, vector<16x32xf32> -> vector<16x32xf32>
    %c0_175 = arith.constant 0 : index
    %c3328_176 = arith.constant 3328 : index
    %481 = vector.load %arg6[%c0_175, %c3328_176] : memref<1x4096xf32, #tpu.memory_space<vmem>>, vector<1x32xf32>
    %482 = vector.broadcast %481 : vector<1x32xf32> to vector<16x32xf32>
    %483 = arith.addf %480, %482 : vector<16x32xf32>
    %484 = vector.broadcast %296 : vector<1x32xf32> to vector<16x32xf32>
    %485 = arith.mulf %484, %483 : vector<16x32xf32>
    %486 = arith.addf %434, %485 : vector<16x32xf32>
    %487 = vector.broadcast %299 : vector<1x32xf32> to vector<8x32xf32>
    %488 = arith.mulf %487, %431 : vector<8x32xf32>
    %489 = arith.addf %277, %488 : vector<8x32xf32>
    %cst_177 = arith.constant dense<0.000000e+00> : vector<8xf32>
    %490 = vector.multi_reduction <add>, %489, %cst_177 [1] : vector<8x32xf32> to vector<8xf32>
    %491 = vector.shape_cast %490 : vector<8xf32> to vector<8x1xf32>
    %cst_178 = arith.constant 3.200000e+01 : f32
    %492 = vector.broadcast %cst_178 : f32 to vector<8x1xf32>
    %493 = arith.divf %491, %492 : vector<8x1xf32>
    %494 = vector.broadcast %493 : vector<8x1xf32> to vector<8x32xf32>
    %495 = arith.subf %489, %494 : vector<8x32xf32>
    %496 = arith.mulf %495, %495 : vector<8x32xf32>
    %cst_179 = arith.constant dense<0.000000e+00> : vector<8xf32>
    %497 = vector.multi_reduction <add>, %496, %cst_179 [1] : vector<8x32xf32> to vector<8xf32>
    %498 = vector.shape_cast %497 : vector<8xf32> to vector<8x1xf32>
    %cst_180 = arith.constant 3.200000e+01 : f32
    %499 = vector.broadcast %cst_180 : f32 to vector<8x1xf32>
    %500 = arith.divf %498, %499 : vector<8x1xf32>
    %501 = vector.broadcast %493 : vector<8x1xf32> to vector<8x32xf32>
    %502 = arith.subf %489, %501 : vector<8x32xf32>
    %cst_181 = arith.constant 9.99999997E-7 : f32
    %503 = vector.broadcast %cst_181 : f32 to vector<8x1xf32>
    %504 = arith.addf %500, %503 : vector<8x1xf32>
    %505 = math.rsqrt %504 : vector<8x1xf32>
    %506 = vector.broadcast %505 : vector<8x1xf32> to vector<8x32xf32>
    %507 = arith.mulf %502, %506 : vector<8x32xf32>
    %cst_182 = arith.constant 1.000000e+00 : f32
    %508 = vector.broadcast %cst_182 : f32 to vector<1x32xf32>
    %509 = arith.addf %508, %301 : vector<1x32xf32>
    %510 = vector.broadcast %509 : vector<1x32xf32> to vector<8x32xf32>
    %511 = arith.mulf %507, %510 : vector<8x32xf32>
    %512 = vector.broadcast %300 : vector<1x32xf32> to vector<8x32xf32>
    %513 = arith.addf %511, %512 : vector<8x32xf32>
    %514 = arith.truncf %513 : vector<8x32xf32> to vector<8x32xbf16>
    %c0_183 = arith.constant 0 : index
    %c3200_184 = arith.constant 3200 : index
    %515 = vector.load %arg4[%c0_183, %c3200_184] : memref<32x3328xbf16, #tpu.memory_space<vmem>>, vector<32x128xbf16>
    %cst_185 = arith.constant dense<0.000000e+00> : vector<8x128xf32>
    %516 = tpu.matmul %514, %515, %cst_185 {dimension_numbers = #tpu.dot_dimension_numbers<[1], [0], [0], [1], [0, 0, 1, 1], [], []>} : vector<8x32xbf16>, vector<32x128xbf16>, vector<8x128xf32> -> vector<8x128xf32>
    %c0_186 = arith.constant 0 : index
    %c3200_187 = arith.constant 3200 : index
    %517 = vector.load %arg6[%c0_186, %c3200_187] : memref<1x4096xf32, #tpu.memory_space<vmem>>, vector<1x128xf32>
    %518 = vector.broadcast %517 : vector<1x128xf32> to vector<8x128xf32>
    %519 = arith.addf %516, %518 : vector<8x128xf32>
    %cst_188 = arith.constant 5.000000e-01 : f32
    %520 = vector.broadcast %cst_188 : f32 to vector<8x128xf32>
    %521 = arith.mulf %520, %519 : vector<8x128xf32>
    %cst_189 = arith.constant 4.471500e-02 : f32
    %522 = vector.broadcast %cst_189 : f32 to vector<8x128xf32>
    %523 = arith.mulf %522, %519 : vector<8x128xf32>
    %524 = arith.mulf %523, %519 : vector<8x128xf32>
    %525 = arith.mulf %524, %519 : vector<8x128xf32>
    %526 = arith.addf %519, %525 : vector<8x128xf32>
    %cst_190 = arith.constant 0.797884583 : f32
    %527 = vector.broadcast %cst_190 : f32 to vector<8x128xf32>
    %528 = arith.mulf %527, %526 : vector<8x128xf32>
    %529 = math.tanh %528 : vector<8x128xf32>
    %cst_191 = arith.constant 1.000000e+00 : f32
    %530 = vector.broadcast %cst_191 : f32 to vector<8x128xf32>
    %531 = arith.addf %530, %529 : vector<8x128xf32>
    %532 = arith.mulf %521, %531 : vector<8x128xf32>
    %533 = arith.truncf %532 : vector<8x128xf32> to vector<8x128xbf16>
    %c0_192 = arith.constant 0 : index
    %c128_193 = arith.constant 128 : index
    %534 = vector.load %arg5[%c0_192, %c128_193] : memref<128x768xbf16, #tpu.memory_space<vmem>>, vector<128x32xbf16>
    %cst_194 = arith.constant dense<0.000000e+00> : vector<8x32xf32>
    %535 = tpu.matmul %533, %534, %cst_194 {dimension_numbers = #tpu.dot_dimension_numbers<[1], [0], [0], [1], [0, 0, 1, 1], [], []>} : vector<8x128xbf16>, vector<128x32xbf16>, vector<8x32xf32> -> vector<8x32xf32>
    %c0_195 = arith.constant 0 : index
    %c3456_196 = arith.constant 3456 : index
    %536 = vector.load %arg6[%c0_195, %c3456_196] : memref<1x4096xf32, #tpu.memory_space<vmem>>, vector<1x32xf32>
    %537 = vector.broadcast %536 : vector<1x32xf32> to vector<8x32xf32>
    %538 = arith.addf %535, %537 : vector<8x32xf32>
    %539 = vector.broadcast %302 : vector<1x32xf32> to vector<8x32xf32>
    %540 = arith.mulf %539, %538 : vector<8x32xf32>
    %541 = arith.addf %489, %540 : vector<8x32xf32>
    %c1_197 = arith.constant 1 : index
    %c0_198 = arith.constant 0 : index
    %c0_199 = arith.constant 0 : index
    %542 = vector.load %arg7[%c1_197, %c0_198, %c0_199] : memref<2x24x32xf32, #tpu.memory_space<vmem>>, vector<1x16x32xf32>
    %543 = vector.shape_cast %542 : vector<1x16x32xf32> to vector<16x32xf32>
    %544 = vector.shape_cast %486 : vector<16x32xf32> to vector<1x16x32xf32>
    tpu.vector_store %arg7[%c1_197, %c0_198, %c0_199], %544 {strides = array<i32>} : memref<2x24x32xf32, #tpu.memory_space<vmem>>, vector<1x16x32xf32>,
    %c1_200 = arith.constant 1 : index
    %c16_201 = arith.constant 16 : index
    %c0_202 = arith.constant 0 : index
    %545 = vector.load %arg7[%c1_200, %c16_201, %c0_202] : memref<2x24x32xf32, #tpu.memory_space<vmem>>, vector<1x8x32xf32>
    %546 = vector.shape_cast %545 : vector<1x8x32xf32> to vector<8x32xf32>
    %547 = vector.shape_cast %541 : vector<8x32xf32> to vector<1x8x32xf32>
    tpu.vector_store %arg7[%c1_200, %c16_201, %c0_202], %547 {strides = array<i32>} : memref<2x24x32xf32, #tpu.memory_space<vmem>>, vector<1x8x32xf32>,
    return
  }
  func.func @transform_0(%arg0: i32) -> (i32, i32, i32) {
    %c0_i32 = arith.constant 0 : i32
    %c0_i32_0 = arith.constant 0 : i32
    %c0_i32_1 = arith.constant 0 : i32
    return %arg0, %c0_i32, %c0_i32_0 : i32, i32, i32
  }
  func.func @transform_1(%arg0: i32) -> (i32, i32, i32) {
    %c0_i32 = arith.constant 0 : i32
    %c0_i32_0 = arith.constant 0 : i32
    %c0_i32_1 = arith.constant 0 : i32
    return %arg0, %c0_i32, %c0_i32_0 : i32, i32, i32
  }
  func.func @transform_2(%arg0: i32) -> (i32, i32, i32) {
    %c0_i32 = arith.constant 0 : i32
    %c0_i32_0 = arith.constant 0 : i32
    %c0_i32_1 = arith.constant 0 : i32
    return %arg0, %c0_i32, %c0_i32_0 : i32, i32, i32
  }
  func.func @transform_3(%arg0: i32) -> (i32, i32) {
    %c0_i32 = arith.constant 0 : i32
    %c0_i32_0 = arith.constant 0 : i32
    %c0_i32_1 = arith.constant 0 : i32
    return %c0_i32, %c0_i32_0 : i32, i32
  }
  func.func @transform_4(%arg0: i32) -> (i32, i32) {
    %c0_i32 = arith.constant 0 : i32
    %c0_i32_0 = arith.constant 0 : i32
    %c0_i32_1 = arith.constant 0 : i32
    return %c0_i32, %c0_i32_0 : i32, i32
  }
  func.func @transform_5(%arg0: i32) -> (i32, i32) {
    %c0_i32 = arith.constant 0 : i32
    %c0_i32_0 = arith.constant 0 : i32
    %c0_i32_1 = arith.constant 0 : i32
    return %c0_i32, %c0_i32_0 : i32, i32
  }
  func.func @transform_6(%arg0: i32) -> (i32, i32, i32) {
    %c0_i32 = arith.constant 0 : i32
    %c0_i32_0 = arith.constant 0 : i32
    %c0_i32_1 = arith.constant 0 : i32
    return %arg0, %c0_i32, %c0_i32_0 : i32, i32, i32
  }
}

</mosaic_0001>

<llo_original>
// kernel: sd3_block.1
$region0: #{sd3_block.1}
  #allocation0 [shape = 'u32[]', space=smem, size = 0x4, offset = 0x4, fixed_abs, tag = 'smem constant byte address 0x4 - core index']
  #allocation1 [shape = 'u32[144,128]{1,0:T(1,128)}', space=vmem, size = 0x12000, scoped, tag = 'internal scratch']
  %s0 = inlined_call_operand.hbm [shape: f32[2,16,32], index: 0, kind: input, shape index: {}]
  %s1 = inlined_call_operand.hbm [shape: f32[2,8,32], index: 1, kind: input, shape index: {}]
  %s2 = inlined_call_operand.vmem [shape: f32[2,1,32], index: 2, kind: input, shape index: {}]
  %s3 = inlined_call_operand.hbm [shape: bf16[32,3328], index: 3, kind: input, shape index: {}]
  %s4 = inlined_call_operand.hbm [shape: bf16[128,768], index: 4, kind: input, shape index: {}]
  %s5 = inlined_call_operand.hbm [shape: f32[1,4096], index: 5, kind: input, shape index: {}]
  %s6 = inlined_call_operand.vmem [shape: f32[2,24,32], index: 6, kind: output, shape index: {}]
  %s7 = sld [smem:[#allocation0]]
  $region54: #{sd3_block.1} parent=0
    _
  %s9 = ssub.s32 1, %s7
  %s10 = scalar_select 0, %s9, %s7
  $region1: #{sd3_block.1} parent=0
    #allocation2 [shape = 'u8[16384]{0}', space=vmem, size = 0x4000, scoped, tag = 'input window, operand 0, single buffered']
    #allocation3 [shape = 's32[1]{0}', space=sflag, size = 0x4, scoped, tag = 'scoped memory for sd3_block.1']
    #allocation4 [shape = 'u8[8192]{0}', space=vmem, size = 0x2000, scoped, tag = 'input window, operand 1, single buffered']
    #allocation5 [shape = 's32[1]{0}', space=sflag, size = 0x4, scoped, tag = 'scoped memory for sd3_block.1']
    #allocation6 [shape = 'u8[212992]{0}', space=vmem, size = 0x34000, scoped, tag = 'input window, operand 3, single buffered']
    #allocation7 [shape = 'u8[196608]{0}', space=vmem, size = 0x30000, scoped, tag = 'input window, operand 4, single buffered']
    #allocation8 [shape = 's32[1]{0}', space=sflag, size = 0x4, scoped, tag = 'scoped memory for sd3_block.1']
    #allocation9 [shape = 'u8[16384]{0}', space=vmem, size = 0x4000, scoped, tag = 'input window, operand 5, single buffered']
    %11 = vsyncpa [#allocation3], 0
    %12 = vsyncpa [#allocation5], 0
    %13 = vsyncpa [#allocation8], 0
    // Predicated region
    $region2: #{sd3_block.1} parent=1 // pred_check
      _
    $region3: #{sd3_block.1} parent=1 // pred_check_branch
      %15 = sbr.rel (0) target = $region5
    $region4: #{sd3_block.1} parent=1 // pred_region
      %s17 = ssub.s32 512, 512
      %18 = vsyncadd [#allocation3], %s17
      %s19 = sshll.u32 [#allocation2], 4
      %s20 = int_to_ptr.vmem [resolvable:$true] %s19
      %25 = dma.hbm_to_vmem [thread:$0]  %s0, 512, %s20, [#allocation3], 128, 128, 8
    $region5: #{sd3_block.1} parent=1 // pred_fallthru
      _
    // Predicated region
    $region6: #{sd3_block.1} parent=1 // pred_check
      _
    $region7: #{sd3_block.1} parent=1 // pred_check_branch
      %27 = sbr.rel (0) target = $region9
    $region8: #{sd3_block.1} parent=1 // pred_region
      %s29 = ssub.s32 256, 256
      %30 = vsyncadd [#allocation5], %s29
      %s31 = sshll.u32 [#allocation4], 4
      %s32 = int_to_ptr.vmem [resolvable:$true] %s31
      %37 = dma.hbm_to_vmem [thread:$0]  %s1, 256, %s32, [#allocation5], 128, 128, 8
    $region9: #{sd3_block.1} parent=1 // pred_fallthru
      _
    // Predicated region
    $region10: #{sd3_block.1} parent=1 // pred_check
      _
    $region11: #{sd3_block.1} parent=1 // pred_check_branch
      %39 = sbr.rel (0) target = $region13
    $region12: #{sd3_block.1} parent=1 // pred_region
      _
    $region13: #{sd3_block.1} parent=1 // pred_fallthru
      _
    // Predicated region
    $region14: #{sd3_block.1} parent=1 // pred_check
      _
    $region15: #{sd3_block.1} parent=1 // pred_check_branch
      %41 = sbr.rel (0) target = $region17
    $region16: #{sd3_block.1} parent=1 // pred_region
      %s43 = ssub.s32 6656, 6656
      %44 = vsyncadd [#allocation5], %s43
      %s45 = sshll.u32 [#allocation6], 4
      %s46 = int_to_ptr.vmem [resolvable:$true] %s45
      %51 = dma.hbm_to_vmem [thread:$0]  %s3, 6656, %s46, [#allocation5], 1664, 1664, 104
    $region17: #{sd3_block.1} parent=1 // pred_fallthru
      _
    // Predicated region
    $region18: #{sd3_block.1} parent=1 // pred_check
      _
    $region19: #{sd3_block.1} parent=1 // pred_check_branch
      %53 = sbr.rel (0) target = $region21
    $region20: #{sd3_block.1} parent=1 // pred_region
      %s55 = ssub.s32 6144, 6144
      %56 = vsyncadd [#allocation8], %s55
      %s57 = sshll.u32 [#allocation7], 4
      %s58 = int_to_ptr.vmem [resolvable:$true] %s57
      %63 = dma.hbm_to_vmem [thread:$0]  %s4, 6144, %s58, [#allocation8], 384, 384, 24
    $region21: #{sd3_block.1} parent=1 // pred_fallthru
      _
    // Predicated region
    $region22: #{sd3_block.1} parent=1 // pred_check
      _
    $region23: #{sd3_block.1} parent=1 // pred_check_branch
      %65 = sbr.rel (0) target = $region25
    $region24: #{sd3_block.1} parent=1 // pred_region
      %s67 = ssub.s32 512, 512
      %68 = vsyncadd [#allocation8], %s67
      %s70 = sshll.u32 [#allocation9], 4
      %s71 = int_to_ptr.vmem [resolvable:$true] %s70
      %73 = dma.hbm_to_vmem [thread:$0]  %s5, 512, %s71, [#allocation8]
    $region25: #{sd3_block.1} parent=1 // pred_fallthru
      _
    // Predicated region
    $region26: #{sd3_block.1} parent=1 // pred_check
      _
    $region27: #{sd3_block.1} parent=1 // pred_check_branch
      %75 = sbr.rel (0) target = $region29
    $region28: #{sd3_block.1} parent=1 // pred_region
      %76 = dma.done [#allocation3], 512
    $region29: #{sd3_block.1} parent=1 // pred_fallthru
      _
    // Predicated region
    $region30: #{sd3_block.1} parent=1 // pred_check
      _
    $region31: #{sd3_block.1} parent=1 // pred_check_branch
      %78 = sbr.rel (0) target = $region33
    $region32: #{sd3_block.1} parent=1 // pred_region
      %79 = dma.done [#allocation5], 256
    $region33: #{sd3_block.1} parent=1 // pred_fallthru
      _
    // Predicated region
    $region34: #{sd3_block.1} parent=1 // pred_check
      _
    $region35: #{sd3_block.1} parent=1 // pred_check_branch
      %81 = sbr.rel (0) target = $region37
    $region36: #{sd3_block.1} parent=1 // pred_region
      %82 = dma.done [#allocation5], 6656
    $region37: #{sd3_block.1} parent=1 // pred_fallthru
      _
    // Predicated region
    $region38: #{sd3_block.1} parent=1 // pred_check
      _
    $region39: #{sd3_block.1} parent=1 // pred_check_branch
      %84 = sbr.rel (0) target = $region41
    $region40: #{sd3_block.1} parent=1 // pred_region
      %85 = dma.done [#allocation8], 6144
    $region41: #{sd3_block.1} parent=1 // pred_fallthru
      _
    // Predicated region
    $region42: #{sd3_block.1} parent=1 // pred_check
      _
    $region43: #{sd3_block.1} parent=1 // pred_check_branch
      %87 = sbr.rel (0) target = $region45
    $region44: #{sd3_block.1} parent=1 // pred_region
      %88 = dma.done [#allocation8], 512
    $region45: #{sd3_block.1} parent=1 // pred_fallthru
      _
    %v90 = vld [vmem:[#allocation2] sm:$0xff]
    %v91 = vld [vmem:[#allocation2 + $0x8] sm:$0xff]
    %v92 = vld [vmem:[#allocation4] sm:$0xff]
    %v93 = vld [vmem:[%s2] sm:$0x1]
    %v94 = vxor.u32 %v93, 2147483648
    %v95 = vmul.f32 %v94, 1.442695
    %v96 = vpow.pop %v95
    %v97 = vadd.f32 %v96, 1.0
    %v98 = vrcp.pop %v97
    %v99 = vmul.f32 1.0, %v98
    %v100 = vmul.f32 %v93, %v99
    %v101 = vpack.c.bf16 %v100, %v100
    %v102 = vld [vmem:[#allocation6] sm:$0xff]
    %v103 = vld [vmem:[#allocation6 + $0x8] sm:$0xff]
    %v104 = vld [vmem:[#allocation6 + $0x10] sm:$0xff]
    %v105 = vld [vmem:[#allocation6 + $0x18] sm:$0xff]
    %v106 = vld [vmem:[#allocation6 + $0x20] sm:$0xff]
    %v107 = vld [vmem:[#allocation6 + $0x28] sm:$0xff]
    %v108 = vld [vmem:[#allocation6 + $0x68] sm:$0xff]
    %v109 = vld [vmem:[#allocation6 + $0x70] sm:$0xff]
    %v110 = vld [vmem:[#allocation6 + $0x78] sm:$0xff]
    %v111 = vld [vmem:[#allocation6 + $0x80] sm:$0xff]
    %v112 = vld [vmem:[#allocation6 + $0x88] sm:$0xff]
    %v113 = vld [vmem:[#allocation6 + $0x90] sm:$0xff]
    %v114 = vld [vmem:[#allocation6 + $0xd0] sm:$0xff]
    %v115 = vld [vmem:[#allocation6 + $0xd8] sm:$0xff]
    %v116 = vld [vmem:[#allocation6 + $0xe0] sm:$0xff]
    %v117 = vld [vmem:[#allocation6 + $0xe8] sm:$0xff]
    %v118 = vld [vmem:[#allocation6 + $0xf0] sm:$0xff]
    %v119 = vld [vmem:[#allocation6 + $0xf8] sm:$0xff]
    %v120 = vld [vmem:[#allocation6 + $0x138] sm:$0xff]
    %v121 = vld [vmem:[#allocation6 + $0x140] sm:$0xff]
    %v122 = vld [vmem:[#allocation6 + $0x148] sm:$0xff]
    %v123 = vld [vmem:[#allocation6 + $0x150] sm:$0xff]
    %v124 = vld [vmem:[#allocation6 + $0x158] sm:$0xff]
    %v125 = vld [vmem:[#allocation6 + $0x160] sm:$0xff]
    %v126 = vld [vmem:[#allocation9] sm:$0xff]
    %v127 = vld [vmem:[#allocation9 + $0x8] sm:$0xf]
    %v152 = vunpack.c.l.b16 %v102
    %v153 = vunpack.c.h.b16 %v102
    %v154 = vunpack.c.l.b16 %v103
    %v155 = vunpack.c.h.b16 %v103
    %v156 = vunpack.c.l.b16 %v104
    %v157 = vunpack.c.h.b16 %v104
    %v158 = vunpack.c.l.b16 %v105
    %v159 = vunpack.c.h.b16 %v105
    %v160 = vunpack.c.l.b16 %v106
    %v161 = vunpack.c.h.b16 %v106
    %v162 = vunpack.c.l.b16 %v107
    %v163 = vunpack.c.h.b16 %v107
    %v164 = vunpack.c.l.b16 %v108
    %v165 = vunpack.c.h.b16 %v108
    %v166 = vunpack.c.l.b16 %v109
    %v167 = vunpack.c.h.b16 %v109
    %v168 = vunpack.c.l.b16 %v110
    %v169 = vunpack.c.h.b16 %v110
    %v170 = vunpack.c.l.b16 %v111
    %v171 = vunpack.c.h.b16 %v111
    %v172 = vunpack.c.l.b16 %v112
    %v173 = vunpack.c.h.b16 %v112
    %v174 = vunpack.c.l.b16 %v113
    %v175 = vunpack.c.h.b16 %v113
    %v176 = vunpack.c.l.b16 %v114
    %v177 = vunpack.c.h.b16 %v114
    %v178 = vunpack.c.l.b16 %v115
    %v179 = vunpack.c.h.b16 %v115
    %v180 = vunpack.c.l.b16 %v116
    %v181 = vunpack.c.h.b16 %v116
    %v182 = vunpack.c.l.b16 %v117
    %v183 = vunpack.c.h.b16 %v117
    %v184 = vunpack.c.l.b16 %v118
    %v185 = vunpack.c.h.b16 %v118
    %v186 = vunpack.c.l.b16 %v119
    %v187 = vunpack.c.h.b16 %v119
    %v188 = vunpack.c.l.b16 %v120
    %v189 = vunpack.c.h.b16 %v120
    %v190 = vunpack.c.l.b16 %v121
    %v191 = vunpack.c.h.b16 %v121
    %v192 = vunpack.c.l.b16 %v122
    %v193 = vunpack.c.h.b16 %v122
    %v194 = vunpack.c.l.b16 %v123
    %v195 = vunpack.c.h.b16 %v123
    %v196 = vunpack.c.l.b16 %v124
    %v197 = vunpack.c.h.b16 %v124
    %v198 = vunpack.c.l.b16 %v125
    %v199 = vunpack.c.h.b16 %v125
    %v200 = vpack.c.b16 %v164, %v152
    %v201 = vpack.c.b16 %v165, %v153
    %v202 = vpack.c.b16 %v166, %v154
    %v203 = vpack.c.b16 %v167, %v155
    %v204 = vpack.c.b16 %v168, %v156
    %v205 = vpack.c.b16 %v169, %v157
    %v206 = vpack.c.b16 %v170, %v158
    %v207 = vpack.c.b16 %v171, %v159
    %v208 = vpack.c.b16 %v172, %v160
    %v209 = vpack.c.b16 %v173, %v161
    %v210 = vpack.c.b16 %v174, %v162
    %v211 = vpack.c.b16 %v175, %v163
    %v212 = vpack.c.b16 %v188, %v176
    %v213 = vpack.c.b16 %v189, %v177
    %v214 = vpack.c.b16 %v190, %v178
    %v215 = vpack.c.b16 %v191, %v179
    %v216 = vpack.c.b16 %v192, %v180
    %v217 = vpack.c.b16 %v193, %v181
    %v218 = vpack.c.b16 %v194, %v182
    %v219 = vpack.c.b16 %v195, %v183
    %v220 = vpack.c.b16 %v196, %v184
    %v221 = vpack.c.b16 %v197, %v185
    %v222 = vpack.c.b16 %v198, %v186
    %v223 = vpack.c.b16 %v199, %v187
    %v250 = vlaneseq
    %v251 = vshrl.u32 %v250, 7
    %v252 = vsub.s32 0, %v251
    %v253 = vrot.slane %v126, %v252
    %v254 = vlaneseq
    %v255 = vshrl.u32 %v254, 7
    %v256 = vsub.s32 1, %v255
    %v257 = vrot.slane %v126, %v256
    %v258 = vlaneseq
    %v259 = vshrl.u32 %v258, 7
    %v260 = vsub.s32 2, %v259
    %v261 = vrot.slane %v126, %v260
    %v262 = vlaneseq
    %v263 = vshrl.u32 %v262, 7
    %v264 = vsub.s32 3, %v263
    %v265 = vrot.slane %v126, %v264
    %v266 = vlaneseq
    %v267 = vshrl.u32 %v266, 7
    %v268 = vsub.s32 4, %v267
    %v269 = vrot.slane %v126, %v268
    %v270 = vlaneseq
    %v271 = vshrl.u32 %v270, 7
    %v272 = vsub.s32 5, %v271
    %v273 = vrot.slane %v126, %v272
    %v274 = vlaneseq
    %v275 = vshrl.u32 %v274, 7
    %v276 = vsub.s32 6, %v275
    %v277 = vrot.slane %v126, %v276
    %v278 = vlaneseq
    %v279 = vshrl.u32 %v278, 7
    %v280 = vsub.s32 7, %v279
    %v281 = vrot.slane %v126, %v280
    %v282 = vlaneseq
    %v283 = vshrl.u32 %v282, 7
    %v284 = vsub.s32 0, %v283
    %v285 = vrot.slane %v127, %v284
    %v286 = vlaneseq
    %v287 = vshrl.u32 %v286, 7
    %v288 = vsub.s32 1, %v287
    %v289 = vrot.slane %v127, %v288
    %v290 = vlaneseq
    %v291 = vshrl.u32 %v290, 7
    %v292 = vsub.s32 2, %v291
    %v293 = vrot.slane %v127, %v292
    %v294 = vlaneseq
    %v295 = vshrl.u32 %v294, 7
    %v296 = vsub.s32 3, %v295
    %v297 = vrot.slane %v127, %v296
    %vm310 = vcmask 261120
    %v312 = vsel %vm310, %v101, 0
    %314 = vmatprep.subr.bf16.mxu0 0
    %315 = vmatpush1.bf16.msra.mxu0 0
    %316 = vmatprep.subr.bf16.mxu0 0
    %317 = vmatpush1.bf16.msra.mxu0 0
    %318 = vmatprep.subr.bf16.mxu0 0
    %319 = vmatpush1.bf16.msra.mxu0 0
    %320 = vmatprep.subr.bf16.mxu0 0
    %321 = vmatpush1.bf16.msra.mxu0 0
    %322 = vmatprep.subr.bf16.mxu0 0
    %323 = vmatpush1.bf16.msra.mxu0 0
    %324 = vmatprep.subr.bf16.mxu0 0
    %325 = vmatpush1.bf16.msra.mxu0 0
    %326 = vmatprep.subr.bf16.mxu0 %v213
    %327 = vmatpush1.bf16.msra.mxu0 %v212
    %328 = vmatprep.subr.bf16.mxu0 %v201
    %329 = vmatpush1.bf16.msra.mxu0 %v200
    %330 = vmatprep.subr.bf16.mxu0 0
    %331 = vmatpush2.bf16.msra.mxu0 0
    %332 = vmatprep.subr.bf16.mxu0 0
    %333 = vmatpush2.bf16.msra.mxu0 0
    %334 = vmatprep.subr.bf16.mxu0 0
    %335 = vmatpush2.bf16.msra.mxu0 0
    %336 = vmatprep.subr.bf16.mxu0 0
    %337 = vmatpush2.bf16.msra.mxu0 0
    %338 = vmatprep.subr.bf16.mxu0 0
    %339 = vmatpush2.bf16.msra.mxu0 0
    %340 = vmatprep.subr.bf16.mxu0 0
    %341 = vmatpush2.bf16.msra.mxu0 0
    %342 = vmatprep.subr.bf16.mxu0 0
    %343 = vmatpush2.bf16.msra.mxu0 0
    %344 = vmatprep.subr.bf16.mxu0 0
    %345 = vmatpush2.bf16.msra.mxu0 0
    %346 = vmatprep.mubr.bf16.mxu0 0
    %347 = vmatmul.mubr.bf16.gmra.mxu0 %v312
    %v348 = vpop.f32.mrf.mxu0
    %v349 = vadd.f32 %v253, %v348
    %v350 = vpop.f32.mrf.mxu0
    %v351 = vadd.f32 %v257, %v350
    %v352 = vpop.f32.mrf.mxu0
    %v353 = vpop.f32.mrf.mxu0
    %354 = vdwg.mxu0
    %355 = vmatprep.subr.bf16.mxu0 0
    %356 = vmatpush1.bf16.msra.mxu0 0
    %357 = vmatprep.subr.bf16.mxu0 0
    %358 = vmatpush1.bf16.msra.mxu0 0
    %359 = vmatprep.subr.bf16.mxu0 0
    %360 = vmatpush1.bf16.msra.mxu0 0
    %361 = vmatprep.subr.bf16.mxu0 0
    %362 = vmatpush1.bf16.msra.mxu0 0
    %363 = vmatprep.subr.bf16.mxu0 0
    %364 = vmatpush1.bf16.msra.mxu0 0
    %365 = vmatprep.subr.bf16.mxu0 0
    %366 = vmatpush1.bf16.msra.mxu0 0
    %367 = vmatprep.subr.bf16.mxu0 %v215
    %368 = vmatpush1.bf16.msra.mxu0 %v214
    %369 = vmatprep.subr.bf16.mxu0 %v203
    %370 = vmatpush1.bf16.msra.mxu0 %v202
    %371 = vmatprep.subr.bf16.mxu0 0
    %372 = vmatpush2.bf16.msra.mxu0 0
    %373 = vmatprep.subr.bf16.mxu0 0
    %374 = vmatpush2.bf16.msra.mxu0 0
    %375 = vmatprep.subr.bf16.mxu0 0
    %376 = vmatpush2.bf16.msra.mxu0 0
    %377 = vmatprep.subr.bf16.mxu0 0
    %378 = vmatpush2.bf16.msra.mxu0 0
    %379 = vmatprep.subr.bf16.mxu0 0
    %380 = vmatpush2.bf16.msra.mxu0 0
    %381 = vmatprep.subr.bf16.mxu0 0
    %382 = vmatpush2.bf16.msra.mxu0 0
    %383 = vmatprep.subr.bf16.mxu0 0
    %384 = vmatpush2.bf16.msra.mxu0 0
    %385 = vmatprep.subr.bf16.mxu0 0
    %386 = vmatpush2.bf16.msra.mxu0 0
    %387 = vmatprep.mubr.bf16.mxu0 0
    %388 = vmatmul.mubr.bf16.gmra.mxu0 %v312
    %v389 = vpop.f32.mrf.mxu0
    %v390 = vadd.f32 %v261, %v389
    %v391 = vpop.f32.mrf.mxu0
    %v392 = vadd.f32 %v265, %v391
    %v393 = vpop.f32.mrf.mxu0
    %v394 = vpop.f32.mrf.mxu0
    %395 = vdwg.mxu0
    %396 = vmatprep.subr.bf16.mxu0 0
    %397 = vmatpush1.bf16.msra.mxu0 0
    %398 = vmatprep.subr.bf16.mxu0 0
    %399 = vmatpush1.bf16.msra.mxu0 0
    %400 = vmatprep.subr.bf16.mxu0 0
    %401 = vmatpush1.bf16.msra.mxu0 0
    %402 = vmatprep.subr.bf16.mxu0 0
    %403 = vmatpush1.bf16.msra.mxu0 0
    %404 = vmatprep.subr.bf16.mxu0 0
    %405 = vmatpush1.bf16.msra.mxu0 0
    %406 = vmatprep.subr.bf16.mxu0 0
    %407 = vmatpush1.bf16.msra.mxu0 0
    %408 = vmatprep.subr.bf16.mxu0 %v217
    %409 = vmatpush1.bf16.msra.mxu0 %v216
    %410 = vmatprep.subr.bf16.mxu0 %v205
    %411 = vmatpush1.bf16.msra.mxu0 %v204
    %412 = vmatprep.subr.bf16.mxu0 0
    %413 = vmatpush2.bf16.msra.mxu0 0
    %414 = vmatprep.subr.bf16.mxu0 0
    %415 = vmatpush2.bf16.msra.mxu0 0
    %416 = vmatprep.subr.bf16.mxu0 0
    %417 = vmatpush2.bf16.msra.mxu0 0
    %418 = vmatprep.subr.bf16.mxu0 0
    %419 = vmatpush2.bf16.msra.mxu0 0
    %420 = vmatprep.subr.bf16.mxu0 0
    %421 = vmatpush2.bf16.msra.mxu0 0
    %422 = vmatprep.subr.bf16.mxu0 0
    %423 = vmatpush2.bf16.msra.mxu0 0
    %424 = vmatprep.subr.bf16.mxu0 0
    %425 = vmatpush2.bf16.msra.mxu0 0
    %426 = vmatprep.subr.bf16.mxu0 0
    %427 = vmatpush2.bf16.msra.mxu0 0
    %428 = vmatprep.mubr.bf16.mxu0 0
    %429 = vmatmul.mubr.bf16.gmra.mxu0 %v312
    %v430 = vpop.f32.mrf.mxu0
    %v431 = vadd.f32 %v269, %v430
    %v432 = vpop.f32.mrf.mxu0
    %v433 = vadd.f32 %v273, %v432
    %v434 = vpop.f32.mrf.mxu0
    %v435 = vpop.f32.mrf.mxu0
    %436 = vdwg.mxu0
    %437 = vmatprep.subr.bf16.mxu0 0
    %438 = vmatpush1.bf16.msra.mxu0 0
    %439 = vmatprep.subr.bf16.mxu0 0
    %440 = vmatpush1.bf16.msra.mxu0 0
    %441 = vmatprep.subr.bf16.mxu0 0
    %442 = vmatpush1.bf16.msra.mxu0 0
    %443 = vmatprep.subr.bf16.mxu0 0
    %444 = vmatpush1.bf16.msra.mxu0 0
    %445 = vmatprep.subr.bf16.mxu0 0
    %446 = vmatpush1.bf16.msra.mxu0 0
    %447 = vmatprep.subr.bf16.mxu0 0
    %448 = vmatpush1.bf16.msra.mxu0 0
    %449 = vmatprep.subr.bf16.mxu0 %v219
    %450 = vmatpush1.bf16.msra.mxu0 %v218
    %451 = vmatprep.subr.bf16.mxu0 %v207
    %452 = vmatpush1.bf16.msra.mxu0 %v206
    %453 = vmatprep.subr.bf16.mxu0 0
    %454 = vmatpush2.bf16.msra.mxu0 0
    %455 = vmatprep.subr.bf16.mxu0 0
    %456 = vmatpush2.bf16.msra.mxu0 0
    %457 = vmatprep.subr.bf16.mxu0 0
    %458 = vmatpush2.bf16.msra.mxu0 0
    %459 = vmatprep.subr.bf16.mxu0 0
    %460 = vmatpush2.bf16.msra.mxu0 0
    %461 = vmatprep.subr.bf16.mxu0 0
    %462 = vmatpush2.bf16.msra.mxu0 0
    %463 = vmatprep.subr.bf16.mxu0 0
    %464 = vmatpush2.bf16.msra.mxu0 0
    %465 = vmatprep.subr.bf16.mxu0 0
    %466 = vmatpush2.bf16.msra.mxu0 0
    %467 = vmatprep.subr.bf16.mxu0 0
    %468 = vmatpush2.bf16.msra.mxu0 0
    %469 = vmatprep.mubr.bf16.mxu0 0
    %470 = vmatmul.mubr.bf16.gmra.mxu0 %v312
    %v471 = vpop.f32.mrf.mxu0
    %v472 = vadd.f32 %v277, %v471
    %v473 = vpop.f32.mrf.mxu0
    %v474 = vadd.f32 %v281, %v473
    %v475 = vpop.f32.mrf.mxu0
    %v476 = vpop.f32.mrf.mxu0
    %477 = vdwg.mxu0
    %478 = vmatprep.subr.bf16.mxu0 0
    %479 = vmatpush1.bf16.msra.mxu0 0
    %480 = vmatprep.subr.bf16.mxu0 0
    %481 = vmatpush1.bf16.msra.mxu0 0
    %482 = vmatprep.subr.bf16.mxu0 0
    %483 = vmatpush1.bf16.msra.mxu0 0
    %484 = vmatprep.subr.bf16.mxu0 0
    %485 = vmatpush1.bf16.msra.mxu0 0
    %486 = vmatprep.subr.bf16.mxu0 0
    %487 = vmatpush1.bf16.msra.mxu0 0
    %488 = vmatprep.subr.bf16.mxu0 0
    %489 = vmatpush1.bf16.msra.mxu0 0
    %490 = vmatprep.subr.bf16.mxu0 %v221
    %491 = vmatpush1.bf16.msra.mxu0 %v220
    %492 = vmatprep.subr.bf16.mxu0 %v209
    %493 = vmatpush1.bf16.msra.mxu0 %v208
    %494 = vmatprep.subr.bf16.mxu0 0
    %495 = vmatpush2.bf16.msra.mxu0 0
    %496 = vmatprep.subr.bf16.mxu0 0
    %497 = vmatpush2.bf16.msra.mxu0 0
    %498 = vmatprep.subr.bf16.mxu0 0
    %499 = vmatpush2.bf16.msra.mxu0 0
    %500 = vmatprep.subr.bf16.mxu0 0
    %501 = vmatpush2.bf16.msra.mxu0 0
    %502 = vmatprep.subr.bf16.mxu0 0
    %503 = vmatpush2.bf16.msra.mxu0 0
    %504 = vmatprep.subr.bf16.mxu0 0
    %505 = vmatpush2.bf16.msra.mxu0 0
    %506 = vmatprep.subr.bf16.mxu0 0
    %507 = vmatpush2.bf16.msra.mxu0 0
    %508 = vmatprep.subr.bf16.mxu0 0
    %509 = vmatpush2.bf16.msra.mxu0 0
    %510 = vmatprep.mubr.bf16.mxu0 0
    %511 = vmatmul.mubr.bf16.gmra.mxu0 %v312
    %v512 = vpop.f32.mrf.mxu0
    %v513 = vadd.f32 %v285, %v512
    %v514 = vpop.f32.mrf.mxu0
    %v515 = vadd.f32 %v289, %v514
    %v516 = vpop.f32.mrf.mxu0
    %v517 = vpop.f32.mrf.mxu0
    %518 = vdwg.mxu0
    %519 = vmatprep.subr.bf16.mxu0 0
    %520 = vmatpush1.bf16.msra.mxu0 0
    %521 = vmatprep.subr.bf16.mxu0 0
    %522 = vmatpush1.bf16.msra.mxu0 0
    %523 = vmatprep.subr.bf16.mxu0 0
    %524 = vmatpush1.bf16.msra.mxu0 0
    %525 = vmatprep.subr.bf16.mxu0 0
    %526 = vmatpush1.bf16.msra.mxu0 0
    %527 = vmatprep.subr.bf16.mxu0 0
    %528 = vmatpush1.bf16.msra.mxu0 0
    %529 = vmatprep.subr.bf16.mxu0 0
    %530 = vmatpush1.bf16.msra.mxu0 0
    %531 = vmatprep.subr.bf16.mxu0 %v223
    %532 = vmatpush1.bf16.msra.mxu0 %v222
    %533 = vmatprep.subr.bf16.mxu0 %v211
    %534 = vmatpush1.bf16.msra.mxu0 %v210
    %535 = vmatprep.subr.bf16.mxu0 0
    %536 = vmatpush2.bf16.msra.mxu0 0
    %537 = vmatprep.subr.bf16.mxu0 0
    %538 = vmatpush2.bf16.msra.mxu0 0
    %539 = vmatprep.subr.bf16.mxu0 0
    %540 = vmatpush2.bf16.msra.mxu0 0
    %541 = vmatprep.subr.bf16.mxu0 0
    %542 = vmatpush2.bf16.msra.mxu0 0
    %543 = vmatprep.subr.bf16.mxu0 0
    %544 = vmatpush2.bf16.msra.mxu0 0
    %545 = vmatprep.subr.bf16.mxu0 0
    %546 = vmatpush2.bf16.msra.mxu0 0
    %547 = vmatprep.subr.bf16.mxu0 0
    %548 = vmatpush2.bf16.msra.mxu0 0
    %549 = vmatprep.subr.bf16.mxu0 0
    %550 = vmatpush2.bf16.msra.mxu0 0
    %551 = vmatprep.mubr.bf16.mxu0 0
    %552 = vmatmul.mubr.bf16.gmra.mxu0 %v312
    %v553 = vpop.f32.mrf.mxu0
    %v554 = vadd.f32 %v293, %v553
    %v555 = vpop.f32.mrf.mxu0
    %v556 = vadd.f32 %v297, %v555
    %v557 = vpop.f32.mrf.mxu0
    %v558 = vpop.f32.mrf.mxu0
    %559 = vdwg.mxu0
    %v560 = vsel %vm310, %v90, 0.0
    %561 = vadd.xlane.f32.xlu0 %v560
    %v562 = vpop.xlane.xlu0 %561
    %v563 = vsel %vm310, %v91, 0.0
    %564 = vadd.xlane.f32.xlu0 %v563
    %v565 = vpop.xlane.xlu0 %564
    %v566 = vrcp.pop 32.0
    %v567 = vmul.f32 %v562, %v566
    %v568 = vmul.f32 %v565, %v566
    %v569 = vsub.f32 %v90, %v567
    %v570 = vsub.f32 %v91, %v568
    %v571 = vmul.f32 %v569, %v569
    %v572 = vmul.f32 %v570, %v570
    %v573 = vsel %vm310, %v571, 0.0
    %574 = vadd.xlane.f32.xlu0 %v573
    %v575 = vpop.xlane.xlu0 %574
    %v576 = vsel %vm310, %v572, 0.0
    %577 = vadd.xlane.f32.xlu0 %v576
    %v578 = vpop.xlane.xlu0 %577
    %v579 = vmul.f32 %v575, %v566
    %v580 = vmul.f32 %v578, %v566
    %v581 = vadd.f32 %v579, 1e-06
    %v582 = vadd.f32 %v580, 1e-06
    %v583 = vrsqrt.pop %v581
    %v584 = vrsqrt.pop %v582
    %v585 = vmul.f32 %v569, %v583
    %v586 = vmul.f32 %v570, %v584
    %v587 = vadd.f32 %v351, 1.0
    %v588 = vlaneseq
    %v589 = vshrl.u32 %v588, 7
    %v590 = vsub.s32 0, %v589
    %v591 = vrot.slane %v587, %v590
    %v592 = vmul.f32 %v585, %v591
    %v593 = vmul.f32 %v586, %v591
    %v594 = vlaneseq
    %v595 = vshrl.u32 %v594, 7
    %v596 = vsub.s32 0, %v595
    %v597 = vrot.slane %v349, %v596
    %v598 = vadd.f32 %v592, %v597
    %v599 = vadd.f32 %v593, %v597
    %v600 = vsel %vm310, %v92, 0.0
    %601 = vadd.xlane.f32.xlu0 %v600
    %v602 = vpop.xlane.xlu0 %601
    %v603 = vmul.f32 %v602, %v566
    %v604 = vsub.f32 %v92, %v603
    %v605 = vmul.f32 %v604, %v604
    %v606 = vsel %vm310, %v605, 0.0
    %607 = vadd.xlane.f32.xlu0 %v606
    %v608 = vpop.xlane.xlu0 %607
    %v609 = vmul.f32 %v608, %v566
    %v610 = vadd.f32 %v609, 1e-06
    %v611 = vrsqrt.pop %v610
    %v612 = vmul.f32 %v604, %v611
    %v613 = vadd.f32 %v474, 1.0
    %v614 = vlaneseq
    %v615 = vshrl.u32 %v614, 7
    %v616 = vsub.s32 0, %v615
    %v617 = vrot.slane %v613, %v616
    %v618 = vmul.f32 %v612, %v617
    %v619 = vlaneseq
    %v620 = vshrl.u32 %v619, 7
    %v621 = vsub.s32 0, %v620
    %v622 = vrot.slane %v472, %v621
    %v623 = vadd.f32 %v618, %v622
    %v624 = vpack.c.bf16 %v599, %v598
    %v625 = vld [vmem:[#allocation6 + $0x30] sm:$0xff]
    %v626 = vld [vmem:[#allocation6 + $0x38] sm:$0xff]
    %v627 = vld [vmem:[#allocation6 + $0x40] sm:$0xff]
    %v628 = vld [vmem:[#allocation6 + $0x98] sm:$0xff]
    %v629 = vld [vmem:[#allocation6 + $0xa0] sm:$0xff]
    %v630 = vld [vmem:[#allocation6 + $0xa8] sm:$0xff]
    %v631 = vld [vmem:[#allocation6 + $0x100] sm:$0xff]
    %v632 = vld [vmem:[#allocation6 + $0x108] sm:$0xff]
    %v633 = vld [vmem:[#allocation6 + $0x110] sm:$0xff]
    %v634 = vld [vmem:[#allocation6 + $0x168] sm:$0xff]
    %v635 = vld [vmem:[#allocation6 + $0x170] sm:$0xff]
    %v636 = vld [vmem:[#allocation6 + $0x178] sm:$0xff]
    %v637 = vld [vmem:[#allocation9 + $0xc] sm:$0x3f]
    %v639 = vlaneseq
    %v640 = vshrl.u32 %v639, 7
    %v641 = vsub.s32 0, %v640
    %v642 = vrot.slane %v637, %v641
    %v643 = vlaneseq
    %v644 = vshrl.u32 %v643, 7
    %v645 = vsub.s32 1, %v644
    %v646 = vrot.slane %v637, %v645
    %v647 = vlaneseq
    %v648 = vshrl.u32 %v647, 7
    %v649 = vsub.s32 2, %v648
    %v650 = vrot.slane %v637, %v649
    %v651 = vlaneseq
    %v652 = vshrl.u32 %v651, 7
    %v653 = vsub.s32 3, %v652
    %v654 = vrot.slane %v637, %v653
    %v655 = vlaneseq
    %v656 = vshrl.u32 %v655, 7
    %v657 = vsub.s32 4, %v656
    %v658 = vrot.slane %v637, %v657
    %v659 = vlaneseq
    %v660 = vshrl.u32 %v659, 7
    %v661 = vsub.s32 5, %v660
    %v662 = vrot.slane %v637, %v661
    %v681 = vunpack.c.l.b16 %v625
    %v682 = vunpack.c.h.b16 %v625
    %v683 = vunpack.c.l.b16 %v626
    %v684 = vunpack.c.h.b16 %v626
    %v685 = vunpack.c.l.b16 %v627
    %v686 = vunpack.c.h.b16 %v627
    %v687 = vunpack.c.l.b16 %v628
    %v688 = vunpack.c.h.b16 %v628
    %v689 = vunpack.c.l.b16 %v629
    %v690 = vunpack.c.h.b16 %v629
    %v691 = vunpack.c.l.b16 %v630
    %v692 = vunpack.c.h.b16 %v630
    %v693 = vunpack.c.l.b16 %v631
    %v694 = vunpack.c.h.b16 %v631
    %v695 = vunpack.c.l.b16 %v632
    %v696 = vunpack.c.h.b16 %v632
    %v697 = vunpack.c.l.b16 %v633
    %v698 = vunpack.c.h.b16 %v633
    %v699 = vunpack.c.l.b16 %v634
    %v700 = vunpack.c.h.b16 %v634
    %v701 = vunpack.c.l.b16 %v635
    %v702 = vunpack.c.h.b16 %v635
    %v703 = vunpack.c.l.b16 %v636
    %v704 = vunpack.c.h.b16 %v636
    %v705 = vpack.c.b16 %v687, %v681
    %v706 = vpack.c.b16 %v688, %v682
    %v707 = vpack.c.b16 %v689, %v683
    %v708 = vpack.c.b16 %v690, %v684
    %v709 = vpack.c.b16 %v691, %v685
    %v710 = vpack.c.b16 %v692, %v686
    %v711 = vpack.c.b16 %v699, %v693
    %v712 = vpack.c.b16 %v700, %v694
    %v713 = vpack.c.b16 %v701, %v695
    %v714 = vpack.c.b16 %v702, %v696
    %v715 = vpack.c.b16 %v703, %v697
    %v716 = vpack.c.b16 %v704, %v698
    %v730 = vsel %vm310, %v624, 0
    %732 = vmatprep.subr.bf16.mxu0 0
    %733 = vmatpush1.bf16.msra.mxu0 0
    %734 = vmatprep.subr.bf16.mxu0 0
    %735 = vmatpush1.bf16.msra.mxu0 0
    %736 = vmatprep.subr.bf16.mxu0 0
    %737 = vmatpush1.bf16.msra.mxu0 0
    %738 = vmatprep.subr.bf16.mxu0 0
    %739 = vmatpush1.bf16.msra.mxu0 0
    %740 = vmatprep.subr.bf16.mxu0 0
    %741 = vmatpush1.bf16.msra.mxu0 0
    %742 = vmatprep.subr.bf16.mxu0 0
    %743 = vmatpush1.bf16.msra.mxu0 0
    %744 = vmatprep.subr.bf16.mxu0 %v712
    %745 = vmatpush1.bf16.msra.mxu0 %v711
    %746 = vmatprep.subr.bf16.mxu0 %v706
    %747 = vmatpush1.bf16.msra.mxu0 %v705
    %748 = vmatprep.subr.bf16.mxu0 0
    %749 = vmatpush2.bf16.msra.mxu0 0
    %750 = vmatprep.subr.bf16.mxu0 0
    %751 = vmatpush2.bf16.msra.mxu0 0
    %752 = vmatprep.subr.bf16.mxu0 0
    %753 = vmatpush2.bf16.msra.mxu0 0
    %754 = vmatprep.subr.bf16.mxu0 0
    %755 = vmatpush2.bf16.msra.mxu0 0
    %756 = vmatprep.subr.bf16.mxu0 0
    %757 = vmatpush2.bf16.msra.mxu0 0
    %758 = vmatprep.subr.bf16.mxu0 0
    %759 = vmatpush2.bf16.msra.mxu0 0
    %760 = vmatprep.subr.bf16.mxu0 0
    %761 = vmatpush2.bf16.msra.mxu0 0
    %762 = vmatprep.subr.bf16.mxu0 0
    %763 = vmatpush2.bf16.msra.mxu0 0
    %764 = vmatprep.mubr.bf16.mxu0 0
    %765 = vmatmul.mubr.bf16.gmra.mxu0 %v730
    %v766 = vpop.f32.mrf.mxu0
    %v767 = vadd.f32 %v642, %v766
    %v768 = vpop.f32.mrf.mxu0
    %v769 = vadd.f32 %v646, %v768
    %v770 = vpop.f32.mrf.mxu0
    %v771 = vadd.f32 %v642, %v770
    %v772 = vpop.f32.mrf.mxu0
    %v773 = vadd.f32 %v646, %v772
    %774 = vdwg.mxu0
    %775 = vmatprep.subr.bf16.mxu0 0
    %776 = vmatpush1.bf16.msra.mxu0 0
    %777 = vmatprep.subr.bf16.mxu0 0
    %778 = vmatpush1.bf16.msra.mxu0 0
    %779 = vmatprep.subr.bf16.mxu0 0
    %780 = vmatpush1.bf16.msra.mxu0 0
    %781 = vmatprep.subr.bf16.mxu0 0
    %782 = vmatpush1.bf16.msra.mxu0 0
    %783 = vmatprep.subr.bf16.mxu0 0
    %784 = vmatpush1.bf16.msra.mxu0 0
    %785 = vmatprep.subr.bf16.mxu0 0
    %786 = vmatpush1.bf16.msra.mxu0 0
    %787 = vmatprep.subr.bf16.mxu0 %v714
    %788 = vmatpush1.bf16.msra.mxu0 %v713
    %789 = vmatprep.subr.bf16.mxu0 %v708
    %790 = vmatpush1.bf16.msra.mxu0 %v707
    %791 = vmatprep.subr.bf16.mxu0 0
    %792 = vmatpush2.bf16.msra.mxu0 0
    %793 = vmatprep.subr.bf16.mxu0 0
    %794 = vmatpush2.bf16.msra.mxu0 0
    %795 = vmatprep.subr.bf16.mxu0 0
    %796 = vmatpush2.bf16.msra.mxu0 0
    %797 = vmatprep.subr.bf16.mxu0 0
    %798 = vmatpush2.bf16.msra.mxu0 0
    %799 = vmatprep.subr.bf16.mxu0 0
    %800 = vmatpush2.bf16.msra.mxu0 0
    %801 = vmatprep.subr.bf16.mxu0 0
    %802 = vmatpush2.bf16.msra.mxu0 0
    %803 = vmatprep.subr.bf16.mxu0 0
    %804 = vmatpush2.bf16.msra.mxu0 0
    %805 = vmatprep.subr.bf16.mxu0 0
    %806 = vmatpush2.bf16.msra.mxu0 0
    %807 = vmatprep.mubr.bf16.mxu0 0
    %808 = vmatmul.mubr.bf16.gmra.mxu0 %v730
    %v809 = vpop.f32.mrf.mxu0
    %v810 = vadd.f32 %v650, %v809
    %v811 = vpop.f32.mrf.mxu0
    %v812 = vadd.f32 %v654, %v811
    %v813 = vpop.f32.mrf.mxu0
    %v814 = vadd.f32 %v650, %v813
    %v815 = vpop.f32.mrf.mxu0
    %v816 = vadd.f32 %v654, %v815
    %817 = vdwg.mxu0
    %818 = vmatprep.subr.bf16.mxu0 0
    %819 = vmatpush1.bf16.msra.mxu0 0
    %820 = vmatprep.subr.bf16.mxu0 0
    %821 = vmatpush1.bf16.msra.mxu0 0
    %822 = vmatprep.subr.bf16.mxu0 0
    %823 = vmatpush1.bf16.msra.mxu0 0
    %824 = vmatprep.subr.bf16.mxu0 0
    %825 = vmatpush1.bf16.msra.mxu0 0
    %826 = vmatprep.subr.bf16.mxu0 0
    %827 = vmatpush1.bf16.msra.mxu0 0
    %828 = vmatprep.subr.bf16.mxu0 0
    %829 = vmatpush1.bf16.msra.mxu0 0
    %830 = vmatprep.subr.bf16.mxu0 %v716
    %831 = vmatpush1.bf16.msra.mxu0 %v715
    %832 = vmatprep.subr.bf16.mxu0 %v710
    %833 = vmatpush1.bf16.msra.mxu0 %v709
    %834 = vmatprep.subr.bf16.mxu0 0
    %835 = vmatpush2.bf16.msra.mxu0 0
    %836 = vmatprep.subr.bf16.mxu0 0
    %837 = vmatpush2.bf16.msra.mxu0 0
    %838 = vmatprep.subr.bf16.mxu0 0
    %839 = vmatpush2.bf16.msra.mxu0 0
    %840 = vmatprep.subr.bf16.mxu0 0
    %841 = vmatpush2.bf16.msra.mxu0 0
    %842 = vmatprep.subr.bf16.mxu0 0
    %843 = vmatpush2.bf16.msra.mxu0 0
    %844 = vmatprep.subr.bf16.mxu0 0
    %845 = vmatpush2.bf16.msra.mxu0 0
    %846 = vmatprep.subr.bf16.mxu0 0
    %847 = vmatpush2.bf16.msra.mxu0 0
    %848 = vmatprep.subr.bf16.mxu0 0
    %849 = vmatpush2.bf16.msra.mxu0 0
    %850 = vmatprep.mubr.bf16.mxu0 0
    %851 = vmatmul.mubr.bf16.gmra.mxu0 %v730
    %v852 = vpop.f32.mrf.mxu0
    %v853 = vadd.f32 %v658, %v852
    %v854 = vpop.f32.mrf.mxu0
    %v855 = vadd.f32 %v662, %v854
    %v856 = vpop.f32.mrf.mxu0
    %v857 = vadd.f32 %v658, %v856
    %v858 = vpop.f32.mrf.mxu0
    %v859 = vadd.f32 %v662, %v858
    %860 = vdwg.mxu0
    %v861 = vpack.c.bf16 %v623, %v623
    %v862 = vld [vmem:[#allocation6 + $0x48] sm:$0xff]
    %v863 = vld [vmem:[#allocation6 + $0x50] sm:$0xff]
    %v864 = vld [vmem:[#allocation6 + $0x58] sm:$0xff]
    %v865 = vld [vmem:[#allocation6 + $0xb0] sm:$0xff]
    %v866 = vld [vmem:[#allocation6 + $0xb8] sm:$0xff]
    %v867 = vld [vmem:[#allocation6 + $0xc0] sm:$0xff]
    %v868 = vld [vmem:[#allocation6 + $0x118] sm:$0xff]
    %v869 = vld [vmem:[#allocation6 + $0x120] sm:$0xff]
    %v870 = vld [vmem:[#allocation6 + $0x128] sm:$0xff]
    %v871 = vld [vmem:[#allocation6 + $0x180] sm:$0xff]
    %v872 = vld [vmem:[#allocation6 + $0x188] sm:$0xff]
    %v873 = vld [vmem:[#allocation6 + $0x190] sm:$0xff]
    %v874 = vld [vmem:[#allocation9 + $0x12] sm:$0x3f]
    %v876 = vlaneseq
    %v877 = vshrl.u32 %v876, 7
    %v878 = vsub.s32 0, %v877
    %v879 = vrot.slane %v874, %v878
    %v880 = vlaneseq
    %v881 = vshrl.u32 %v880, 7
    %v882 = vsub.s32 1, %v881
    %v883 = vrot.slane %v874, %v882
    %v884 = vlaneseq
    %v885 = vshrl.u32 %v884, 7
    %v886 = vsub.s32 2, %v885
    %v887 = vrot.slane %v874, %v886
    %v888 = vlaneseq
    %v889 = vshrl.u32 %v888, 7
    %v890 = vsub.s32 3, %v889
    %v891 = vrot.slane %v874, %v890
    %v892 = vlaneseq
    %v893 = vshrl.u32 %v892, 7
    %v894 = vsub.s32 4, %v893
    %v895 = vrot.slane %v874, %v894
    %v896 = vlaneseq
    %v897 = vshrl.u32 %v896, 7
    %v898 = vsub.s32 5, %v897
    %v899 = vrot.slane %v874, %v898
    %v918 = vunpack.c.l.b16 %v862
    %v919 = vunpack.c.h.b16 %v862
    %v920 = vunpack.c.l.b16 %v863
    %v921 = vunpack.c.h.b16 %v863
    %v922 = vunpack.c.l.b16 %v864
    %v923 = vunpack.c.h.b16 %v864
    %v924 = vunpack.c.l.b16 %v865
    %v925 = vunpack.c.h.b16 %v865
    %v926 = vunpack.c.l.b16 %v866
    %v927 = vunpack.c.h.b16 %v866
    %v928 = vunpack.c.l.b16 %v867
    %v929 = vunpack.c.h.b16 %v867
    %v930 = vunpack.c.l.b16 %v868
    %v931 = vunpack.c.h.b16 %v868
    %v932 = vunpack.c.l.b16 %v869
    %v933 = vunpack.c.h.b16 %v869
    %v934 = vunpack.c.l.b16 %v870
    %v935 = vunpack.c.h.b16 %v870
    %v936 = vunpack.c.l.b16 %v871
    %v937 = vunpack.c.h.b16 %v871
    %v938 = vunpack.c.l.b16 %v872
    %v939 = vunpack.c.h.b16 %v872
    %v940 = vunpack.c.l.b16 %v873
    %v941 = vunpack.c.h.b16 %v873
    %v942 = vpack.c.b16 %v924, %v918
    %v943 = vpack.c.b16 %v925, %v919
    %v944 = vpack.c.b16 %v926, %v920
    %v945 = vpack.c.b16 %v927, %v921
    %v946 = vpack.c.b16 %v928, %v922
    %v947 = vpack.c.b16 %v929, %v923
    %v948 = vpack.c.b16 %v936, %v930
    %v949 = vpack.c.b16 %v937, %v931
    %v950 = vpack.c.b16 %v938, %v932
    %v951 = vpack.c.b16 %v939, %v933
    %v952 = vpack.c.b16 %v940, %v934
    %v953 = vpack.c.b16 %v941, %v935
    %v967 = vsel %vm310, %v861, 0
    %969 = vmatprep.subr.bf16.mxu0 0
    %970 = vmatpush1.bf16.msra.mxu0 0
    %971 = vmatprep.subr.bf16.mxu0 0
    %972 = vmatpush1.bf16.msra.mxu0 0
    %973 = vmatprep.subr.bf16.mxu0 0
    %974 = vmatpush1.bf16.msra.mxu0 0
    %975 = vmatprep.subr.bf16.mxu0 0
    %976 = vmatpush1.bf16.msra.mxu0 0
    %977 = vmatprep.subr.bf16.mxu0 0
    %978 = vmatpush1.bf16.msra.mxu0 0
    %979 = vmatprep.subr.bf16.mxu0 0
    %980 = vmatpush1.bf16.msra.mxu0 0
    %981 = vmatprep.subr.bf16.mxu0 %v949
    %982 = vmatpush1.bf16.msra.mxu0 %v948
    %983 = vmatprep.subr.bf16.mxu0 %v943
    %984 = vmatpush1.bf16.msra.mxu0 %v942
    %985 = vmatprep.subr.bf16.mxu0 0
    %986 = vmatpush2.bf16.msra.mxu0 0
    %987 = vmatprep.subr.bf16.mxu0 0
    %988 = vmatpush2.bf16.msra.mxu0 0
    %989 = vmatprep.subr.bf16.mxu0 0
    %990 = vmatpush2.bf16.msra.mxu0 0
    %991 = vmatprep.subr.bf16.mxu0 0
    %992 = vmatpush2.bf16.msra.mxu0 0
    %993 = vmatprep.subr.bf16.mxu0 0
    %994 = vmatpush2.bf16.msra.mxu0 0
    %995 = vmatprep.subr.bf16.mxu0 0
    %996 = vmatpush2.bf16.msra.mxu0 0
    %997 = vmatprep.subr.bf16.mxu0 0
    %998 = vmatpush2.bf16.msra.mxu0 0
    %999 = vmatprep.subr.bf16.mxu0 0
    %1000 = vmatpush2.bf16.msra.mxu0 0
    %1001 = vmatprep.mubr.bf16.mxu0 0
    %1002 = vmatmul.mubr.bf16.gmra.mxu0 %v967
    %v1003 = vpop.f32.mrf.mxu0
    %v1004 = vadd.f32 %v879, %v1003
    %v1005 = vpop.f32.mrf.mxu0
    %v1006 = vadd.f32 %v883, %v1005
    %v1007 = vpop.f32.mrf.mxu0
    %v1008 = vpop.f32.mrf.mxu0
    %1009 = vdwg.mxu0
    %1010 = vmatprep.subr.bf16.mxu0 0
    %1011 = vmatpush1.bf16.msra.mxu0 0
    %1012 = vmatprep.subr.bf16.mxu0 0
    %1013 = vmatpush1.bf16.msra.mxu0 0
    %1014 = vmatprep.subr.bf16.mxu0 0
    %1015 = vmatpush1.bf16.msra.mxu0 0
    %1016 = vmatprep.subr.bf16.mxu0 0
    %1017 = vmatpush1.bf16.msra.mxu0 0
    %1018 = vmatprep.subr.bf16.mxu0 0
    %1019 = vmatpush1.bf16.msra.mxu0 0
    %1020 = vmatprep.subr.bf16.mxu0 0
    %1021 = vmatpush1.bf16.msra.mxu0 0
    %1022 = vmatprep.subr.bf16.mxu0 %v951
    %1023 = vmatpush1.bf16.msra.mxu0 %v950
    %1024 = vmatprep.subr.bf16.mxu0 %v945
    %1025 = vmatpush1.bf16.msra.mxu0 %v944
    %1026 = vmatprep.subr.bf16.mxu0 0
    %1027 = vmatpush2.bf16.msra.mxu0 0
    %1028 = vmatprep.subr.bf16.mxu0 0
    %1029 = vmatpush2.bf16.msra.mxu0 0
    %1030 = vmatprep.subr.bf16.mxu0 0
    %1031 = vmatpush2.bf16.msra.mxu0 0
    %1032 = vmatprep.subr.bf16.mxu0 0
    %1033 = vmatpush2.bf16.msra.mxu0 0
    %1034 = vmatprep.subr.bf16.mxu0 0
    %1035 = vmatpush2.bf16.msra.mxu0 0
    %1036 = vmatprep.subr.bf16.mxu0 0
    %1037 = vmatpush2.bf16.msra.mxu0 0
    %1038 = vmatprep.subr.bf16.mxu0 0
    %1039 = vmatpush2.bf16.msra.mxu0 0
    %1040 = vmatprep.subr.bf16.mxu0 0
    %1041 = vmatpush2.bf16.msra.mxu0 0
    %1042 = vmatprep.mubr.bf16.mxu0 0
    %1043 = vmatmul.mubr.bf16.gmra.mxu0 %v967
    %v1044 = vpop.f32.mrf.mxu0
    %v1045 = vadd.f32 %v887, %v1044
    %v1046 = vpop.f32.mrf.mxu0
    %v1047 = vadd.f32 %v891, %v1046
    %v1048 = vpop.f32.mrf.mxu0
    %v1049 = vpop.f32.mrf.mxu0
    %1050 = vdwg.mxu0
    %1051 = vmatprep.subr.bf16.mxu0 0
    %1052 = vmatpush1.bf16.msra.mxu0 0
    %1053 = vmatprep.subr.bf16.mxu0 0
    %1054 = vmatpush1.bf16.msra.mxu0 0
    %1055 = vmatprep.subr.bf16.mxu0 0
    %1056 = vmatpush1.bf16.msra.mxu0 0
    %1057 = vmatprep.subr.bf16.mxu0 0
    %1058 = vmatpush1.bf16.msra.mxu0 0
    %1059 = vmatprep.subr.bf16.mxu0 0
    %1060 = vmatpush1.bf16.msra.mxu0 0
    %1061 = vmatprep.subr.bf16.mxu0 0
    %1062 = vmatpush1.bf16.msra.mxu0 0
    %1063 = vmatprep.subr.bf16.mxu0 %v953
    %1064 = vmatpush1.bf16.msra.mxu0 %v952
    %1065 = vmatprep.subr.bf16.mxu0 %v947
    %1066 = vmatpush1.bf16.msra.mxu0 %v946
    %1067 = vmatprep.subr.bf16.mxu0 0
    %1068 = vmatpush2.bf16.msra.mxu0 0
    %1069 = vmatprep.subr.bf16.mxu0 0
    %1070 = vmatpush2.bf16.msra.mxu0 0
    %1071 = vmatprep.subr.bf16.mxu0 0
    %1072 = vmatpush2.bf16.msra.mxu0 0
    %1073 = vmatprep.subr.bf16.mxu0 0
    %1074 = vmatpush2.bf16.msra.mxu0 0
    %1075 = vmatprep.subr.bf16.mxu0 0
    %1076 = vmatpush2.bf16.msra.mxu0 0
    %1077 = vmatprep.subr.bf16.mxu0 0
    %1078 = vmatpush2.bf16.msra.mxu0 0
    %1079 = vmatprep.subr.bf16.mxu0 0
    %1080 = vmatpush2.bf16.msra.mxu0 0
    %1081 = vmatprep.subr.bf16.mxu0 0
    %1082 = vmatpush2.bf16.msra.mxu0 0
    %1083 = vmatprep.mubr.bf16.mxu0 0
    %1084 = vmatmul.mubr.bf16.gmra.mxu0 %v967
    %v1085 = vpop.f32.mrf.mxu0
    %v1086 = vadd.f32 %v895, %v1085
    %v1087 = vpop.f32.mrf.mxu0
    %v1088 = vadd.f32 %v899, %v1087
    %v1089 = vpop.f32.mrf.mxu0
    %v1090 = vpop.f32.mrf.mxu0
    %1091 = vdwg.mxu0
    %v1092 = vpack.c.bf16 %v771, %v767
    %v1093 = vpack.c.bf16 %v1004, %v1004
    %v1094 = vpack.c.bf16 %v773, %v769
    %v1095 = vpack.c.bf16 %v1006, %v1006
    %1096 = vmatprep.subr.bf16.mxu0 0
    %1097 = vmatpush1.bf16.xpose.msra.mxu0 0
    %1098 = vmatprep.subr.bf16.mxu0 0
    %1099 = vmatpush1.bf16.xpose.msra.mxu0 0
    %1100 = vmatprep.subr.bf16.mxu0 0
    %1101 = vmatpush1.bf16.xpose.msra.mxu0 0
    %1102 = vmatprep.subr.bf16.mxu0 0
    %1103 = vmatpush1.bf16.xpose.msra.mxu0 0
    %1104 = vmatprep.subr.bf16.mxu0 0
    %1105 = vmatpush1.bf16.xpose.msra.mxu0 0
    %1106 = vmatprep.subr.bf16.mxu0 0
    %1107 = vmatpush1.bf16.xpose.msra.mxu0 0
    %1108 = vmatprep.subr.bf16.mxu0 0
    %1109 = vmatpush1.bf16.xpose.msra.mxu0 %v1095
    %1110 = vmatprep.subr.bf16.mxu0 0
    %1111 = vmatpush1.bf16.xpose.msra.mxu0 %v1094
    %1112 = vmatprep.subr.bf16.mxu0 0
    %1113 = vmatpush2.bf16.xpose.msra.mxu0 0
    %1114 = vmatprep.subr.bf16.mxu0 0
    %1115 = vmatpush2.bf16.xpose.msra.mxu0 0
    %1116 = vmatprep.subr.bf16.mxu0 0
    %1117 = vmatpush2.bf16.xpose.msra.mxu0 0
    %1118 = vmatprep.subr.bf16.mxu0 0
    %1119 = vmatpush2.bf16.xpose.msra.mxu0 0
    %1120 = vmatprep.subr.bf16.mxu0 0
    %1121 = vmatpush2.bf16.xpose.msra.mxu0 0
    %1122 = vmatprep.subr.bf16.mxu0 0
    %1123 = vmatpush2.bf16.xpose.msra.mxu0 0
    %1124 = vmatprep.subr.bf16.mxu0 0
    %1125 = vmatpush2.bf16.xpose.msra.mxu0 0
    %1126 = vmatprep.subr.bf16.mxu0 0
    %1127 = vmatpush2.bf16.xpose.msra.mxu0 0
    %1128 = vmatprep.mubr.bf16.mxu0 0
    %1129 = vmatmul.mubr.bf16.gmra.mxu0 %v1092
    %v1130 = vpop.f32.mrf.mxu0
    %v1131 = vadd.f32 0.0, %v1130
    %v1132 = vpop.f32.mrf.mxu0
    %v1133 = vpop.f32.mrf.mxu0
    %v1134 = vadd.f32 0.0, %v1133
    %v1135 = vpop.f32.mrf.mxu0
    %1136 = vmatprep.mubr.bf16.mxu0 0
    %1137 = vmatmul.mubr.bf16.gmra.mxu0 %v1093
    %v1138 = vpop.f32.mrf.mxu0
    %v1139 = vadd.f32 0.0, %v1138
    %v1140 = vpop.f32.mrf.mxu0
    %v1141 = vpop.f32.mrf.mxu0
    %v1142 = vpop.f32.mrf.mxu0
    %1143 = vdwg.mxu0
    %vm1144 = vcmask 195584
    %v1145 = vsel %vm1144, %v1131, -inf
    %1146 = vmax.xlane.f32.xlu0 %v1145
    %v1147 = vpop.xlane.xlu0 %1146
    %v1148 = vsel %vm1144, %v1134, -inf
    %1149 = vmax.xlane.f32.xlu0 %v1148
    %v1150 = vpop.xlane.xlu0 %1149
    %v1151 = vsel %vm1144, %v1139, -inf
    %1152 = vmax.xlane.f32.xlu0 %v1151
    %v1153 = vpop.xlane.xlu0 %1152
    %v1154 = vsub.f32 %v1131, %v1147
    %v1155 = vsub.f32 %v1134, %v1150
    %v1156 = vsub.f32 %v1139, %v1153
    %v1157 = vmul.f32 %v1154, 1.442695
    %v1158 = vpow.pop %v1157
    %v1159 = vmul.f32 %v1155, 1.442695
    %v1160 = vpow.pop %v1159
    %v1161 = vmul.f32 %v1156, 1.442695
    %v1162 = vpow.pop %v1161
    %v1163 = vsel %vm1144, %v1158, 0.0
    %1164 = vadd.xlane.f32.xlu0 %v1163
    %v1165 = vpop.xlane.xlu0 %1164
    %v1166 = vsel %vm1144, %v1160, 0.0
    %1167 = vadd.xlane.f32.xlu0 %v1166
    %v1168 = vpop.xlane.xlu0 %1167
    %v1169 = vsel %vm1144, %v1162, 0.0
    %1170 = vadd.xlane.f32.xlu0 %v1169
    %v1171 = vpop.xlane.xlu0 %1170
    %v1172 = vrcp.pop %v1165
    %v1173 = vrcp.pop %v1168
    %v1174 = vrcp.pop %v1171
    %v1175 = vmul.f32 %v1158, %v1172
    %v1176 = vmul.f32 %v1160, %v1173
    %v1177 = vmul.f32 %v1162, %v1174
    %v1178 = vpack.c.bf16 %v1176, %v1175
    %v1179 = vpack.c.bf16 %v1177, %v1177
    %v1180 = vpack.c.bf16 %v814, %v810
    %v1181 = vpack.c.bf16 %v1045, %v1045
    %v1183 = vsel %vm1144, %v1178, 0
    %v1186 = vsel %vm1144, %v1179, 0
    %vm1188 = vcmask 1043456
    %v1190 = vsel %vm1188, %v1181, 0
    %1192 = vmatprep.subr.bf16.mxu0 0
    %1193 = vmatpush1.bf16.msra.mxu0 0
    %1194 = vmatprep.subr.bf16.mxu0 0
    %1195 = vmatpush1.bf16.msra.mxu0 0
    %1196 = vmatprep.subr.bf16.mxu0 0
    %1197 = vmatpush1.bf16.msra.mxu0 0
    %1198 = vmatprep.subr.bf16.mxu0 0
    %1199 = vmatpush1.bf16.msra.mxu0 0
    %1200 = vmatprep.subr.bf16.mxu0 0
    %1201 = vmatpush1.bf16.msra.mxu0 0
    %1202 = vmatprep.subr.bf16.mxu0 0
    %1203 = vmatpush1.bf16.msra.mxu0 0
    %1204 = vmatprep.subr.bf16.mxu0 0
    %1205 = vmatpush1.bf16.msra.mxu0 %v1190
    %1206 = vmatprep.subr.bf16.mxu0 0
    %1207 = vmatpush1.bf16.msra.mxu0 %v1180
    %1208 = vmatprep.subr.bf16.mxu0 0
    %1209 = vmatpush2.bf16.msra.mxu0 0
    %1210 = vmatprep.subr.bf16.mxu0 0
    %1211 = vmatpush2.bf16.msra.mxu0 0
    %1212 = vmatprep.subr.bf16.mxu0 0
    %1213 = vmatpush2.bf16.msra.mxu0 0
    %1214 = vmatprep.subr.bf16.mxu0 0
    %1215 = vmatpush2.bf16.msra.mxu0 0
    %1216 = vmatprep.subr.bf16.mxu0 0
    %1217 = vmatpush2.bf16.msra.mxu0 0
    %1218 = vmatprep.subr.bf16.mxu0 0
    %1219 = vmatpush2.bf16.msra.mxu0 0
    %1220 = vmatprep.subr.bf16.mxu0 0
    %1221 = vmatpush2.bf16.msra.mxu0 0
    %1222 = vmatprep.subr.bf16.mxu0 0
    %1223 = vmatpush2.bf16.msra.mxu0 0
    %1224 = vmatprep.mubr.bf16.mxu0 0
    %1225 = vmatmul.mubr.bf16.gmra.mxu0 %v1183
    %v1226 = vpop.f32.mrf.mxu0
    %v1227 = vadd.f32 0.0, %v1226
    %v1228 = vpop.f32.mrf.mxu0
    %v1229 = vpop.f32.mrf.mxu0
    %v1230 = vadd.f32 0.0, %v1229
    %v1231 = vpop.f32.mrf.mxu0
    %1232 = vmatprep.mubr.bf16.mxu0 0
    %1233 = vmatmul.mubr.bf16.gmra.mxu0 %v1186
    %v1234 = vpop.f32.mrf.mxu0
    %v1235 = vadd.f32 0.0, %v1234
    %v1236 = vpop.f32.mrf.mxu0
    %v1237 = vpop.f32.mrf.mxu0
    %v1238 = vpop.f32.mrf.mxu0
    %1239 = vdwg.mxu0
    %v1240 = vpack.c.bf16 %v1230, %v1227
    %v1241 = vld [vmem:[#allocation7 + $0x8] sm:$0xf]
    %v1242 = vld [vmem:[#allocation7 + $0x20] sm:$0xf]
    %v1243 = vld [vmem:[#allocation7 + $0x38] sm:$0xf]
    %v1244 = vld [vmem:[#allocation7 + $0x50] sm:$0xf]
    %v1245 = vld [vmem:[#allocation7 + $0x68] sm:$0xf]
    %v1246 = vld [vmem:[#allocation7 + $0x80] sm:$0xf]
    %v1247 = vld [vmem:[#allocation7 + $0x98] sm:$0xf]
    %v1248 = vld [vmem:[#allocation7 + $0xb0] sm:$0xf]
    %v1249 = vld [vmem:[#allocation7 + $0xc8] sm:$0xf]
    %v1250 = vld [vmem:[#allocation7 + $0xe0] sm:$0xf]
    %v1251 = vld [vmem:[#allocation7 + $0xf8] sm:$0xf]
    %v1252 = vld [vmem:[#allocation7 + $0x110] sm:$0xf]
    %v1253 = vld [vmem:[#allocation7 + $0x128] sm:$0xf]
    %v1254 = vld [vmem:[#allocation7 + $0x140] sm:$0xf]
    %v1255 = vld [vmem:[#allocation7 + $0x158] sm:$0xf]
    %v1256 = vld [vmem:[#allocation7 + $0x170] sm:$0xf]
    %v1257 = vld [vmem:[#allocation9 + $0x1c] sm:$0x1]
    %v1259 = vlaneseq
    %v1260 = vshrl.u32 %v1259, 7
    %v1261 = vsub.s32 0, %v1260
    %v1262 = vrot.slane %v1257, %v1261
    %v1280 = vunpack.c.l.b16 %v1241
    %v1281 = vunpack.c.l.b16 %v1242
    %v1282 = vunpack.c.l.b16 %v1243
    %v1283 = vunpack.c.l.b16 %v1244
    %v1284 = vunpack.c.l.b16 %v1245
    %v1285 = vunpack.c.l.b16 %v1246
    %v1286 = vunpack.c.l.b16 %v1247
    %v1287 = vunpack.c.l.b16 %v1248
    %v1288 = vunpack.c.l.b16 %v1249
    %v1289 = vunpack.c.l.b16 %v1250
    %v1290 = vunpack.c.l.b16 %v1251
    %v1291 = vunpack.c.l.b16 %v1252
    %v1292 = vunpack.c.l.b16 %v1253
    %v1293 = vunpack.c.l.b16 %v1254
    %v1294 = vunpack.c.l.b16 %v1255
    %v1295 = vunpack.c.l.b16 %v1256
    %v1296 = vpack.c.b16 %v1281, %v1280
    %v1297 = vpack.c.b16 %v1283, %v1282
    %v1298 = vpack.c.b16 %v1285, %v1284
    %v1299 = vpack.c.b16 %v1287, %v1286
    %v1300 = vpack.c.b16 %v1289, %v1288
    %v1301 = vpack.c.b16 %v1291, %v1290
    %v1302 = vpack.c.b16 %v1293, %v1292
    %v1303 = vpack.c.b16 %v1295, %v1294
    %1312 = vmatprep.subr.bf16.mxu0 0
    %1313 = vmatpush1.bf16.msra.mxu0 %v1303
    %1314 = vmatprep.subr.bf16.mxu0 0
    %1315 = vmatpush1.bf16.msra.mxu0 %v1302
    %1316 = vmatprep.subr.bf16.mxu0 0
    %1317 = vmatpush1.bf16.msra.mxu0 %v1301
    %1318 = vmatprep.subr.bf16.mxu0 0
    %1319 = vmatpush1.bf16.msra.mxu0 %v1300
    %1320 = vmatprep.subr.bf16.mxu0 0
    %1321 = vmatpush1.bf16.msra.mxu0 %v1299
    %1322 = vmatprep.subr.bf16.mxu0 0
    %1323 = vmatpush1.bf16.msra.mxu0 %v1298
    %1324 = vmatprep.subr.bf16.mxu0 0
    %1325 = vmatpush1.bf16.msra.mxu0 %v1297
    %1326 = vmatprep.subr.bf16.mxu0 0
    %1327 = vmatpush1.bf16.msra.mxu0 %v1296
    %1328 = vmatprep.subr.bf16.mxu0 0
    %1329 = vmatpush2.bf16.msra.mxu0 0
    %1330 = vmatprep.subr.bf16.mxu0 0
    %1331 = vmatpush2.bf16.msra.mxu0 0
    %1332 = vmatprep.subr.bf16.mxu0 0
    %1333 = vmatpush2.bf16.msra.mxu0 0
    %1334 = vmatprep.subr.bf16.mxu0 0
    %1335 = vmatpush2.bf16.msra.mxu0 0
    %1336 = vmatprep.subr.bf16.mxu0 0
    %1337 = vmatpush2.bf16.msra.mxu0 0
    %1338 = vmatprep.subr.bf16.mxu0 0
    %1339 = vmatpush2.bf16.msra.mxu0 0
    %1340 = vmatprep.subr.bf16.mxu0 0
    %1341 = vmatpush2.bf16.msra.mxu0 0
    %1342 = vmatprep.subr.bf16.mxu0 0
    %1343 = vmatpush2.bf16.msra.mxu0 0
    %1344 = vmatprep.mubr.bf16.mxu0 0
    %1345 = vmatmul.mubr.bf16.gmra.mxu0 %v1240
    %v1346 = vpop.f32.mrf.mxu0
    %v1347 = vadd.f32 %v1262, %v1346
    %v1348 = vpop.f32.mrf.mxu0
    %v1349 = vpop.f32.mrf.mxu0
    %v1350 = vadd.f32 %v1262, %v1349
    %v1351 = vpop.f32.mrf.mxu0
    %1352 = vdwg.mxu0
    %v1353 = vpack.c.bf16 %v1235, %v1235
    %v1354 = vld [vmem:[#allocation7 + $0x10] sm:$0xf]
    %v1355 = vld [vmem:[#allocation7 + $0x28] sm:$0xf]
    %v1356 = vld [vmem:[#allocation7 + $0x40] sm:$0xf]
    %v1357 = vld [vmem:[#allocation7 + $0x58] sm:$0xf]
    %v1358 = vld [vmem:[#allocation7 + $0x70] sm:$0xf]
    %v1359 = vld [vmem:[#allocation7 + $0x88] sm:$0xf]
    %v1360 = vld [vmem:[#allocation7 + $0xa0] sm:$0xf]
    %v1361 = vld [vmem:[#allocation7 + $0xb8] sm:$0xf]
    %v1362 = vld [vmem:[#allocation7 + $0xd0] sm:$0xf]
    %v1363 = vld [vmem:[#allocation7 + $0xe8] sm:$0xf]
    %v1364 = vld [vmem:[#allocation7 + $0x100] sm:$0xf]
    %v1365 = vld [vmem:[#allocation7 + $0x118] sm:$0xf]
    %v1366 = vld [vmem:[#allocation7 + $0x130] sm:$0xf]
    %v1367 = vld [vmem:[#allocation7 + $0x148] sm:$0xf]
    %v1368 = vld [vmem:[#allocation7 + $0x160] sm:$0xf]
    %v1369 = vld [vmem:[#allocation7 + $0x178] sm:$0xf]
    %v1370 = vld [vmem:[#allocation9 + $0x1e] sm:$0x1]
    %v1372 = vlaneseq
    %v1373 = vshrl.u32 %v1372, 7
    %v1374 = vsub.s32 0, %v1373
    %v1375 = vrot.slane %v1370, %v1374
    %v1393 = vunpack.c.l.b16 %v1354
    %v1394 = vunpack.c.l.b16 %v1355
    %v1395 = vunpack.c.l.b16 %v1356
    %v1396 = vunpack.c.l.b16 %v1357
    %v1397 = vunpack.c.l.b16 %v1358
    %v1398 = vunpack.c.l.b16 %v1359
    %v1399 = vunpack.c.l.b16 %v1360
    %v1400 = vunpack.c.l.b16 %v1361
    %v1401 = vunpack.c.l.b16 %v1362
    %v1402 = vunpack.c.l.b16 %v1363
    %v1403 = vunpack.c.l.b16 %v1364
    %v1404 = vunpack.c.l.b16 %v1365
    %v1405 = vunpack.c.l.b16 %v1366
    %v1406 = vunpack.c.l.b16 %v1367
    %v1407 = vunpack.c.l.b16 %v1368
    %v1408 = vunpack.c.l.b16 %v1369
    %v1409 = vpack.c.b16 %v1394, %v1393
    %v1410 = vpack.c.b16 %v1396, %v1395
    %v1411 = vpack.c.b16 %v1398, %v1397
    %v1412 = vpack.c.b16 %v1400, %v1399
    %v1413 = vpack.c.b16 %v1402, %v1401
    %v1414 = vpack.c.b16 %v1404, %v1403
    %v1415 = vpack.c.b16 %v1406, %v1405
    %v1416 = vpack.c.b16 %v1408, %v1407
    %1425 = vmatprep.subr.bf16.mxu0 0
    %1426 = vmatpush1.bf16.msra.mxu0 %v1416
    %1427 = vmatprep.subr.bf16.mxu0 0
    %1428 = vmatpush1.bf16.msra.mxu0 %v1415
    %1429 = vmatprep.subr.bf16.mxu0 0
    %1430 = vmatpush1.bf16.msra.mxu0 %v1414
    %1431 = vmatprep.subr.bf16.mxu0 0
    %1432 = vmatpush1.bf16.msra.mxu0 %v1413
    %1433 = vmatprep.subr.bf16.mxu0 0
    %1434 = vmatpush1.bf16.msra.mxu0 %v1412
    %1435 = vmatprep.subr.bf16.mxu0 0
    %1436 = vmatpush1.bf16.msra.mxu0 %v1411
    %1437 = vmatprep.subr.bf16.mxu0 0
    %1438 = vmatpush1.bf16.msra.mxu0 %v1410
    %1439 = vmatprep.subr.bf16.mxu0 0
    %1440 = vmatpush1.bf16.msra.mxu0 %v1409
    %1441 = vmatprep.subr.bf16.mxu0 0
    %1442 = vmatpush2.bf16.msra.mxu0 0
    %1443 = vmatprep.subr.bf16.mxu0 0
    %1444 = vmatpush2.bf16.msra.mxu0 0
    %1445 = vmatprep.subr.bf16.mxu0 0
    %1446 = vmatpush2.bf16.msra.mxu0 0
    %1447 = vmatprep.subr.bf16.mxu0 0
    %1448 = vmatpush2.bf16.msra.mxu0 0
    %1449 = vmatprep.subr.bf16.mxu0 0
    %1450 = vmatpush2.bf16.msra.mxu0 0
    %1451 = vmatprep.subr.bf16.mxu0 0
    %1452 = vmatpush2.bf16.msra.mxu0 0
    %1453 = vmatprep.subr.bf16.mxu0 0
    %1454 = vmatpush2.bf16.msra.mxu0 0
    %1455 = vmatprep.subr.bf16.mxu0 0
    %1456 = vmatpush2.bf16.msra.mxu0 0
    %1457 = vmatprep.mubr.bf16.mxu0 0
    %1458 = vmatmul.mubr.bf16.gmra.mxu0 %v1353
    %v1459 = vpop.f32.mrf.mxu0
    %v1460 = vadd.f32 %v1375, %v1459
    %v1461 = vpop.f32.mrf.mxu0
    %v1462 = vpop.f32.mrf.mxu0
    %v1463 = vpop.f32.mrf.mxu0
    %1464 = vdwg.mxu0
    %v1465 = vpack.c.bf16 %v816, %v812
    %v1466 = vpack.c.bf16 %v1047, %v1047
    %v1467 = vpack.c.bf16 %v857, %v853
    %v1468 = vpack.c.bf16 %v1086, %v1086
    %1469 = vmatprep.subr.bf16.mxu0 0
    %1470 = vmatpush1.bf16.xpose.msra.mxu0 0
    %1471 = vmatprep.subr.bf16.mxu0 0
    %1472 = vmatpush1.bf16.xpose.msra.mxu0 0
    %1473 = vmatprep.subr.bf16.mxu0 0
    %1474 = vmatpush1.bf16.xpose.msra.mxu0 0
    %1475 = vmatprep.subr.bf16.mxu0 0
    %1476 = vmatpush1.bf16.xpose.msra.mxu0 0
    %1477 = vmatprep.subr.bf16.mxu0 0
    %1478 = vmatpush1.bf16.xpose.msra.mxu0 0
    %1479 = vmatprep.subr.bf16.mxu0 0
    %1480 = vmatpush1.bf16.xpose.msra.mxu0 0
    %1481 = vmatprep.subr.bf16.mxu0 0
    %1482 = vmatpush1.bf16.xpose.msra.mxu0 %v1468
    %1483 = vmatprep.subr.bf16.mxu0 0
    %1484 = vmatpush1.bf16.xpose.msra.mxu0 %v1467
    %1485 = vmatprep.subr.bf16.mxu0 0
    %1486 = vmatpush2.bf16.xpose.msra.mxu0 0
    %1487 = vmatprep.subr.bf16.mxu0 0
    %1488 = vmatpush2.bf16.xpose.msra.mxu0 0
    %1489 = vmatprep.subr.bf16.mxu0 0
    %1490 = vmatpush2.bf16.xpose.msra.mxu0 0
    %1491 = vmatprep.subr.bf16.mxu0 0
    %1492 = vmatpush2.bf16.xpose.msra.mxu0 0
    %1493 = vmatprep.subr.bf16.mxu0 0
    %1494 = vmatpush2.bf16.xpose.msra.mxu0 0
    %1495 = vmatprep.subr.bf16.mxu0 0
    %1496 = vmatpush2.bf16.xpose.msra.mxu0 0
    %1497 = vmatprep.subr.bf16.mxu0 0
    %1498 = vmatpush2.bf16.xpose.msra.mxu0 0
    %1499 = vmatprep.subr.bf16.mxu0 0
    %1500 = vmatpush2.bf16.xpose.msra.mxu0 0
    %1501 = vmatprep.mubr.bf16.mxu0 0
    %1502 = vmatmul.mubr.bf16.gmra.mxu0 %v1465
    %v1503 = vpop.f32.mrf.mxu0
    %v1504 = vadd.f32 0.0, %v1503
    %v1505 = vpop.f32.mrf.mxu0
    %v1506 = vpop.f32.mrf.mxu0
    %v1507 = vadd.f32 0.0, %v1506
    %v1508 = vpop.f32.mrf.mxu0
    %1509 = vmatprep.mubr.bf16.mxu0 0
    %1510 = vmatmul.mubr.bf16.gmra.mxu0 %v1466
    %v1511 = vpop.f32.mrf.mxu0
    %v1512 = vadd.f32 0.0, %v1511
    %v1513 = vpop.f32.mrf.mxu0
    %v1514 = vpop.f32.mrf.mxu0
    %v1515 = vpop.f32.mrf.mxu0
    %1516 = vdwg.mxu0
    %v1517 = vsel %vm1144, %v1504, -inf
    %1518 = vmax.xlane.f32.xlu0 %v1517
    %v1519 = vpop.xlane.xlu0 %1518
    %v1520 = vsel %vm1144, %v1507, -inf
    %1521 = vmax.xlane.f32.xlu0 %v1520
    %v1522 = vpop.xlane.xlu0 %1521
    %v1523 = vsel %vm1144, %v1512, -inf
    %1524 = vmax.xlane.f32.xlu0 %v1523
    %v1525 = vpop.xlane.xlu0 %1524
    %v1526 = vsub.f32 %v1504, %v1519
    %v1527 = vsub.f32 %v1507, %v1522
    %v1528 = vsub.f32 %v1512, %v1525
    %v1529 = vmul.f32 %v1526, 1.442695
    %v1530 = vpow.pop %v1529
    %v1531 = vmul.f32 %v1527, 1.442695
    %v1532 = vpow.pop %v1531
    %v1533 = vmul.f32 %v1528, 1.442695
    %v1534 = vpow.pop %v1533
    %v1535 = vsel %vm1144, %v1530, 0.0
    %1536 = vadd.xlane.f32.xlu0 %v1535
    %v1537 = vpop.xlane.xlu0 %1536
    %v1538 = vsel %vm1144, %v1532, 0.0
    %1539 = vadd.xlane.f32.xlu0 %v1538
    %v1540 = vpop.xlane.xlu0 %1539
    %v1541 = vsel %vm1144, %v1534, 0.0
    %1542 = vadd.xlane.f32.xlu0 %v1541
    %v1543 = vpop.xlane.xlu0 %1542
    %v1544 = vrcp.pop %v1537
    %v1545 = vrcp.pop %v1540
    %v1546 = vrcp.pop %v1543
    %v1547 = vmul.f32 %v1530, %v1544
    %v1548 = vmul.f32 %v1532, %v1545
    %v1549 = vmul.f32 %v1534, %v1546
    %v1550 = vpack.c.bf16 %v1548, %v1547
    %v1551 = vpack.c.bf16 %v1549, %v1549
    %v1552 = vpack.c.bf16 %v859, %v855
    %v1553 = vpack.c.bf16 %v1088, %v1088
    %v1555 = vsel %vm1144, %v1550, 0
    %v1558 = vsel %vm1144, %v1551, 0
    %v1561 = vsel %vm1188, %v1553, 0
    %1563 = vmatprep.subr.bf16.mxu0 0
    %1564 = vmatpush1.bf16.msra.mxu0 0
    %1565 = vmatprep.subr.bf16.mxu0 0
    %1566 = vmatpush1.bf16.msra.mxu0 0
    %1567 = vmatprep.subr.bf16.mxu0 0
    %1568 = vmatpush1.bf16.msra.mxu0 0
    %1569 = vmatprep.subr.bf16.mxu0 0
    %1570 = vmatpush1.bf16.msra.mxu0 0
    %1571 = vmatprep.subr.bf16.mxu0 0
    %1572 = vmatpush1.bf16.msra.mxu0 0
    %1573 = vmatprep.subr.bf16.mxu0 0
    %1574 = vmatpush1.bf16.msra.mxu0 0
    %1575 = vmatprep.subr.bf16.mxu0 0
    %1576 = vmatpush1.bf16.msra.mxu0 %v1561
    %1577 = vmatprep.subr.bf16.mxu0 0
    %1578 = vmatpush1.bf16.msra.mxu0 %v1552
    %1579 = vmatprep.subr.bf16.mxu0 0
    %1580 = vmatpush2.bf16.msra.mxu0 0
    %1581 = vmatprep.subr.bf16.mxu0 0
    %1582 = vmatpush2.bf16.msra.mxu0 0
    %1583 = vmatprep.subr.bf16.mxu0 0
    %1584 = vmatpush2.bf16.msra.mxu0 0
    %1585 = vmatprep.subr.bf16.mxu0 0
    %1586 = vmatpush2.bf16.msra.mxu0 0
    %1587 = vmatprep.subr.bf16.mxu0 0
    %1588 = vmatpush2.bf16.msra.mxu0 0
    %1589 = vmatprep.subr.bf16.mxu0 0
    %1590 = vmatpush2.bf16.msra.mxu0 0
    %1591 = vmatprep.subr.bf16.mxu0 0
    %1592 = vmatpush2.bf16.msra.mxu0 0
    %1593 = vmatprep.subr.bf16.mxu0 0
    %1594 = vmatpush2.bf16.msra.mxu0 0
    %1595 = vmatprep.mubr.bf16.mxu0 0
    %1596 = vmatmul.mubr.bf16.gmra.mxu0 %v1555
    %v1597 = vpop.f32.mrf.mxu0
    %v1598 = vadd.f32 0.0, %v1597
    %v1599 = vpop.f32.mrf.mxu0
    %v1600 = vpop.f32.mrf.mxu0
    %v1601 = vadd.f32 0.0, %v1600
    %v1602 = vpop.f32.mrf.mxu0
    %1603 = vmatprep.mubr.bf16.mxu0 0
    %1604 = vmatmul.mubr.bf16.gmra.mxu0 %v1558
    %v1605 = vpop.f32.mrf.mxu0
    %v1606 = vadd.f32 0.0, %v1605
    %v1607 = vpop.f32.mrf.mxu0
    %v1608 = vpop.f32.mrf.mxu0
    %v1609 = vpop.f32.mrf.mxu0
    %1610 = vdwg.mxu0
    %v1611 = vpack.c.bf16 %v1601, %v1598
    %v1612 = vld [vmem:[#allocation7 + $0xc] sm:$0xf]
    %v1613 = vld [vmem:[#allocation7 + $0x24] sm:$0xf]
    %v1614 = vld [vmem:[#allocation7 + $0x3c] sm:$0xf]
    %v1615 = vld [vmem:[#allocation7 + $0x54] sm:$0xf]
    %v1616 = vld [vmem:[#allocation7 + $0x6c] sm:$0xf]
    %v1617 = vld [vmem:[#allocation7 + $0x84] sm:$0xf]
    %v1618 = vld [vmem:[#allocation7 + $0x9c] sm:$0xf]
    %v1619 = vld [vmem:[#allocation7 + $0xb4] sm:$0xf]
    %v1620 = vld [vmem:[#allocation7 + $0xcc] sm:$0xf]
    %v1621 = vld [vmem:[#allocation7 + $0xe4] sm:$0xf]
    %v1622 = vld [vmem:[#allocation7 + $0xfc] sm:$0xf]
    %v1623 = vld [vmem:[#allocation7 + $0x114] sm:$0xf]
    %v1624 = vld [vmem:[#allocation7 + $0x12c] sm:$0xf]
    %v1625 = vld [vmem:[#allocation7 + $0x144] sm:$0xf]
    %v1626 = vld [vmem:[#allocation7 + $0x15c] sm:$0xf]
    %v1627 = vld [vmem:[#allocation7 + $0x174] sm:$0xf]
    %v1628 = vld [vmem:[#allocation9 + $0x1d] sm:$0x1]
    %v1630 = vlaneseq
    %v1631 = vshrl.u32 %v1630, 7
    %v1632 = vsub.s32 0, %v1631
    %v1633 = vrot.slane %v1628, %v1632
    %v1651 = vunpack.c.l.b16 %v1612
    %v1652 = vunpack.c.l.b16 %v1613
    %v1653 = vunpack.c.l.b16 %v1614
    %v1654 = vunpack.c.l.b16 %v1615
    %v1655 = vunpack.c.l.b16 %v1616
    %v1656 = vunpack.c.l.b16 %v1617
    %v1657 = vunpack.c.l.b16 %v1618
    %v1658 = vunpack.c.l.b16 %v1619
    %v1659 = vunpack.c.l.b16 %v1620
    %v1660 = vunpack.c.l.b16 %v1621
    %v1661 = vunpack.c.l.b16 %v1622
    %v1662 = vunpack.c.l.b16 %v1623
    %v1663 = vunpack.c.l.b16 %v1624
    %v1664 = vunpack.c.l.b16 %v1625
    %v1665 = vunpack.c.l.b16 %v1626
    %v1666 = vunpack.c.l.b16 %v1627
    %v1667 = vpack.c.b16 %v1652, %v1651
    %v1668 = vpack.c.b16 %v1654, %v1653
    %v1669 = vpack.c.b16 %v1656, %v1655
    %v1670 = vpack.c.b16 %v1658, %v1657
    %v1671 = vpack.c.b16 %v1660, %v1659
    %v1672 = vpack.c.b16 %v1662, %v1661
    %v1673 = vpack.c.b16 %v1664, %v1663
    %v1674 = vpack.c.b16 %v1666, %v1665
    %1683 = vmatprep.subr.bf16.mxu0 0
    %1684 = vmatpush1.bf16.msra.mxu0 %v1674
    %1685 = vmatprep.subr.bf16.mxu0 0
    %1686 = vmatpush1.bf16.msra.mxu0 %v1673
    %1687 = vmatprep.subr.bf16.mxu0 0
    %1688 = vmatpush1.bf16.msra.mxu0 %v1672
    %1689 = vmatprep.subr.bf16.mxu0 0
    %1690 = vmatpush1.bf16.msra.mxu0 %v1671
    %1691 = vmatprep.subr.bf16.mxu0 0
    %1692 = vmatpush1.bf16.msra.mxu0 %v1670
    %1693 = vmatprep.subr.bf16.mxu0 0
    %1694 = vmatpush1.bf16.msra.mxu0 %v1669
    %1695 = vmatprep.subr.bf16.mxu0 0
    %1696 = vmatpush1.bf16.msra.mxu0 %v1668
    %1697 = vmatprep.subr.bf16.mxu0 0
    %1698 = vmatpush1.bf16.msra.mxu0 %v1667
    %1699 = vmatprep.subr.bf16.mxu0 0
    %1700 = vmatpush2.bf16.msra.mxu0 0
    %1701 = vmatprep.subr.bf16.mxu0 0
    %1702 = vmatpush2.bf16.msra.mxu0 0
    %1703 = vmatprep.subr.bf16.mxu0 0
    %1704 = vmatpush2.bf16.msra.mxu0 0
    %1705 = vmatprep.subr.bf16.mxu0 0
    %1706 = vmatpush2.bf16.msra.mxu0 0
    %1707 = vmatprep.subr.bf16.mxu0 0
    %1708 = vmatpush2.bf16.msra.mxu0 0
    %1709 = vmatprep.subr.bf16.mxu0 0
    %1710 = vmatpush2.bf16.msra.mxu0 0
    %1711 = vmatprep.subr.bf16.mxu0 0
    %1712 = vmatpush2.bf16.msra.mxu0 0
    %1713 = vmatprep.subr.bf16.mxu0 0
    %1714 = vmatpush2.bf16.msra.mxu0 0
    %1715 = vmatprep.mubr.bf16.mxu0 0
    %1716 = vmatmul.mubr.bf16.gmra.mxu0 %v1611
    %v1717 = vpop.f32.mrf.mxu0
    %v1718 = vadd.f32 %v1633, %v1717
    %v1719 = vpop.f32.mrf.mxu0
    %v1720 = vpop.f32.mrf.mxu0
    %v1721 = vadd.f32 %v1633, %v1720
    %v1722 = vpop.f32.mrf.mxu0
    %1723 = vdwg.mxu0
    %v1724 = vpack.c.bf16 %v1606, %v1606
    %v1725 = vld [vmem:[#allocation7 + $0x14] sm:$0xf]
    %v1726 = vld [vmem:[#allocation7 + $0x2c] sm:$0xf]
    %v1727 = vld [vmem:[#allocation7 + $0x44] sm:$0xf]
    %v1728 = vld [vmem:[#allocation7 + $0x5c] sm:$0xf]
    %v1729 = vld [vmem:[#allocation7 + $0x74] sm:$0xf]
    %v1730 = vld [vmem:[#allocation7 + $0x8c] sm:$0xf]
    %v1731 = vld [vmem:[#allocation7 + $0xa4] sm:$0xf]
    %v1732 = vld [vmem:[#allocation7 + $0xbc] sm:$0xf]
    %v1733 = vld [vmem:[#allocation7 + $0xd4] sm:$0xf]
    %v1734 = vld [vmem:[#allocation7 + $0xec] sm:$0xf]
    %v1735 = vld [vmem:[#allocation7 + $0x104] sm:$0xf]
    %v1736 = vld [vmem:[#allocation7 + $0x11c] sm:$0xf]
    %v1737 = vld [vmem:[#allocation7 + $0x134] sm:$0xf]
    %v1738 = vld [vmem:[#allocation7 + $0x14c] sm:$0xf]
    %v1739 = vld [vmem:[#allocation7 + $0x164] sm:$0xf]
    %v1740 = vld [vmem:[#allocation7 + $0x17c] sm:$0xf]
    %v1741 = vld [vmem:[#allocation9 + $0x1f] sm:$0x1]
    %v1743 = vlaneseq
    %v1744 = vshrl.u32 %v1743, 7
    %v1745 = vsub.s32 0, %v1744
    %v1746 = vrot.slane %v1741, %v1745
    %v1764 = vunpack.c.l.b16 %v1725
    %v1765 = vunpack.c.l.b16 %v1726
    %v1766 = vunpack.c.l.b16 %v1727
    %v1767 = vunpack.c.l.b16 %v1728
    %v1768 = vunpack.c.l.b16 %v1729
    %v1769 = vunpack.c.l.b16 %v1730
    %v1770 = vunpack.c.l.b16 %v1731
    %v1771 = vunpack.c.l.b16 %v1732
    %v1772 = vunpack.c.l.b16 %v1733
    %v1773 = vunpack.c.l.b16 %v1734
    %v1774 = vunpack.c.l.b16 %v1735
    %v1775 = vunpack.c.l.b16 %v1736
    %v1776 = vunpack.c.l.b16 %v1737
    %v1777 = vunpack.c.l.b16 %v1738
    %v1778 = vunpack.c.l.b16 %v1739
    %v1779 = vunpack.c.l.b16 %v1740
    %v1780 = vpack.c.b16 %v1765, %v1764
    %v1781 = vpack.c.b16 %v1767, %v1766
    %v1782 = vpack.c.b16 %v1769, %v1768
    %v1783 = vpack.c.b16 %v1771, %v1770
    %v1784 = vpack.c.b16 %v1773, %v1772
    %v1785 = vpack.c.b16 %v1775, %v1774
    %v1786 = vpack.c.b16 %v1777, %v1776
    %v1787 = vpack.c.b16 %v1779, %v1778
    %1796 = vmatprep.subr.bf16.mxu0 0
    %1797 = vmatpush1.bf16.msra.mxu0 %v1787
    %1798 = vmatprep.subr.bf16.mxu0 0
    %1799 = vmatpush1.bf16.msra.mxu0 %v1786
    %1800 = vmatprep.subr.bf16.mxu0 0
    %1801 = vmatpush1.bf16.msra.mxu0 %v1785
    %1802 = vmatprep.subr.bf16.mxu0 0
    %1803 = vmatpush1.bf16.msra.mxu0 %v1784
    %1804 = vmatprep.subr.bf16.mxu0 0
    %1805 = vmatpush1.bf16.msra.mxu0 %v1783
    %1806 = vmatprep.subr.bf16.mxu0 0
    %1807 = vmatpush1.bf16.msra.mxu0 %v1782
    %1808 = vmatprep.subr.bf16.mxu0 0
    %1809 = vmatpush1.bf16.msra.mxu0 %v1781
    %1810 = vmatprep.subr.bf16.mxu0 0
    %1811 = vmatpush1.bf16.msra.mxu0 %v1780
    %1812 = vmatprep.subr.bf16.mxu0 0
    %1813 = vmatpush2.bf16.msra.mxu0 0
    %1814 = vmatprep.subr.bf16.mxu0 0
    %1815 = vmatpush2.bf16.msra.mxu0 0
    %1816 = vmatprep.subr.bf16.mxu0 0
    %1817 = vmatpush2.bf16.msra.mxu0 0
    %1818 = vmatprep.subr.bf16.mxu0 0
    %1819 = vmatpush2.bf16.msra.mxu0 0
    %1820 = vmatprep.subr.bf16.mxu0 0
    %1821 = vmatpush2.bf16.msra.mxu0 0
    %1822 = vmatprep.subr.bf16.mxu0 0
    %1823 = vmatpush2.bf16.msra.mxu0 0
    %1824 = vmatprep.subr.bf16.mxu0 0
    %1825 = vmatpush2.bf16.msra.mxu0 0
    %1826 = vmatprep.subr.bf16.mxu0 0
    %1827 = vmatpush2.bf16.msra.mxu0 0
    %1828 = vmatprep.mubr.bf16.mxu0 0
    %1829 = vmatmul.mubr.bf16.gmra.mxu0 %v1724
    %v1830 = vpop.f32.mrf.mxu0
    %v1831 = vadd.f32 %v1746, %v1830
    %v1832 = vpop.f32.mrf.mxu0
    %v1833 = vpop.f32.mrf.mxu0
    %v1834 = vpop.f32.mrf.mxu0
    %1835 = vdwg.mxu0
    %v1836 = vadd.f32 %v1347, %v1718
    %v1837 = vadd.f32 %v1350, %v1721
    %v1838 = vadd.f32 %v1460, %v1831
    %v1839 = vlaneseq
    %v1840 = vshrl.u32 %v1839, 7
    %v1841 = vsub.s32 0, %v1840
    %v1842 = vrot.slane %v390, %v1841
    %v1843 = vmul.f32 %v1842, %v1836
    %v1844 = vmul.f32 %v1842, %v1837
    %v1845 = vadd.f32 %v90, %v1843
    %v1846 = vadd.f32 %v91, %v1844
    %v1847 = vsel %vm310, %v1845, 0.0
    %1848 = vadd.xlane.f32.xlu0 %v1847
    %v1849 = vpop.xlane.xlu0 %1848
    %v1850 = vsel %vm310, %v1846, 0.0
    %1851 = vadd.xlane.f32.xlu0 %v1850
    %v1852 = vpop.xlane.xlu0 %1851
    %v1853 = vmul.f32 %v1849, %v566
    %v1854 = vmul.f32 %v1852, %v566
    %v1855 = vsub.f32 %v1845, %v1853
    %v1856 = vsub.f32 %v1846, %v1854
    %v1857 = vmul.f32 %v1855, %v1855
    %v1858 = vmul.f32 %v1856, %v1856
    %v1859 = vsel %vm310, %v1857, 0.0
    %1860 = vadd.xlane.f32.xlu0 %v1859
    %v1861 = vpop.xlane.xlu0 %1860
    %v1862 = vsel %vm310, %v1858, 0.0
    %1863 = vadd.xlane.f32.xlu0 %v1862
    %v1864 = vpop.xlane.xlu0 %1863
    %v1865 = vmul.f32 %v1861, %v566
    %v1866 = vmul.f32 %v1864, %v566
    %v1867 = vadd.f32 %v1865, 1e-06
    %v1868 = vadd.f32 %v1866, 1e-06
    %v1869 = vrsqrt.pop %v1867
    %v1870 = vrsqrt.pop %v1868
    %v1871 = vmul.f32 %v1855, %v1869
    %v1872 = vmul.f32 %v1856, %v1870
    %v1873 = vadd.f32 %v431, 1.0
    %v1874 = vlaneseq
    %v1875 = vshrl.u32 %v1874, 7
    %v1876 = vsub.s32 0, %v1875
    %v1877 = vrot.slane %v1873, %v1876
    %v1878 = vmul.f32 %v1871, %v1877
    %v1879 = vmul.f32 %v1872, %v1877
    %v1880 = vlaneseq
    %v1881 = vshrl.u32 %v1880, 7
    %v1882 = vsub.s32 0, %v1881
    %v1883 = vrot.slane %v392, %v1882
    %v1884 = vadd.f32 %v1878, %v1883
    %v1885 = vadd.f32 %v1879, %v1883
    %v1886 = vpack.c.bf16 %v1885, %v1884
    %v1887 = vld [vmem:[#allocation6 + $0x60] sm:$0xf]
    %v1888 = vld [vmem:[#allocation6 + $0xc8] sm:$0xf]
    %v1889 = vld [vmem:[#allocation6 + $0x130] sm:$0xf]
    %v1890 = vld [vmem:[#allocation6 + $0x198] sm:$0xf]
    %v1891 = vld [vmem:[#allocation9 + $0x18] sm:$0x1]
    %v1893 = vlaneseq
    %v1894 = vshrl.u32 %v1893, 7
    %v1895 = vsub.s32 0, %v1894
    %v1896 = vrot.slane %v1891, %v1895
    %v1902 = vunpack.c.l.b16 %v1887
    %v1903 = vunpack.c.l.b16 %v1888
    %v1904 = vunpack.c.l.b16 %v1889
    %v1905 = vunpack.c.l.b16 %v1890
    %v1906 = vpack.c.b16 %v1903, %v1902
    %v1907 = vpack.c.b16 %v1905, %v1904
    %v1911 = vsel %vm310, %v1886, 0
    %1913 = vmatprep.subr.bf16.mxu0 0
    %1914 = vmatpush1.bf16.msra.mxu0 0
    %1915 = vmatprep.subr.bf16.mxu0 0
    %1916 = vmatpush1.bf16.msra.mxu0 0
    %1917 = vmatprep.subr.bf16.mxu0 0
    %1918 = vmatpush1.bf16.msra.mxu0 0
    %1919 = vmatprep.subr.bf16.mxu0 0
    %1920 = vmatpush1.bf16.msra.mxu0 0
    %1921 = vmatprep.subr.bf16.mxu0 0
    %1922 = vmatpush1.bf16.msra.mxu0 0
    %1923 = vmatprep.subr.bf16.mxu0 0
    %1924 = vmatpush1.bf16.msra.mxu0 0
    %1925 = vmatprep.subr.bf16.mxu0 0
    %1926 = vmatpush1.bf16.msra.mxu0 %v1907
    %1927 = vmatprep.subr.bf16.mxu0 0
    %1928 = vmatpush1.bf16.msra.mxu0 %v1906
    %1929 = vmatprep.subr.bf16.mxu0 0
    %1930 = vmatpush2.bf16.msra.mxu0 0
    %1931 = vmatprep.subr.bf16.mxu0 0
    %1932 = vmatpush2.bf16.msra.mxu0 0
    %1933 = vmatprep.subr.bf16.mxu0 0
    %1934 = vmatpush2.bf16.msra.mxu0 0
    %1935 = vmatprep.subr.bf16.mxu0 0
    %1936 = vmatpush2.bf16.msra.mxu0 0
    %1937 = vmatprep.subr.bf16.mxu0 0
    %1938 = vmatpush2.bf16.msra.mxu0 0
    %1939 = vmatprep.subr.bf16.mxu0 0
    %1940 = vmatpush2.bf16.msra.mxu0 0
    %1941 = vmatprep.subr.bf16.mxu0 0
    %1942 = vmatpush2.bf16.msra.mxu0 0
    %1943 = vmatprep.subr.bf16.mxu0 0
    %1944 = vmatpush2.bf16.msra.mxu0 0
    %1945 = vmatprep.mubr.bf16.mxu0 0
    %1946 = vmatmul.mubr.bf16.gmra.mxu0 %v1911
    %v1947 = vpop.f32.mrf.mxu0
    %v1948 = vadd.f32 %v1896, %v1947
    %v1949 = vpop.f32.mrf.mxu0
    %v1950 = vpop.f32.mrf.mxu0
    %v1951 = vadd.f32 %v1896, %v1950
    %v1952 = vpop.f32.mrf.mxu0
    %1953 = vdwg.mxu0
    %v1954 = vmul.f32 %v1948, 0.5
    %v1955 = vmul.f32 %v1951, 0.5
    %v1956 = vmul.f32 %v1948, 0.044715
    %v1957 = vmul.f32 %v1951, 0.044715
    %v1958 = vmul.f32 %v1956, %v1948
    %v1959 = vmul.f32 %v1957, %v1951
    %v1960 = vmul.f32 %v1958, %v1948
    %v1961 = vmul.f32 %v1959, %v1951
    %v1962 = vadd.f32 %v1948, %v1960
    %v1963 = vadd.f32 %v1951, %v1961
    %v1964 = vmul.f32 %v1962, 0.7978846
    %v1965 = vmul.f32 %v1963, 0.7978846
    %v1966 = vtanh.pop %v1964
    %v1967 = vtanh.pop %v1965
    %v1968 = vadd.f32 %v1966, 1.0
    %v1969 = vadd.f32 %v1967, 1.0
    %v1970 = vmul.f32 %v1954, %v1968
    %v1971 = vmul.f32 %v1955, %v1969
    %v1972 = vpack.c.bf16 %v1971, %v1970
    %v1973 = vld [vmem:[#allocation7] sm:$0xf]
    %v1974 = vld [vmem:[#allocation7 + $0x18] sm:$0xf]
    %v1975 = vld [vmem:[#allocation7 + $0x30] sm:$0xf]
    %v1976 = vld [vmem:[#allocation7 + $0x48] sm:$0xf]
    %v1977 = vld [vmem:[#allocation7 + $0x60] sm:$0xf]
    %v1978 = vld [vmem:[#allocation7 + $0x78] sm:$0xf]
    %v1979 = vld [vmem:[#allocation7 + $0x90] sm:$0xf]
    %v1980 = vld [vmem:[#allocation7 + $0xa8] sm:$0xf]
    %v1981 = vld [vmem:[#allocation7 + $0xc0] sm:$0xf]
    %v1982 = vld [vmem:[#allocation7 + $0xd8] sm:$0xf]
    %v1983 = vld [vmem:[#allocation7 + $0xf0] sm:$0xf]
    %v1984 = vld [vmem:[#allocation7 + $0x108] sm:$0xf]
    %v1985 = vld [vmem:[#allocation7 + $0x120] sm:$0xf]
    %v1986 = vld [vmem:[#allocation7 + $0x138] sm:$0xf]
    %v1987 = vld [vmem:[#allocation7 + $0x150] sm:$0xf]
    %v1988 = vld [vmem:[#allocation7 + $0x168] sm:$0xf]
    %v1989 = vld [vmem:[#allocation9 + $0x1a] sm:$0x1]
    %v1991 = vlaneseq
    %v1992 = vshrl.u32 %v1991, 7
    %v1993 = vsub.s32 0, %v1992
    %v1994 = vrot.slane %v1989, %v1993
    %v2012 = vunpack.c.l.b16 %v1973
    %v2013 = vunpack.c.l.b16 %v1974
    %v2014 = vunpack.c.l.b16 %v1975
    %v2015 = vunpack.c.l.b16 %v1976
    %v2016 = vunpack.c.l.b16 %v1977
    %v2017 = vunpack.c.l.b16 %v1978
    %v2018 = vunpack.c.l.b16 %v1979
    %v2019 = vunpack.c.l.b16 %v1980
    %v2020 = vunpack.c.l.b16 %v1981
    %v2021 = vunpack.c.l.b16 %v1982
    %v2022 = vunpack.c.l.b16 %v1983
    %v2023 = vunpack.c.l.b16 %v1984
    %v2024 = vunpack.c.l.b16 %v1985
    %v2025 = vunpack.c.l.b16 %v1986
    %v2026 = vunpack.c.l.b16 %v1987
    %v2027 = vunpack.c.l.b16 %v1988
    %v2028 = vpack.c.b16 %v2013, %v2012
    %v2029 = vpack.c.b16 %v2015, %v2014
    %v2030 = vpack.c.b16 %v2017, %v2016
    %v2031 = vpack.c.b16 %v2019, %v2018
    %v2032 = vpack.c.b16 %v2021, %v2020
    %v2033 = vpack.c.b16 %v2023, %v2022
    %v2034 = vpack.c.b16 %v2025, %v2024
    %v2035 = vpack.c.b16 %v2027, %v2026
    %2044 = vmatprep.subr.bf16.mxu0 0
    %2045 = vmatpush1.bf16.msra.mxu0 %v2035
    %2046 = vmatprep.subr.bf16.mxu0 0
    %2047 = vmatpush1.bf16.msra.mxu0 %v2034
    %2048 = vmatprep.subr.bf16.mxu0 0
    %2049 = vmatpush1.bf16.msra.mxu0 %v2033
    %2050 = vmatprep.subr.bf16.mxu0 0
    %2051 = vmatpush1.bf16.msra.mxu0 %v2032
    %2052 = vmatprep.subr.bf16.mxu0 0
    %2053 = vmatpush1.bf16.msra.mxu0 %v2031
    %2054 = vmatprep.subr.bf16.mxu0 0
    %2055 = vmatpush1.bf16.msra.mxu0 %v2030
    %2056 = vmatprep.subr.bf16.mxu0 0
    %2057 = vmatpush1.bf16.msra.mxu0 %v2029
    %2058 = vmatprep.subr.bf16.mxu0 0
    %2059 = vmatpush1.bf16.msra.mxu0 %v2028
    %2060 = vmatprep.subr.bf16.mxu0 0
    %2061 = vmatpush2.bf16.msra.mxu0 0
    %2062 = vmatprep.subr.bf16.mxu0 0
    %2063 = vmatpush2.bf16.msra.mxu0 0
    %2064 = vmatprep.subr.bf16.mxu0 0
    %2065 = vmatpush2.bf16.msra.mxu0 0
    %2066 = vmatprep.subr.bf16.mxu0 0
    %2067 = vmatpush2.bf16.msra.mxu0 0
    %2068 = vmatprep.subr.bf16.mxu0 0
    %2069 = vmatpush2.bf16.msra.mxu0 0
    %2070 = vmatprep.subr.bf16.mxu0 0
    %2071 = vmatpush2.bf16.msra.mxu0 0
    %2072 = vmatprep.subr.bf16.mxu0 0
    %2073 = vmatpush2.bf16.msra.mxu0 0
    %2074 = vmatprep.subr.bf16.mxu0 0
    %2075 = vmatpush2.bf16.msra.mxu0 0
    %2076 = vmatprep.mubr.bf16.mxu0 0
    %2077 = vmatmul.mubr.bf16.gmra.mxu0 %v1972
    %v2078 = vpop.f32.mrf.mxu0
    %v2079 = vadd.f32 %v1994, %v2078
    %v2080 = vpop.f32.mrf.mxu0
    %v2081 = vpop.f32.mrf.mxu0
    %v2082 = vadd.f32 %v1994, %v2081
    %v2083 = vpop.f32.mrf.mxu0
    %2084 = vdwg.mxu0
    %v2085 = vlaneseq
    %v2086 = vshrl.u32 %v2085, 7
    %v2087 = vsub.s32 0, %v2086
    %v2088 = vrot.slane %v433, %v2087
    %v2089 = vmul.f32 %v2088, %v2079
    %v2090 = vmul.f32 %v2088, %v2082
    %v2091 = vadd.f32 %v1845, %v2089
    %v2092 = vadd.f32 %v1846, %v2090
    %v2093 = vlaneseq
    %v2094 = vshrl.u32 %v2093, 7
    %v2095 = vsub.s32 0, %v2094
    %v2096 = vrot.slane %v513, %v2095
    %v2097 = vmul.f32 %v2096, %v1838
    %v2098 = vadd.f32 %v92, %v2097
    %v2099 = vsel %vm310, %v2098, 0.0
    %2100 = vadd.xlane.f32.xlu0 %v2099
    %v2101 = vpop.xlane.xlu0 %2100
    %v2102 = vmul.f32 %v2101, %v566
    %v2103 = vsub.f32 %v2098, %v2102
    %v2104 = vmul.f32 %v2103, %v2103
    %v2105 = vsel %vm310, %v2104, 0.0
    %2106 = vadd.xlane.f32.xlu0 %v2105
    %v2107 = vpop.xlane.xlu0 %2106
    %v2108 = vmul.f32 %v2107, %v566
    %v2109 = vadd.f32 %v2108, 1e-06
    %v2110 = vrsqrt.pop %v2109
    %v2111 = vmul.f32 %v2103, %v2110
    %v2112 = vadd.f32 %v554, 1.0
    %v2113 = vlaneseq
    %v2114 = vshrl.u32 %v2113, 7
    %v2115 = vsub.s32 0, %v2114
    %v2116 = vrot.slane %v2112, %v2115
    %v2117 = vmul.f32 %v2111, %v2116
    %v2118 = vlaneseq
    %v2119 = vshrl.u32 %v2118, 7
    %v2120 = vsub.s32 0, %v2119
    %v2121 = vrot.slane %v515, %v2120
    %v2122 = vadd.f32 %v2117, %v2121
    %v2123 = vpack.c.bf16 %v2122, %v2122
    %v2124 = vld [vmem:[#allocation6 + $0x64] sm:$0xf]
    %v2125 = vld [vmem:[#allocation6 + $0xcc] sm:$0xf]
    %v2126 = vld [vmem:[#allocation6 + $0x134] sm:$0xf]
    %v2127 = vld [vmem:[#allocation6 + $0x19c] sm:$0xf]
    %v2128 = vld [vmem:[#allocation9 + $0x19] sm:$0x1]
    %v2130 = vlaneseq
    %v2131 = vshrl.u32 %v2130, 7
    %v2132 = vsub.s32 0, %v2131
    %v2133 = vrot.slane %v2128, %v2132
    %v2139 = vunpack.c.l.b16 %v2124
    %v2140 = vunpack.c.l.b16 %v2125
    %v2141 = vunpack.c.l.b16 %v2126
    %v2142 = vunpack.c.l.b16 %v2127
    %v2143 = vpack.c.b16 %v2140, %v2139
    %v2144 = vpack.c.b16 %v2142, %v2141
    %v2148 = vsel %vm310, %v2123, 0
    %2150 = vmatprep.subr.bf16.mxu0 0
    %2151 = vmatpush1.bf16.msra.mxu0 0
    %2152 = vmatprep.subr.bf16.mxu0 0
    %2153 = vmatpush1.bf16.msra.mxu0 0
    %2154 = vmatprep.subr.bf16.mxu0 0
    %2155 = vmatpush1.bf16.msra.mxu0 0
    %2156 = vmatprep.subr.bf16.mxu0 0
    %2157 = vmatpush1.bf16.msra.mxu0 0
    %2158 = vmatprep.subr.bf16.mxu0 0
    %2159 = vmatpush1.bf16.msra.mxu0 0
    %2160 = vmatprep.subr.bf16.mxu0 0
    %2161 = vmatpush1.bf16.msra.mxu0 0
    %2162 = vmatprep.subr.bf16.mxu0 0
    %2163 = vmatpush1.bf16.msra.mxu0 %v2144
    %2164 = vmatprep.subr.bf16.mxu0 0
    %2165 = vmatpush1.bf16.msra.mxu0 %v2143
    %2166 = vmatprep.subr.bf16.mxu0 0
    %2167 = vmatpush2.bf16.msra.mxu0 0
    %2168 = vmatprep.subr.bf16.mxu0 0
    %2169 = vmatpush2.bf16.msra.mxu0 0
    %2170 = vmatprep.subr.bf16.mxu0 0
    %2171 = vmatpush2.bf16.msra.mxu0 0
    %2172 = vmatprep.subr.bf16.mxu0 0
    %2173 = vmatpush2.bf16.msra.mxu0 0
    %2174 = vmatprep.subr.bf16.mxu0 0
    %2175 = vmatpush2.bf16.msra.mxu0 0
    %2176 = vmatprep.subr.bf16.mxu0 0
    %2177 = vmatpush2.bf16.msra.mxu0 0
    %2178 = vmatprep.subr.bf16.mxu0 0
    %2179 = vmatpush2.bf16.msra.mxu0 0
    %2180 = vmatprep.subr.bf16.mxu0 0
    %2181 = vmatpush2.bf16.msra.mxu0 0
    %2182 = vmatprep.mubr.bf16.mxu0 0
    %2183 = vmatmul.mubr.bf16.gmra.mxu0 %v2148
    %v2184 = vpop.f32.mrf.mxu0
    %v2185 = vadd.f32 %v2133, %v2184
    %v2186 = vpop.f32.mrf.mxu0
    %v2187 = vpop.f32.mrf.mxu0
    %v2188 = vpop.f32.mrf.mxu0
    %2189 = vdwg.mxu0
    %v2190 = vmul.f32 %v2185, 0.5
    %v2191 = vmul.f32 %v2185, 0.044715
    %v2192 = vmul.f32 %v2191, %v2185
    %v2193 = vmul.f32 %v2192, %v2185
    %v2194 = vadd.f32 %v2185, %v2193
    %v2195 = vmul.f32 %v2194, 0.7978846
    %v2196 = vtanh.pop %v2195
    %v2197 = vadd.f32 %v2196, 1.0
    %v2198 = vmul.f32 %v2190, %v2197
    %v2199 = vpack.c.bf16 %v2198, %v2198
    %v2200 = vld [vmem:[#allocation7 + $0x4] sm:$0xf]
    %v2201 = vld [vmem:[#allocation7 + $0x1c] sm:$0xf]
    %v2202 = vld [vmem:[#allocation7 + $0x34] sm:$0xf]
    %v2203 = vld [vmem:[#allocation7 + $0x4c] sm:$0xf]
    %v2204 = vld [vmem:[#allocation7 + $0x64] sm:$0xf]
    %v2205 = vld [vmem:[#allocation7 + $0x7c] sm:$0xf]
    %v2206 = vld [vmem:[#allocation7 + $0x94] sm:$0xf]
    %v2207 = vld [vmem:[#allocation7 + $0xac] sm:$0xf]
    %v2208 = vld [vmem:[#allocation7 + $0xc4] sm:$0xf]
    %v2209 = vld [vmem:[#allocation7 + $0xdc] sm:$0xf]
    %v2210 = vld [vmem:[#allocation7 + $0xf4] sm:$0xf]
    %v2211 = vld [vmem:[#allocation7 + $0x10c] sm:$0xf]
    %v2212 = vld [vmem:[#allocation7 + $0x124] sm:$0xf]
    %v2213 = vld [vmem:[#allocation7 + $0x13c] sm:$0xf]
    %v2214 = vld [vmem:[#allocation7 + $0x154] sm:$0xf]
    %v2215 = vld [vmem:[#allocation7 + $0x16c] sm:$0xf]
    %v2216 = vld [vmem:[#allocation9 + $0x1b] sm:$0x1]
    %v2218 = vlaneseq
    %v2219 = vshrl.u32 %v2218, 7
    %v2220 = vsub.s32 0, %v2219
    %v2221 = vrot.slane %v2216, %v2220
    %v2239 = vunpack.c.l.b16 %v2200
    %v2240 = vunpack.c.l.b16 %v2201
    %v2241 = vunpack.c.l.b16 %v2202
    %v2242 = vunpack.c.l.b16 %v2203
    %v2243 = vunpack.c.l.b16 %v2204
    %v2244 = vunpack.c.l.b16 %v2205
    %v2245 = vunpack.c.l.b16 %v2206
    %v2246 = vunpack.c.l.b16 %v2207
    %v2247 = vunpack.c.l.b16 %v2208
    %v2248 = vunpack.c.l.b16 %v2209
    %v2249 = vunpack.c.l.b16 %v2210
    %v2250 = vunpack.c.l.b16 %v2211
    %v2251 = vunpack.c.l.b16 %v2212
    %v2252 = vunpack.c.l.b16 %v2213
    %v2253 = vunpack.c.l.b16 %v2214
    %v2254 = vunpack.c.l.b16 %v2215
    %v2255 = vpack.c.b16 %v2240, %v2239
    %v2256 = vpack.c.b16 %v2242, %v2241
    %v2257 = vpack.c.b16 %v2244, %v2243
    %v2258 = vpack.c.b16 %v2246, %v2245
    %v2259 = vpack.c.b16 %v2248, %v2247
    %v2260 = vpack.c.b16 %v2250, %v2249
    %v2261 = vpack.c.b16 %v2252, %v2251
    %v2262 = vpack.c.b16 %v2254, %v2253
    %2271 = vmatprep.subr.bf16.mxu0 0
    %2272 = vmatpush1.bf16.msra.mxu0 %v2262
    %2273 = vmatprep.subr.bf16.mxu0 0
    %2274 = vmatpush1.bf16.msra.mxu0 %v2261
    %2275 = vmatprep.subr.bf16.mxu0 0
    %2276 = vmatpush1.bf16.msra.mxu0 %v2260
    %2277 = vmatprep.subr.bf16.mxu0 0
    %2278 = vmatpush1.bf16.msra.mxu0 %v2259
    %2279 = vmatprep.subr.bf16.mxu0 0
    %2280 = vmatpush1.bf16.msra.mxu0 %v2258
    %2281 = vmatprep.subr.bf16.mxu0 0
    %2282 = vmatpush1.bf16.msra.mxu0 %v2257
    %2283 = vmatprep.subr.bf16.mxu0 0
    %2284 = vmatpush1.bf16.msra.mxu0 %v2256
    %2285 = vmatprep.subr.bf16.mxu0 0
    %2286 = vmatpush1.bf16.msra.mxu0 %v2255
    %2287 = vmatprep.subr.bf16.mxu0 0
    %2288 = vmatpush2.bf16.msra.mxu0 0
    %2289 = vmatprep.subr.bf16.mxu0 0
    %2290 = vmatpush2.bf16.msra.mxu0 0
    %2291 = vmatprep.subr.bf16.mxu0 0
    %2292 = vmatpush2.bf16.msra.mxu0 0
    %2293 = vmatprep.subr.bf16.mxu0 0
    %2294 = vmatpush2.bf16.msra.mxu0 0
    %2295 = vmatprep.subr.bf16.mxu0 0
    %2296 = vmatpush2.bf16.msra.mxu0 0
    %2297 = vmatprep.subr.bf16.mxu0 0
    %2298 = vmatpush2.bf16.msra.mxu0 0
    %2299 = vmatprep.subr.bf16.mxu0 0
    %2300 = vmatpush2.bf16.msra.mxu0 0
    %2301 = vmatprep.subr.bf16.mxu0 0
    %2302 = vmatpush2.bf16.msra.mxu0 0
    %2303 = vmatprep.mubr.bf16.mxu0 0
    %2304 = vmatmul.mubr.bf16.gmra.mxu0 %v2199
    %v2305 = vpop.f32.mrf.mxu0
    %v2306 = vadd.f32 %v2221, %v2305
    %v2307 = vpop.f32.mrf.mxu0
    %v2308 = vpop.f32.mrf.mxu0
    %v2309 = vpop.f32.mrf.mxu0
    %2310 = vdwg.mxu0
    %v2311 = vlaneseq
    %v2312 = vshrl.u32 %v2311, 7
    %v2313 = vsub.s32 0, %v2312
    %v2314 = vrot.slane %v556, %v2313
    %v2315 = vmul.f32 %v2314, %v2306
    %v2316 = vadd.f32 %v2098, %v2315
    %2317 = vst.msk [vmem:[%s6] sm:$0xff] %vm310, %v2091
    %2318 = vst.msk [vmem:[%s6 + $0x8] sm:$0xff] %vm310, %v2092
    %2319 = vst.msk [vmem:[%s6 + $0x10] sm:$0xff] %vm310, %v2316
    %s2320 = scalar_lea.vmem [#allocation2], 16
    %v2321 = vld [vmem:[%s2320] sm:$0xff]
    %v2322 = vld [vmem:[%s2320 + $0x8] sm:$0xff]
    %s2323 = scalar_lea.vmem [#allocation4], 8
    %v2324 = vld [vmem:[%s2323] sm:$0xff]
    %s2325 = scalar_lea.vmem %s2, 1
    %v2326 = vld [vmem:[%s2325] sm:$0x1]
    %v2327 = vxor.u32 %v2326, 2147483648
    %v2328 = vmul.f32 %v2327, 1.442695
    %v2329 = vpow.pop %v2328
    %v2330 = vadd.f32 %v2329, 1.0
    %v2331 = vrcp.pop %v2330
    %v2332 = vmul.f32 1.0, %v2331
    %v2333 = vmul.f32 %v2326, %v2332
    %v2334 = vpack.c.bf16 %v2333, %v2333
    %v2335 = vld [vmem:[#allocation6] sm:$0xff]
    %v2336 = vld [vmem:[#allocation6 + $0x8] sm:$0xff]
    %v2337 = vld [vmem:[#allocation6 + $0x10] sm:$0xff]
    %v2338 = vld [vmem:[#allocation6 + $0x18] sm:$0xff]
    %v2339 = vld [vmem:[#allocation6 + $0x20] sm:$0xff]
    %v2340 = vld [vmem:[#allocation6 + $0x28] sm:$0xff]
    %v2341 = vld [vmem:[#allocation6 + $0x68] sm:$0xff]
    %v2342 = vld [vmem:[#allocation6 + $0x70] sm:$0xff]
    %v2343 = vld [vmem:[#allocation6 + $0x78] sm:$0xff]
    %v2344 = vld [vmem:[#allocation6 + $0x80] sm:$0xff]
    %v2345 = vld [vmem:[#allocation6 + $0x88] sm:$0xff]
    %v2346 = vld [vmem:[#allocation6 + $0x90] sm:$0xff]
    %v2347 = vld [vmem:[#allocation6 + $0xd0] sm:$0xff]
    %v2348 = vld [vmem:[#allocation6 + $0xd8] sm:$0xff]
    %v2349 = vld [vmem:[#allocation6 + $0xe0] sm:$0xff]
    %v2350 = vld [vmem:[#allocation6 + $0xe8] sm:$0xff]
    %v2351 = vld [vmem:[#allocation6 + $0xf0] sm:$0xff]
    %v2352 = vld [vmem:[#allocation6 + $0xf8] sm:$0xff]
    %v2353 = vld [vmem:[#allocation6 + $0x138] sm:$0xff]
    %v2354 = vld [vmem:[#allocation6 + $0x140] sm:$0xff]
    %v2355 = vld [vmem:[#allocation6 + $0x148] sm:$0xff]
    %v2356 = vld [vmem:[#allocation6 + $0x150] sm:$0xff]
    %v2357 = vld [vmem:[#allocation6 + $0x158] sm:$0xff]
    %v2358 = vld [vmem:[#allocation6 + $0x160] sm:$0xff]
    %v2359 = vld [vmem:[#allocation9] sm:$0xff]
    %v2360 = vld [vmem:[#allocation9 + $0x8] sm:$0xf]
    %v2385 = vunpack.c.l.b16 %v2335
    %v2386 = vunpack.c.h.b16 %v2335
    %v2387 = vunpack.c.l.b16 %v2336
    %v2388 = vunpack.c.h.b16 %v2336
    %v2389 = vunpack.c.l.b16 %v2337
    %v2390 = vunpack.c.h.b16 %v2337
    %v2391 = vunpack.c.l.b16 %v2338
    %v2392 = vunpack.c.h.b16 %v2338
    %v2393 = vunpack.c.l.b16 %v2339
    %v2394 = vunpack.c.h.b16 %v2339
    %v2395 = vunpack.c.l.b16 %v2340
    %v2396 = vunpack.c.h.b16 %v2340
    %v2397 = vunpack.c.l.b16 %v2341
    %v2398 = vunpack.c.h.b16 %v2341
    %v2399 = vunpack.c.l.b16 %v2342
    %v2400 = vunpack.c.h.b16 %v2342
    %v2401 = vunpack.c.l.b16 %v2343
    %v2402 = vunpack.c.h.b16 %v2343
    %v2403 = vunpack.c.l.b16 %v2344
    %v2404 = vunpack.c.h.b16 %v2344
    %v2405 = vunpack.c.l.b16 %v2345
    %v2406 = vunpack.c.h.b16 %v2345
    %v2407 = vunpack.c.l.b16 %v2346
    %v2408 = vunpack.c.h.b16 %v2346
    %v2409 = vunpack.c.l.b16 %v2347
    %v2410 = vunpack.c.h.b16 %v2347
    %v2411 = vunpack.c.l.b16 %v2348
    %v2412 = vunpack.c.h.b16 %v2348
    %v2413 = vunpack.c.l.b16 %v2349
    %v2414 = vunpack.c.h.b16 %v2349
    %v2415 = vunpack.c.l.b16 %v2350
    %v2416 = vunpack.c.h.b16 %v2350
    %v2417 = vunpack.c.l.b16 %v2351
    %v2418 = vunpack.c.h.b16 %v2351
    %v2419 = vunpack.c.l.b16 %v2352
    %v2420 = vunpack.c.h.b16 %v2352
    %v2421 = vunpack.c.l.b16 %v2353
    %v2422 = vunpack.c.h.b16 %v2353
    %v2423 = vunpack.c.l.b16 %v2354
    %v2424 = vunpack.c.h.b16 %v2354
    %v2425 = vunpack.c.l.b16 %v2355
    %v2426 = vunpack.c.h.b16 %v2355
    %v2427 = vunpack.c.l.b16 %v2356
    %v2428 = vunpack.c.h.b16 %v2356
    %v2429 = vunpack.c.l.b16 %v2357
    %v2430 = vunpack.c.h.b16 %v2357
    %v2431 = vunpack.c.l.b16 %v2358
    %v2432 = vunpack.c.h.b16 %v2358
    %v2433 = vpack.c.b16 %v2397, %v2385
    %v2434 = vpack.c.b16 %v2398, %v2386
    %v2435 = vpack.c.b16 %v2399, %v2387
    %v2436 = vpack.c.b16 %v2400, %v2388
    %v2437 = vpack.c.b16 %v2401, %v2389
    %v2438 = vpack.c.b16 %v2402, %v2390
    %v2439 = vpack.c.b16 %v2403, %v2391
    %v2440 = vpack.c.b16 %v2404, %v2392
    %v2441 = vpack.c.b16 %v2405, %v2393
    %v2442 = vpack.c.b16 %v2406, %v2394
    %v2443 = vpack.c.b16 %v2407, %v2395
    %v2444 = vpack.c.b16 %v2408, %v2396
    %v2445 = vpack.c.b16 %v2421, %v2409
    %v2446 = vpack.c.b16 %v2422, %v2410
    %v2447 = vpack.c.b16 %v2423, %v2411
    %v2448 = vpack.c.b16 %v2424, %v2412
    %v2449 = vpack.c.b16 %v2425, %v2413
    %v2450 = vpack.c.b16 %v2426, %v2414
    %v2451 = vpack.c.b16 %v2427, %v2415
    %v2452 = vpack.c.b16 %v2428, %v2416
    %v2453 = vpack.c.b16 %v2429, %v2417
    %v2454 = vpack.c.b16 %v2430, %v2418
    %v2455 = vpack.c.b16 %v2431, %v2419
    %v2456 = vpack.c.b16 %v2432, %v2420
    %v2483 = vlaneseq
    %v2484 = vshrl.u32 %v2483, 7
    %v2485 = vsub.s32 0, %v2484
    %v2486 = vrot.slane %v2359, %v2485
    %v2487 = vlaneseq
    %v2488 = vshrl.u32 %v2487, 7
    %v2489 = vsub.s32 1, %v2488
    %v2490 = vrot.slane %v2359, %v2489
    %v2491 = vlaneseq
    %v2492 = vshrl.u32 %v2491, 7
    %v2493 = vsub.s32 2, %v2492
    %v2494 = vrot.slane %v2359, %v2493
    %v2495 = vlaneseq
    %v2496 = vshrl.u32 %v2495, 7
    %v2497 = vsub.s32 3, %v2496
    %v2498 = vrot.slane %v2359, %v2497
    %v2499 = vlaneseq
    %v2500 = vshrl.u32 %v2499, 7
    %v2501 = vsub.s32 4, %v2500
    %v2502 = vrot.slane %v2359, %v2501
    %v2503 = vlaneseq
    %v2504 = vshrl.u32 %v2503, 7
    %v2505 = vsub.s32 5, %v2504
    %v2506 = vrot.slane %v2359, %v2505
    %v2507 = vlaneseq
    %v2508 = vshrl.u32 %v2507, 7
    %v2509 = vsub.s32 6, %v2508
    %v2510 = vrot.slane %v2359, %v2509
    %v2511 = vlaneseq
    %v2512 = vshrl.u32 %v2511, 7
    %v2513 = vsub.s32 7, %v2512
    %v2514 = vrot.slane %v2359, %v2513
    %v2515 = vlaneseq
    %v2516 = vshrl.u32 %v2515, 7
    %v2517 = vsub.s32 0, %v2516
    %v2518 = vrot.slane %v2360, %v2517
    %v2519 = vlaneseq
    %v2520 = vshrl.u32 %v2519, 7
    %v2521 = vsub.s32 1, %v2520
    %v2522 = vrot.slane %v2360, %v2521
    %v2523 = vlaneseq
    %v2524 = vshrl.u32 %v2523, 7
    %v2525 = vsub.s32 2, %v2524
    %v2526 = vrot.slane %v2360, %v2525
    %v2527 = vlaneseq
    %v2528 = vshrl.u32 %v2527, 7
    %v2529 = vsub.s32 3, %v2528
    %v2530 = vrot.slane %v2360, %v2529
    %v2544 = vsel %vm310, %v2334, 0
    %2546 = vmatprep.subr.bf16.mxu0 0
    %2547 = vmatpush1.bf16.msra.mxu0 0
    %2548 = vmatprep.subr.bf16.mxu0 0
    %2549 = vmatpush1.bf16.msra.mxu0 0
    %2550 = vmatprep.subr.bf16.mxu0 0
    %2551 = vmatpush1.bf16.msra.mxu0 0
    %2552 = vmatprep.subr.bf16.mxu0 0
    %2553 = vmatpush1.bf16.msra.mxu0 0
    %2554 = vmatprep.subr.bf16.mxu0 0
    %2555 = vmatpush1.bf16.msra.mxu0 0
    %2556 = vmatprep.subr.bf16.mxu0 0
    %2557 = vmatpush1.bf16.msra.mxu0 0
    %2558 = vmatprep.subr.bf16.mxu0 %v2446
    %2559 = vmatpush1.bf16.msra.mxu0 %v2445
    %2560 = vmatprep.subr.bf16.mxu0 %v2434
    %2561 = vmatpush1.bf16.msra.mxu0 %v2433
    %2562 = vmatprep.subr.bf16.mxu0 0
    %2563 = vmatpush2.bf16.msra.mxu0 0
    %2564 = vmatprep.subr.bf16.mxu0 0
    %2565 = vmatpush2.bf16.msra.mxu0 0
    %2566 = vmatprep.subr.bf16.mxu0 0
    %2567 = vmatpush2.bf16.msra.mxu0 0
    %2568 = vmatprep.subr.bf16.mxu0 0
    %2569 = vmatpush2.bf16.msra.mxu0 0
    %2570 = vmatprep.subr.bf16.mxu0 0
    %2571 = vmatpush2.bf16.msra.mxu0 0
    %2572 = vmatprep.subr.bf16.mxu0 0
    %2573 = vmatpush2.bf16.msra.mxu0 0
    %2574 = vmatprep.subr.bf16.mxu0 0
    %2575 = vmatpush2.bf16.msra.mxu0 0
    %2576 = vmatprep.subr.bf16.mxu0 0
    %2577 = vmatpush2.bf16.msra.mxu0 0
    %2578 = vmatprep.mubr.bf16.mxu0 0
    %2579 = vmatmul.mubr.bf16.gmra.mxu0 %v2544
    %v2580 = vpop.f32.mrf.mxu0
    %v2581 = vadd.f32 %v2486, %v2580
    %v2582 = vpop.f32.mrf.mxu0
    %v2583 = vadd.f32 %v2490, %v2582
    %v2584 = vpop.f32.mrf.mxu0
    %v2585 = vpop.f32.mrf.mxu0
    %2586 = vdwg.mxu0
    %2587 = vmatprep.subr.bf16.mxu0 0
    %2588 = vmatpush1.bf16.msra.mxu0 0
    %2589 = vmatprep.subr.bf16.mxu0 0
    %2590 = vmatpush1.bf16.msra.mxu0 0
    %2591 = vmatprep.subr.bf16.mxu0 0
    %2592 = vmatpush1.bf16.msra.mxu0 0
    %2593 = vmatprep.subr.bf16.mxu0 0
    %2594 = vmatpush1.bf16.msra.mxu0 0
    %2595 = vmatprep.subr.bf16.mxu0 0
    %2596 = vmatpush1.bf16.msra.mxu0 0
    %2597 = vmatprep.subr.bf16.mxu0 0
    %2598 = vmatpush1.bf16.msra.mxu0 0
    %2599 = vmatprep.subr.bf16.mxu0 %v2448
    %2600 = vmatpush1.bf16.msra.mxu0 %v2447
    %2601 = vmatprep.subr.bf16.mxu0 %v2436
    %2602 = vmatpush1.bf16.msra.mxu0 %v2435
    %2603 = vmatprep.subr.bf16.mxu0 0
    %2604 = vmatpush2.bf16.msra.mxu0 0
    %2605 = vmatprep.subr.bf16.mxu0 0
    %2606 = vmatpush2.bf16.msra.mxu0 0
    %2607 = vmatprep.subr.bf16.mxu0 0
    %2608 = vmatpush2.bf16.msra.mxu0 0
    %2609 = vmatprep.subr.bf16.mxu0 0
    %2610 = vmatpush2.bf16.msra.mxu0 0
    %2611 = vmatprep.subr.bf16.mxu0 0
    %2612 = vmatpush2.bf16.msra.mxu0 0
    %2613 = vmatprep.subr.bf16.mxu0 0
    %2614 = vmatpush2.bf16.msra.mxu0 0
    %2615 = vmatprep.subr.bf16.mxu0 0
    %2616 = vmatpush2.bf16.msra.mxu0 0
    %2617 = vmatprep.subr.bf16.mxu0 0
    %2618 = vmatpush2.bf16.msra.mxu0 0
    %2619 = vmatprep.mubr.bf16.mxu0 0
    %2620 = vmatmul.mubr.bf16.gmra.mxu0 %v2544
    %v2621 = vpop.f32.mrf.mxu0
    %v2622 = vadd.f32 %v2494, %v2621
    %v2623 = vpop.f32.mrf.mxu0
    %v2624 = vadd.f32 %v2498, %v2623
    %v2625 = vpop.f32.mrf.mxu0
    %v2626 = vpop.f32.mrf.mxu0
    %2627 = vdwg.mxu0
    %2628 = vmatprep.subr.bf16.mxu0 0
    %2629 = vmatpush1.bf16.msra.mxu0 0
    %2630 = vmatprep.subr.bf16.mxu0 0
    %2631 = vmatpush1.bf16.msra.mxu0 0
    %2632 = vmatprep.subr.bf16.mxu0 0
    %2633 = vmatpush1.bf16.msra.mxu0 0
    %2634 = vmatprep.subr.bf16.mxu0 0
    %2635 = vmatpush1.bf16.msra.mxu0 0
    %2636 = vmatprep.subr.bf16.mxu0 0
    %2637 = vmatpush1.bf16.msra.mxu0 0
    %2638 = vmatprep.subr.bf16.mxu0 0
    %2639 = vmatpush1.bf16.msra.mxu0 0
    %2640 = vmatprep.subr.bf16.mxu0 %v2450
    %2641 = vmatpush1.bf16.msra.mxu0 %v2449
    %2642 = vmatprep.subr.bf16.mxu0 %v2438
    %2643 = vmatpush1.bf16.msra.mxu0 %v2437
    %2644 = vmatprep.subr.bf16.mxu0 0
    %2645 = vmatpush2.bf16.msra.mxu0 0
    %2646 = vmatprep.subr.bf16.mxu0 0
    %2647 = vmatpush2.bf16.msra.mxu0 0
    %2648 = vmatprep.subr.bf16.mxu0 0
    %2649 = vmatpush2.bf16.msra.mxu0 0
    %2650 = vmatprep.subr.bf16.mxu0 0
    %2651 = vmatpush2.bf16.msra.mxu0 0
    %2652 = vmatprep.subr.bf16.mxu0 0
    %2653 = vmatpush2.bf16.msra.mxu0 0
    %2654 = vmatprep.subr.bf16.mxu0 0
    %2655 = vmatpush2.bf16.msra.mxu0 0
    %2656 = vmatprep.subr.bf16.mxu0 0
    %2657 = vmatpush2.bf16.msra.mxu0 0
    %2658 = vmatprep.subr.bf16.mxu0 0
    %2659 = vmatpush2.bf16.msra.mxu0 0
    %2660 = vmatprep.mubr.bf16.mxu0 0
    %2661 = vmatmul.mubr.bf16.gmra.mxu0 %v2544
    %v2662 = vpop.f32.mrf.mxu0
    %v2663 = vadd.f32 %v2502, %v2662
    %v2664 = vpop.f32.mrf.mxu0
    %v2665 = vadd.f32 %v2506, %v2664
    %v2666 = vpop.f32.mrf.mxu0
    %v2667 = vpop.f32.mrf.mxu0
    %2668 = vdwg.mxu0
    %2669 = vmatprep.subr.bf16.mxu0 0
    %2670 = vmatpush1.bf16.msra.mxu0 0
    %2671 = vmatprep.subr.bf16.mxu0 0
    %2672 = vmatpush1.bf16.msra.mxu0 0
    %2673 = vmatprep.subr.bf16.mxu0 0
    %2674 = vmatpush1.bf16.msra.mxu0 0
    %2675 = vmatprep.subr.bf16.mxu0 0
    %2676 = vmatpush1.bf16.msra.mxu0 0
    %2677 = vmatprep.subr.bf16.mxu0 0
    %2678 = vmatpush1.bf16.msra.mxu0 0
    %2679 = vmatprep.subr.bf16.mxu0 0
    %2680 = vmatpush1.bf16.msra.mxu0 0
    %2681 = vmatprep.subr.bf16.mxu0 %v2452
    %2682 = vmatpush1.bf16.msra.mxu0 %v2451
    %2683 = vmatprep.subr.bf16.mxu0 %v2440
    %2684 = vmatpush1.bf16.msra.mxu0 %v2439
    %2685 = vmatprep.subr.bf16.mxu0 0
    %2686 = vmatpush2.bf16.msra.mxu0 0
    %2687 = vmatprep.subr.bf16.mxu0 0
    %2688 = vmatpush2.bf16.msra.mxu0 0
    %2689 = vmatprep.subr.bf16.mxu0 0
    %2690 = vmatpush2.bf16.msra.mxu0 0
    %2691 = vmatprep.subr.bf16.mxu0 0
    %2692 = vmatpush2.bf16.msra.mxu0 0
    %2693 = vmatprep.subr.bf16.mxu0 0
    %2694 = vmatpush2.bf16.msra.mxu0 0
    %2695 = vmatprep.subr.bf16.mxu0 0
    %2696 = vmatpush2.bf16.msra.mxu0 0
    %2697 = vmatprep.subr.bf16.mxu0 0
    %2698 = vmatpush2.bf16.msra.mxu0 0
    %2699 = vmatprep.subr.bf16.mxu0 0
    %2700 = vmatpush2.bf16.msra.mxu0 0
    %2701 = vmatprep.mubr.bf16.mxu0 0
    %2702 = vmatmul.mubr.bf16.gmra.mxu0 %v2544
    %v2703 = vpop.f32.mrf.mxu0
    %v2704 = vadd.f32 %v2510, %v2703
    %v2705 = vpop.f32.mrf.mxu0
    %v2706 = vadd.f32 %v2514, %v2705
    %v2707 = vpop.f32.mrf.mxu0
    %v2708 = vpop.f32.mrf.mxu0
    %2709 = vdwg.mxu0
    %2710 = vmatprep.subr.bf16.mxu0 0
    %2711 = vmatpush1.bf16.msra.mxu0 0
    %2712 = vmatprep.subr.bf16.mxu0 0
    %2713 = vmatpush1.bf16.msra.mxu0 0
    %2714 = vmatprep.subr.bf16.mxu0 0
    %2715 = vmatpush1.bf16.msra.mxu0 0
    %2716 = vmatprep.subr.bf16.mxu0 0
    %2717 = vmatpush1.bf16.msra.mxu0 0
    %2718 = vmatprep.subr.bf16.mxu0 0
    %2719 = vmatpush1.bf16.msra.mxu0 0
    %2720 = vmatprep.subr.bf16.mxu0 0
    %2721 = vmatpush1.bf16.msra.mxu0 0
    %2722 = vmatprep.subr.bf16.mxu0 %v2454
    %2723 = vmatpush1.bf16.msra.mxu0 %v2453
    %2724 = vmatprep.subr.bf16.mxu0 %v2442
    %2725 = vmatpush1.bf16.msra.mxu0 %v2441
    %2726 = vmatprep.subr.bf16.mxu0 0
    %2727 = vmatpush2.bf16.msra.mxu0 0
    %2728 = vmatprep.subr.bf16.mxu0 0
    %2729 = vmatpush2.bf16.msra.mxu0 0
    %2730 = vmatprep.subr.bf16.mxu0 0
    %2731 = vmatpush2.bf16.msra.mxu0 0
    %2732 = vmatprep.subr.bf16.mxu0 0
    %2733 = vmatpush2.bf16.msra.mxu0 0
    %2734 = vmatprep.subr.bf16.mxu0 0
    %2735 = vmatpush2.bf16.msra.mxu0 0
    %2736 = vmatprep.subr.bf16.mxu0 0
    %2737 = vmatpush2.bf16.msra.mxu0 0
    %2738 = vmatprep.subr.bf16.mxu0 0
    %2739 = vmatpush2.bf16.msra.mxu0 0
    %2740 = vmatprep.subr.bf16.mxu0 0
    %2741 = vmatpush2.bf16.msra.mxu0 0
    %2742 = vmatprep.mubr.bf16.mxu0 0
    %2743 = vmatmul.mubr.bf16.gmra.mxu0 %v2544
    %v2744 = vpop.f32.mrf.mxu0
    %v2745 = vadd.f32 %v2518, %v2744
    %v2746 = vpop.f32.mrf.mxu0
    %v2747 = vadd.f32 %v2522, %v2746
    %v2748 = vpop.f32.mrf.mxu0
    %v2749 = vpop.f32.mrf.mxu0
    %2750 = vdwg.mxu0
    %2751 = vmatprep.subr.bf16.mxu0 0
    %2752 = vmatpush1.bf16.msra.mxu0 0
    %2753 = vmatprep.subr.bf16.mxu0 0
    %2754 = vmatpush1.bf16.msra.mxu0 0
    %2755 = vmatprep.subr.bf16.mxu0 0
    %2756 = vmatpush1.bf16.msra.mxu0 0
    %2757 = vmatprep.subr.bf16.mxu0 0
    %2758 = vmatpush1.bf16.msra.mxu0 0
    %2759 = vmatprep.subr.bf16.mxu0 0
    %2760 = vmatpush1.bf16.msra.mxu0 0
    %2761 = vmatprep.subr.bf16.mxu0 0
    %2762 = vmatpush1.bf16.msra.mxu0 0
    %2763 = vmatprep.subr.bf16.mxu0 %v2456
    %2764 = vmatpush1.bf16.msra.mxu0 %v2455
    %2765 = vmatprep.subr.bf16.mxu0 %v2444
    %2766 = vmatpush1.bf16.msra.mxu0 %v2443
    %2767 = vmatprep.subr.bf16.mxu0 0
    %2768 = vmatpush2.bf16.msra.mxu0 0
    %2769 = vmatprep.subr.bf16.mxu0 0
    %2770 = vmatpush2.bf16.msra.mxu0 0
    %2771 = vmatprep.subr.bf16.mxu0 0
    %2772 = vmatpush2.bf16.msra.mxu0 0
    %2773 = vmatprep.subr.bf16.mxu0 0
    %2774 = vmatpush2.bf16.msra.mxu0 0
    %2775 = vmatprep.subr.bf16.mxu0 0
    %2776 = vmatpush2.bf16.msra.mxu0 0
    %2777 = vmatprep.subr.bf16.mxu0 0
    %2778 = vmatpush2.bf16.msra.mxu0 0
    %2779 = vmatprep.subr.bf16.mxu0 0
    %2780 = vmatpush2.bf16.msra.mxu0 0
    %2781 = vmatprep.subr.bf16.mxu0 0
    %2782 = vmatpush2.bf16.msra.mxu0 0
    %2783 = vmatprep.mubr.bf16.mxu0 0
    %2784 = vmatmul.mubr.bf16.gmra.mxu0 %v2544
    %v2785 = vpop.f32.mrf.mxu0
    %v2786 = vadd.f32 %v2526, %v2785
    %v2787 = vpop.f32.mrf.mxu0
    %v2788 = vadd.f32 %v2530, %v2787
    %v2789 = vpop.f32.mrf.mxu0
    %v2790 = vpop.f32.mrf.mxu0
    %2791 = vdwg.mxu0
    %v2792 = vsel %vm310, %v2321, 0.0
    %2793 = vadd.xlane.f32.xlu0 %v2792
    %v2794 = vpop.xlane.xlu0 %2793
    %v2795 = vsel %vm310, %v2322, 0.0
    %2796 = vadd.xlane.f32.xlu0 %v2795
    %v2797 = vpop.xlane.xlu0 %2796
    %v2798 = vmul.f32 %v2794, %v566
    %v2799 = vmul.f32 %v2797, %v566
    %v2800 = vsub.f32 %v2321, %v2798
    %v2801 = vsub.f32 %v2322, %v2799
    %v2802 = vmul.f32 %v2800, %v2800
    %v2803 = vmul.f32 %v2801, %v2801
    %v2804 = vsel %vm310, %v2802, 0.0
    %2805 = vadd.xlane.f32.xlu0 %v2804
    %v2806 = vpop.xlane.xlu0 %2805
    %v2807 = vsel %vm310, %v2803, 0.0
    %2808 = vadd.xlane.f32.xlu0 %v2807
    %v2809 = vpop.xlane.xlu0 %2808
    %v2810 = vmul.f32 %v2806, %v566
    %v2811 = vmul.f32 %v2809, %v566
    %v2812 = vadd.f32 %v2810, 1e-06
    %v2813 = vadd.f32 %v2811, 1e-06
    %v2814 = vrsqrt.pop %v2812
    %v2815 = vrsqrt.pop %v2813
    %v2816 = vmul.f32 %v2800, %v2814
    %v2817 = vmul.f32 %v2801, %v2815
    %v2818 = vadd.f32 %v2583, 1.0
    %v2819 = vlaneseq
    %v2820 = vshrl.u32 %v2819, 7
    %v2821 = vsub.s32 0, %v2820
    %v2822 = vrot.slane %v2818, %v2821
    %v2823 = vmul.f32 %v2816, %v2822
    %v2824 = vmul.f32 %v2817, %v2822
    %v2825 = vlaneseq
    %v2826 = vshrl.u32 %v2825, 7
    %v2827 = vsub.s32 0, %v2826
    %v2828 = vrot.slane %v2581, %v2827
    %v2829 = vadd.f32 %v2823, %v2828
    %v2830 = vadd.f32 %v2824, %v2828
    %v2831 = vsel %vm310, %v2324, 0.0
    %2832 = vadd.xlane.f32.xlu0 %v2831
    %v2833 = vpop.xlane.xlu0 %2832
    %v2834 = vmul.f32 %v2833, %v566
    %v2835 = vsub.f32 %v2324, %v2834
    %v2836 = vmul.f32 %v2835, %v2835
    %v2837 = vsel %vm310, %v2836, 0.0
    %2838 = vadd.xlane.f32.xlu0 %v2837
    %v2839 = vpop.xlane.xlu0 %2838
    %v2840 = vmul.f32 %v2839, %v566
    %v2841 = vadd.f32 %v2840, 1e-06
    %v2842 = vrsqrt.pop %v2841
    %v2843 = vmul.f32 %v2835, %v2842
    %v2844 = vadd.f32 %v2706, 1.0
    %v2845 = vlaneseq
    %v2846 = vshrl.u32 %v2845, 7
    %v2847 = vsub.s32 0, %v2846
    %v2848 = vrot.slane %v2844, %v2847
    %v2849 = vmul.f32 %v2843, %v2848
    %v2850 = vlaneseq
    %v2851 = vshrl.u32 %v2850, 7
    %v2852 = vsub.s32 0, %v2851
    %v2853 = vrot.slane %v2704, %v2852
    %v2854 = vadd.f32 %v2849, %v2853
    %v2855 = vpack.c.bf16 %v2830, %v2829
    %v2856 = vld [vmem:[#allocation6 + $0x30] sm:$0xff]
    %v2857 = vld [vmem:[#allocation6 + $0x38] sm:$0xff]
    %v2858 = vld [vmem:[#allocation6 + $0x40] sm:$0xff]
    %v2859 = vld [vmem:[#allocation6 + $0x98] sm:$0xff]
    %v2860 = vld [vmem:[#allocation6 + $0xa0] sm:$0xff]
    %v2861 = vld [vmem:[#allocation6 + $0xa8] sm:$0xff]
    %v2862 = vld [vmem:[#allocation6 + $0x100] sm:$0xff]
    %v2863 = vld [vmem:[#allocation6 + $0x108] sm:$0xff]
    %v2864 = vld [vmem:[#allocation6 + $0x110] sm:$0xff]
    %v2865 = vld [vmem:[#allocation6 + $0x168] sm:$0xff]
    %v2866 = vld [vmem:[#allocation6 + $0x170] sm:$0xff]
    %v2867 = vld [vmem:[#allocation6 + $0x178] sm:$0xff]
    %v2868 = vld [vmem:[#allocation9 + $0xc] sm:$0x3f]
    %v2870 = vlaneseq
    %v2871 = vshrl.u32 %v2870, 7
    %v2872 = vsub.s32 0, %v2871
    %v2873 = vrot.slane %v2868, %v2872
    %v2874 = vlaneseq
    %v2875 = vshrl.u32 %v2874, 7
    %v2876 = vsub.s32 1, %v2875
    %v2877 = vrot.slane %v2868, %v2876
    %v2878 = vlaneseq
    %v2879 = vshrl.u32 %v2878, 7
    %v2880 = vsub.s32 2, %v2879
    %v2881 = vrot.slane %v2868, %v2880
    %v2882 = vlaneseq
    %v2883 = vshrl.u32 %v2882, 7
    %v2884 = vsub.s32 3, %v2883
    %v2885 = vrot.slane %v2868, %v2884
    %v2886 = vlaneseq
    %v2887 = vshrl.u32 %v2886, 7
    %v2888 = vsub.s32 4, %v2887
    %v2889 = vrot.slane %v2868, %v2888
    %v2890 = vlaneseq
    %v2891 = vshrl.u32 %v2890, 7
    %v2892 = vsub.s32 5, %v2891
    %v2893 = vrot.slane %v2868, %v2892
    %v2912 = vunpack.c.l.b16 %v2856
    %v2913 = vunpack.c.h.b16 %v2856
    %v2914 = vunpack.c.l.b16 %v2857
    %v2915 = vunpack.c.h.b16 %v2857
    %v2916 = vunpack.c.l.b16 %v2858
    %v2917 = vunpack.c.h.b16 %v2858
    %v2918 = vunpack.c.l.b16 %v2859
    %v2919 = vunpack.c.h.b16 %v2859
    %v2920 = vunpack.c.l.b16 %v2860
    %v2921 = vunpack.c.h.b16 %v2860
    %v2922 = vunpack.c.l.b16 %v2861
    %v2923 = vunpack.c.h.b16 %v2861
    %v2924 = vunpack.c.l.b16 %v2862
    %v2925 = vunpack.c.h.b16 %v2862
    %v2926 = vunpack.c.l.b16 %v2863
    %v2927 = vunpack.c.h.b16 %v2863
    %v2928 = vunpack.c.l.b16 %v2864
    %v2929 = vunpack.c.h.b16 %v2864
    %v2930 = vunpack.c.l.b16 %v2865
    %v2931 = vunpack.c.h.b16 %v2865
    %v2932 = vunpack.c.l.b16 %v2866
    %v2933 = vunpack.c.h.b16 %v2866
    %v2934 = vunpack.c.l.b16 %v2867
    %v2935 = vunpack.c.h.b16 %v2867
    %v2936 = vpack.c.b16 %v2918, %v2912
    %v2937 = vpack.c.b16 %v2919, %v2913
    %v2938 = vpack.c.b16 %v2920, %v2914
    %v2939 = vpack.c.b16 %v2921, %v2915
    %v2940 = vpack.c.b16 %v2922, %v2916
    %v2941 = vpack.c.b16 %v2923, %v2917
    %v2942 = vpack.c.b16 %v2930, %v2924
    %v2943 = vpack.c.b16 %v2931, %v2925
    %v2944 = vpack.c.b16 %v2932, %v2926
    %v2945 = vpack.c.b16 %v2933, %v2927
    %v2946 = vpack.c.b16 %v2934, %v2928
    %v2947 = vpack.c.b16 %v2935, %v2929
    %v2961 = vsel %vm310, %v2855, 0
    %2963 = vmatprep.subr.bf16.mxu0 0
    %2964 = vmatpush1.bf16.msra.mxu0 0
    %2965 = vmatprep.subr.bf16.mxu0 0
    %2966 = vmatpush1.bf16.msra.mxu0 0
    %2967 = vmatprep.subr.bf16.mxu0 0
    %2968 = vmatpush1.bf16.msra.mxu0 0
    %2969 = vmatprep.subr.bf16.mxu0 0
    %2970 = vmatpush1.bf16.msra.mxu0 0
    %2971 = vmatprep.subr.bf16.mxu0 0
    %2972 = vmatpush1.bf16.msra.mxu0 0
    %2973 = vmatprep.subr.bf16.mxu0 0
    %2974 = vmatpush1.bf16.msra.mxu0 0
    %2975 = vmatprep.subr.bf16.mxu0 %v2943
    %2976 = vmatpush1.bf16.msra.mxu0 %v2942
    %2977 = vmatprep.subr.bf16.mxu0 %v2937
    %2978 = vmatpush1.bf16.msra.mxu0 %v2936
    %2979 = vmatprep.subr.bf16.mxu0 0
    %2980 = vmatpush2.bf16.msra.mxu0 0
    %2981 = vmatprep.subr.bf16.mxu0 0
    %2982 = vmatpush2.bf16.msra.mxu0 0
    %2983 = vmatprep.subr.bf16.mxu0 0
    %2984 = vmatpush2.bf16.msra.mxu0 0
    %2985 = vmatprep.subr.bf16.mxu0 0
    %2986 = vmatpush2.bf16.msra.mxu0 0
    %2987 = vmatprep.subr.bf16.mxu0 0
    %2988 = vmatpush2.bf16.msra.mxu0 0
    %2989 = vmatprep.subr.bf16.mxu0 0
    %2990 = vmatpush2.bf16.msra.mxu0 0
    %2991 = vmatprep.subr.bf16.mxu0 0
    %2992 = vmatpush2.bf16.msra.mxu0 0
    %2993 = vmatprep.subr.bf16.mxu0 0
    %2994 = vmatpush2.bf16.msra.mxu0 0
    %2995 = vmatprep.mubr.bf16.mxu0 0
    %2996 = vmatmul.mubr.bf16.gmra.mxu0 %v2961
    %v2997 = vpop.f32.mrf.mxu0
    %v2998 = vadd.f32 %v2873, %v2997
    %v2999 = vpop.f32.mrf.mxu0
    %v3000 = vadd.f32 %v2877, %v2999
    %v3001 = vpop.f32.mrf.mxu0
    %v3002 = vadd.f32 %v2873, %v3001
    %v3003 = vpop.f32.mrf.mxu0
    %v3004 = vadd.f32 %v2877, %v3003
    %3005 = vdwg.mxu0
    %3006 = vmatprep.subr.bf16.mxu0 0
    %3007 = vmatpush1.bf16.msra.mxu0 0
    %3008 = vmatprep.subr.bf16.mxu0 0
    %3009 = vmatpush1.bf16.msra.mxu0 0
    %3010 = vmatprep.subr.bf16.mxu0 0
    %3011 = vmatpush1.bf16.msra.mxu0 0
    %3012 = vmatprep.subr.bf16.mxu0 0
    %3013 = vmatpush1.bf16.msra.mxu0 0
    %3014 = vmatprep.subr.bf16.mxu0 0
    %3015 = vmatpush1.bf16.msra.mxu0 0
    %3016 = vmatprep.subr.bf16.mxu0 0
    %3017 = vmatpush1.bf16.msra.mxu0 0
    %3018 = vmatprep.subr.bf16.mxu0 %v2945
    %3019 = vmatpush1.bf16.msra.mxu0 %v2944
    %3020 = vmatprep.subr.bf16.mxu0 %v2939
    %3021 = vmatpush1.bf16.msra.mxu0 %v2938
    %3022 = vmatprep.subr.bf16.mxu0 0
    %3023 = vmatpush2.bf16.msra.mxu0 0
    %3024 = vmatprep.subr.bf16.mxu0 0
    %3025 = vmatpush2.bf16.msra.mxu0 0
    %3026 = vmatprep.subr.bf16.mxu0 0
    %3027 = vmatpush2.bf16.msra.mxu0 0
    %3028 = vmatprep.subr.bf16.mxu0 0
    %3029 = vmatpush2.bf16.msra.mxu0 0
    %3030 = vmatprep.subr.bf16.mxu0 0
    %3031 = vmatpush2.bf16.msra.mxu0 0
    %3032 = vmatprep.subr.bf16.mxu0 0
    %3033 = vmatpush2.bf16.msra.mxu0 0
    %3034 = vmatprep.subr.bf16.mxu0 0
    %3035 = vmatpush2.bf16.msra.mxu0 0
    %3036 = vmatprep.subr.bf16.mxu0 0
    %3037 = vmatpush2.bf16.msra.mxu0 0
    %3038 = vmatprep.mubr.bf16.mxu0 0
    %3039 = vmatmul.mubr.bf16.gmra.mxu0 %v2961
    %v3040 = vpop.f32.mrf.mxu0
    %v3041 = vadd.f32 %v2881, %v3040
    %v3042 = vpop.f32.mrf.mxu0
    %v3043 = vadd.f32 %v2885, %v3042
    %v3044 = vpop.f32.mrf.mxu0
    %v3045 = vadd.f32 %v2881, %v3044
    %v3046 = vpop.f32.mrf.mxu0
    %v3047 = vadd.f32 %v2885, %v3046
    %3048 = vdwg.mxu0
    %3049 = vmatprep.subr.bf16.mxu0 0
    %3050 = vmatpush1.bf16.msra.mxu0 0
    %3051 = vmatprep.subr.bf16.mxu0 0
    %3052 = vmatpush1.bf16.msra.mxu0 0
    %3053 = vmatprep.subr.bf16.mxu0 0
    %3054 = vmatpush1.bf16.msra.mxu0 0
    %3055 = vmatprep.subr.bf16.mxu0 0
    %3056 = vmatpush1.bf16.msra.mxu0 0
    %3057 = vmatprep.subr.bf16.mxu0 0
    %3058 = vmatpush1.bf16.msra.mxu0 0
    %3059 = vmatprep.subr.bf16.mxu0 0
    %3060 = vmatpush1.bf16.msra.mxu0 0
    %3061 = vmatprep.subr.bf16.mxu0 %v2947
    %3062 = vmatpush1.bf16.msra.mxu0 %v2946
    %3063 = vmatprep.subr.bf16.mxu0 %v2941
    %3064 = vmatpush1.bf16.msra.mxu0 %v2940
    %3065 = vmatprep.subr.bf16.mxu0 0
    %3066 = vmatpush2.bf16.msra.mxu0 0
    %3067 = vmatprep.subr.bf16.mxu0 0
    %3068 = vmatpush2.bf16.msra.mxu0 0
    %3069 = vmatprep.subr.bf16.mxu0 0
    %3070 = vmatpush2.bf16.msra.mxu0 0
    %3071 = vmatprep.subr.bf16.mxu0 0
    %3072 = vmatpush2.bf16.msra.mxu0 0
    %3073 = vmatprep.subr.bf16.mxu0 0
    %3074 = vmatpush2.bf16.msra.mxu0 0
    %3075 = vmatprep.subr.bf16.mxu0 0
    %3076 = vmatpush2.bf16.msra.mxu0 0
    %3077 = vmatprep.subr.bf16.mxu0 0
    %3078 = vmatpush2.bf16.msra.mxu0 0
    %3079 = vmatprep.subr.bf16.mxu0 0
    %3080 = vmatpush2.bf16.msra.mxu0 0
    %3081 = vmatprep.mubr.bf16.mxu0 0
    %3082 = vmatmul.mubr.bf16.gmra.mxu0 %v2961
    %v3083 = vpop.f32.mrf.mxu0
    %v3084 = vadd.f32 %v2889, %v3083
    %v3085 = vpop.f32.mrf.mxu0
    %v3086 = vadd.f32 %v2893, %v3085
    %v3087 = vpop.f32.mrf.mxu0
    %v3088 = vadd.f32 %v2889, %v3087
    %v3089 = vpop.f32.mrf.mxu0
    %v3090 = vadd.f32 %v2893, %v3089
    %3091 = vdwg.mxu0
    %v3092 = vpack.c.bf16 %v2854, %v2854
    %v3093 = vld [vmem:[#allocation6 + $0x48] sm:$0xff]
    %v3094 = vld [vmem:[#allocation6 + $0x50] sm:$0xff]
    %v3095 = vld [vmem:[#allocation6 + $0x58] sm:$0xff]
    %v3096 = vld [vmem:[#allocation6 + $0xb0] sm:$0xff]
    %v3097 = vld [vmem:[#allocation6 + $0xb8] sm:$0xff]
    %v3098 = vld [vmem:[#allocation6 + $0xc0] sm:$0xff]
    %v3099 = vld [vmem:[#allocation6 + $0x118] sm:$0xff]
    %v3100 = vld [vmem:[#allocation6 + $0x120] sm:$0xff]
    %v3101 = vld [vmem:[#allocation6 + $0x128] sm:$0xff]
    %v3102 = vld [vmem:[#allocation6 + $0x180] sm:$0xff]
    %v3103 = vld [vmem:[#allocation6 + $0x188] sm:$0xff]
    %v3104 = vld [vmem:[#allocation6 + $0x190] sm:$0xff]
    %v3105 = vld [vmem:[#allocation9 + $0x12] sm:$0x3f]
    %v3107 = vlaneseq
    %v3108 = vshrl.u32 %v3107, 7
    %v3109 = vsub.s32 0, %v3108
    %v3110 = vrot.slane %v3105, %v3109
    %v3111 = vlaneseq
    %v3112 = vshrl.u32 %v3111, 7
    %v3113 = vsub.s32 1, %v3112
    %v3114 = vrot.slane %v3105, %v3113
    %v3115 = vlaneseq
    %v3116 = vshrl.u32 %v3115, 7
    %v3117 = vsub.s32 2, %v3116
    %v3118 = vrot.slane %v3105, %v3117
    %v3119 = vlaneseq
    %v3120 = vshrl.u32 %v3119, 7
    %v3121 = vsub.s32 3, %v3120
    %v3122 = vrot.slane %v3105, %v3121
    %v3123 = vlaneseq
    %v3124 = vshrl.u32 %v3123, 7
    %v3125 = vsub.s32 4, %v3124
    %v3126 = vrot.slane %v3105, %v3125
    %v3127 = vlaneseq
    %v3128 = vshrl.u32 %v3127, 7
    %v3129 = vsub.s32 5, %v3128
    %v3130 = vrot.slane %v3105, %v3129
    %v3149 = vunpack.c.l.b16 %v3093
    %v3150 = vunpack.c.h.b16 %v3093
    %v3151 = vunpack.c.l.b16 %v3094
    %v3152 = vunpack.c.h.b16 %v3094
    %v3153 = vunpack.c.l.b16 %v3095
    %v3154 = vunpack.c.h.b16 %v3095
    %v3155 = vunpack.c.l.b16 %v3096
    %v3156 = vunpack.c.h.b16 %v3096
    %v3157 = vunpack.c.l.b16 %v3097
    %v3158 = vunpack.c.h.b16 %v3097
    %v3159 = vunpack.c.l.b16 %v3098
    %v3160 = vunpack.c.h.b16 %v3098
    %v3161 = vunpack.c.l.b16 %v3099
    %v3162 = vunpack.c.h.b16 %v3099
    %v3163 = vunpack.c.l.b16 %v3100
    %v3164 = vunpack.c.h.b16 %v3100
    %v3165 = vunpack.c.l.b16 %v3101
    %v3166 = vunpack.c.h.b16 %v3101
    %v3167 = vunpack.c.l.b16 %v3102
    %v3168 = vunpack.c.h.b16 %v3102
    %v3169 = vunpack.c.l.b16 %v3103
    %v3170 = vunpack.c.h.b16 %v3103
    %v3171 = vunpack.c.l.b16 %v3104
    %v3172 = vunpack.c.h.b16 %v3104
    %v3173 = vpack.c.b16 %v3155, %v3149
    %v3174 = vpack.c.b16 %v3156, %v3150
    %v3175 = vpack.c.b16 %v3157, %v3151
    %v3176 = vpack.c.b16 %v3158, %v3152
    %v3177 = vpack.c.b16 %v3159, %v3153
    %v3178 = vpack.c.b16 %v3160, %v3154
    %v3179 = vpack.c.b16 %v3167, %v3161
    %v3180 = vpack.c.b16 %v3168, %v3162
    %v3181 = vpack.c.b16 %v3169, %v3163
    %v3182 = vpack.c.b16 %v3170, %v3164
    %v3183 = vpack.c.b16 %v3171, %v3165
    %v3184 = vpack.c.b16 %v3172, %v3166
    %v3198 = vsel %vm310, %v3092, 0
    %3200 = vmatprep.subr.bf16.mxu0 0
    %3201 = vmatpush1.bf16.msra.mxu0 0
    %3202 = vmatprep.subr.bf16.mxu0 0
    %3203 = vmatpush1.bf16.msra.mxu0 0
    %3204 = vmatprep.subr.bf16.mxu0 0
    %3205 = vmatpush1.bf16.msra.mxu0 0
    %3206 = vmatprep.subr.bf16.mxu0 0
    %3207 = vmatpush1.bf16.msra.mxu0 0
    %3208 = vmatprep.subr.bf16.mxu0 0
    %3209 = vmatpush1.bf16.msra.mxu0 0
    %3210 = vmatprep.subr.bf16.mxu0 0
    %3211 = vmatpush1.bf16.msra.mxu0 0
    %3212 = vmatprep.subr.bf16.mxu0 %v3180
    %3213 = vmatpush1.bf16.msra.mxu0 %v3179
    %3214 = vmatprep.subr.bf16.mxu0 %v3174
    %3215 = vmatpush1.bf16.msra.mxu0 %v3173
    %3216 = vmatprep.subr.bf16.mxu0 0
    %3217 = vmatpush2.bf16.msra.mxu0 0
    %3218 = vmatprep.subr.bf16.mxu0 0
    %3219 = vmatpush2.bf16.msra.mxu0 0
    %3220 = vmatprep.subr.bf16.mxu0 0
    %3221 = vmatpush2.bf16.msra.mxu0 0
    %3222 = vmatprep.subr.bf16.mxu0 0
    %3223 = vmatpush2.bf16.msra.mxu0 0
    %3224 = vmatprep.subr.bf16.mxu0 0
    %3225 = vmatpush2.bf16.msra.mxu0 0
    %3226 = vmatprep.subr.bf16.mxu0 0
    %3227 = vmatpush2.bf16.msra.mxu0 0
    %3228 = vmatprep.subr.bf16.mxu0 0
    %3229 = vmatpush2.bf16.msra.mxu0 0
    %3230 = vmatprep.subr.bf16.mxu0 0
    %3231 = vmatpush2.bf16.msra.mxu0 0
    %3232 = vmatprep.mubr.bf16.mxu0 0
    %3233 = vmatmul.mubr.bf16.gmra.mxu0 %v3198
    %v3234 = vpop.f32.mrf.mxu0
    %v3235 = vadd.f32 %v3110, %v3234
    %v3236 = vpop.f32.mrf.mxu0
    %v3237 = vadd.f32 %v3114, %v3236
    %v3238 = vpop.f32.mrf.mxu0
    %v3239 = vpop.f32.mrf.mxu0
    %3240 = vdwg.mxu0
    %3241 = vmatprep.subr.bf16.mxu0 0
    %3242 = vmatpush1.bf16.msra.mxu0 0
    %3243 = vmatprep.subr.bf16.mxu0 0
    %3244 = vmatpush1.bf16.msra.mxu0 0
    %3245 = vmatprep.subr.bf16.mxu0 0
    %3246 = vmatpush1.bf16.msra.mxu0 0
    %3247 = vmatprep.subr.bf16.mxu0 0
    %3248 = vmatpush1.bf16.msra.mxu0 0
    %3249 = vmatprep.subr.bf16.mxu0 0
    %3250 = vmatpush1.bf16.msra.mxu0 0
    %3251 = vmatprep.subr.bf16.mxu0 0
    %3252 = vmatpush1.bf16.msra.mxu0 0
    %3253 = vmatprep.subr.bf16.mxu0 %v3182
    %3254 = vmatpush1.bf16.msra.mxu0 %v3181
    %3255 = vmatprep.subr.bf16.mxu0 %v3176
    %3256 = vmatpush1.bf16.msra.mxu0 %v3175
    %3257 = vmatprep.subr.bf16.mxu0 0
    %3258 = vmatpush2.bf16.msra.mxu0 0
    %3259 = vmatprep.subr.bf16.mxu0 0
    %3260 = vmatpush2.bf16.msra.mxu0 0
    %3261 = vmatprep.subr.bf16.mxu0 0
    %3262 = vmatpush2.bf16.msra.mxu0 0
    %3263 = vmatprep.subr.bf16.mxu0 0
    %3264 = vmatpush2.bf16.msra.mxu0 0
    %3265 = vmatprep.subr.bf16.mxu0 0
    %3266 = vmatpush2.bf16.msra.mxu0 0
    %3267 = vmatprep.subr.bf16.mxu0 0
    %3268 = vmatpush2.bf16.msra.mxu0 0
    %3269 = vmatprep.subr.bf16.mxu0 0
    %3270 = vmatpush2.bf16.msra.mxu0 0
    %3271 = vmatprep.subr.bf16.mxu0 0
    %3272 = vmatpush2.bf16.msra.mxu0 0
    %3273 = vmatprep.mubr.bf16.mxu0 0
    %3274 = vmatmul.mubr.bf16.gmra.mxu0 %v3198
    %v3275 = vpop.f32.mrf.mxu0
    %v3276 = vadd.f32 %v3118, %v3275
    %v3277 = vpop.f32.mrf.mxu0
    %v3278 = vadd.f32 %v3122, %v3277
    %v3279 = vpop.f32.mrf.mxu0
    %v3280 = vpop.f32.mrf.mxu0
    %3281 = vdwg.mxu0
    %3282 = vmatprep.subr.bf16.mxu0 0
    %3283 = vmatpush1.bf16.msra.mxu0 0
    %3284 = vmatprep.subr.bf16.mxu0 0
    %3285 = vmatpush1.bf16.msra.mxu0 0
    %3286 = vmatprep.subr.bf16.mxu0 0
    %3287 = vmatpush1.bf16.msra.mxu0 0
    %3288 = vmatprep.subr.bf16.mxu0 0
    %3289 = vmatpush1.bf16.msra.mxu0 0
    %3290 = vmatprep.subr.bf16.mxu0 0
    %3291 = vmatpush1.bf16.msra.mxu0 0
    %3292 = vmatprep.subr.bf16.mxu0 0
    %3293 = vmatpush1.bf16.msra.mxu0 0
    %3294 = vmatprep.subr.bf16.mxu0 %v3184
    %3295 = vmatpush1.bf16.msra.mxu0 %v3183
    %3296 = vmatprep.subr.bf16.mxu0 %v3178
    %3297 = vmatpush1.bf16.msra.mxu0 %v3177
    %3298 = vmatprep.subr.bf16.mxu0 0
    %3299 = vmatpush2.bf16.msra.mxu0 0
    %3300 = vmatprep.subr.bf16.mxu0 0
    %3301 = vmatpush2.bf16.msra.mxu0 0
    %3302 = vmatprep.subr.bf16.mxu0 0
    %3303 = vmatpush2.bf16.msra.mxu0 0
    %3304 = vmatprep.subr.bf16.mxu0 0
    %3305 = vmatpush2.bf16.msra.mxu0 0
    %3306 = vmatprep.subr.bf16.mxu0 0
    %3307 = vmatpush2.bf16.msra.mxu0 0
    %3308 = vmatprep.subr.bf16.mxu0 0
    %3309 = vmatpush2.bf16.msra.mxu0 0
    %3310 = vmatprep.subr.bf16.mxu0 0
    %3311 = vmatpush2.bf16.msra.mxu0 0
    %3312 = vmatprep.subr.bf16.mxu0 0
    %3313 = vmatpush2.bf16.msra.mxu0 0
    %3314 = vmatprep.mubr.bf16.mxu0 0
    %3315 = vmatmul.mubr.bf16.gmra.mxu0 %v3198
    %v3316 = vpop.f32.mrf.mxu0
    %v3317 = vadd.f32 %v3126, %v3316
    %v3318 = vpop.f32.mrf.mxu0
    %v3319 = vadd.f32 %v3130, %v3318
    %v3320 = vpop.f32.mrf.mxu0
    %v3321 = vpop.f32.mrf.mxu0
    %3322 = vdwg.mxu0
    %v3323 = vpack.c.bf16 %v3002, %v2998
    %v3324 = vpack.c.bf16 %v3235, %v3235
    %v3325 = vpack.c.bf16 %v3004, %v3000
    %v3326 = vpack.c.bf16 %v3237, %v3237
    %3327 = vmatprep.subr.bf16.mxu0 0
    %3328 = vmatpush1.bf16.xpose.msra.mxu0 0
    %3329 = vmatprep.subr.bf16.mxu0 0
    %3330 = vmatpush1.bf16.xpose.msra.mxu0 0
    %3331 = vmatprep.subr.bf16.mxu0 0
    %3332 = vmatpush1.bf16.xpose.msra.mxu0 0
    %3333 = vmatprep.subr.bf16.mxu0 0
    %3334 = vmatpush1.bf16.xpose.msra.mxu0 0
    %3335 = vmatprep.subr.bf16.mxu0 0
    %3336 = vmatpush1.bf16.xpose.msra.mxu0 0
    %3337 = vmatprep.subr.bf16.mxu0 0
    %3338 = vmatpush1.bf16.xpose.msra.mxu0 0
    %3339 = vmatprep.subr.bf16.mxu0 0
    %3340 = vmatpush1.bf16.xpose.msra.mxu0 %v3326
    %3341 = vmatprep.subr.bf16.mxu0 0
    %3342 = vmatpush1.bf16.xpose.msra.mxu0 %v3325
    %3343 = vmatprep.subr.bf16.mxu0 0
    %3344 = vmatpush2.bf16.xpose.msra.mxu0 0
    %3345 = vmatprep.subr.bf16.mxu0 0
    %3346 = vmatpush2.bf16.xpose.msra.mxu0 0
    %3347 = vmatprep.subr.bf16.mxu0 0
    %3348 = vmatpush2.bf16.xpose.msra.mxu0 0
    %3349 = vmatprep.subr.bf16.mxu0 0
    %3350 = vmatpush2.bf16.xpose.msra.mxu0 0
    %3351 = vmatprep.subr.bf16.mxu0 0
    %3352 = vmatpush2.bf16.xpose.msra.mxu0 0
    %3353 = vmatprep.subr.bf16.mxu0 0
    %3354 = vmatpush2.bf16.xpose.msra.mxu0 0
    %3355 = vmatprep.subr.bf16.mxu0 0
    %3356 = vmatpush2.bf16.xpose.msra.mxu0 0
    %3357 = vmatprep.subr.bf16.mxu0 0
    %3358 = vmatpush2.bf16.xpose.msra.mxu0 0
    %3359 = vmatprep.mubr.bf16.mxu0 0
    %3360 = vmatmul.mubr.bf16.gmra.mxu0 %v3323
    %v3361 = vpop.f32.mrf.mxu0
    %v3362 = vadd.f32 0.0, %v3361
    %v3363 = vpop.f32.mrf.mxu0
    %v3364 = vpop.f32.mrf.mxu0
    %v3365 = vadd.f32 0.0, %v3364
    %v3366 = vpop.f32.mrf.mxu0
    %3367 = vmatprep.mubr.bf16.mxu0 0
    %3368 = vmatmul.mubr.bf16.gmra.mxu0 %v3324
    %v3369 = vpop.f32.mrf.mxu0
    %v3370 = vadd.f32 0.0, %v3369
    %v3371 = vpop.f32.mrf.mxu0
    %v3372 = vpop.f32.mrf.mxu0
    %v3373 = vpop.f32.mrf.mxu0
    %3374 = vdwg.mxu0
    %v3375 = vsel %vm1144, %v3362, -inf
    %3376 = vmax.xlane.f32.xlu0 %v3375
    %v3377 = vpop.xlane.xlu0 %3376
    %v3378 = vsel %vm1144, %v3365, -inf
    %3379 = vmax.xlane.f32.xlu0 %v3378
    %v3380 = vpop.xlane.xlu0 %3379
    %v3381 = vsel %vm1144, %v3370, -inf
    %3382 = vmax.xlane.f32.xlu0 %v3381
    %v3383 = vpop.xlane.xlu0 %3382
    %v3384 = vsub.f32 %v3362, %v3377
    %v3385 = vsub.f32 %v3365, %v3380
    %v3386 = vsub.f32 %v3370, %v3383
    %v3387 = vmul.f32 %v3384, 1.442695
    %v3388 = vpow.pop %v3387
    %v3389 = vmul.f32 %v3385, 1.442695
    %v3390 = vpow.pop %v3389
    %v3391 = vmul.f32 %v3386, 1.442695
    %v3392 = vpow.pop %v3391
    %v3393 = vsel %vm1144, %v3388, 0.0
    %3394 = vadd.xlane.f32.xlu0 %v3393
    %v3395 = vpop.xlane.xlu0 %3394
    %v3396 = vsel %vm1144, %v3390, 0.0
    %3397 = vadd.xlane.f32.xlu0 %v3396
    %v3398 = vpop.xlane.xlu0 %3397
    %v3399 = vsel %vm1144, %v3392, 0.0
    %3400 = vadd.xlane.f32.xlu0 %v3399
    %v3401 = vpop.xlane.xlu0 %3400
    %v3402 = vrcp.pop %v3395
    %v3403 = vrcp.pop %v3398
    %v3404 = vrcp.pop %v3401
    %v3405 = vmul.f32 %v3388, %v3402
    %v3406 = vmul.f32 %v3390, %v3403
    %v3407 = vmul.f32 %v3392, %v3404
    %v3408 = vpack.c.bf16 %v3406, %v3405
    %v3409 = vpack.c.bf16 %v3407, %v3407
    %v3410 = vpack.c.bf16 %v3045, %v3041
    %v3411 = vpack.c.bf16 %v3276, %v3276
    %v3413 = vsel %vm1144, %v3408, 0
    %v3416 = vsel %vm1144, %v3409, 0
    %v3419 = vsel %vm1188, %v3411, 0
    %3421 = vmatprep.subr.bf16.mxu0 0
    %3422 = vmatpush1.bf16.msra.mxu0 0
    %3423 = vmatprep.subr.bf16.mxu0 0
    %3424 = vmatpush1.bf16.msra.mxu0 0
    %3425 = vmatprep.subr.bf16.mxu0 0
    %3426 = vmatpush1.bf16.msra.mxu0 0
    %3427 = vmatprep.subr.bf16.mxu0 0
    %3428 = vmatpush1.bf16.msra.mxu0 0
    %3429 = vmatprep.subr.bf16.mxu0 0
    %3430 = vmatpush1.bf16.msra.mxu0 0
    %3431 = vmatprep.subr.bf16.mxu0 0
    %3432 = vmatpush1.bf16.msra.mxu0 0
    %3433 = vmatprep.subr.bf16.mxu0 0
    %3434 = vmatpush1.bf16.msra.mxu0 %v3419
    %3435 = vmatprep.subr.bf16.mxu0 0
    %3436 = vmatpush1.bf16.msra.mxu0 %v3410
    %3437 = vmatprep.subr.bf16.mxu0 0
    %3438 = vmatpush2.bf16.msra.mxu0 0
    %3439 = vmatprep.subr.bf16.mxu0 0
    %3440 = vmatpush2.bf16.msra.mxu0 0
    %3441 = vmatprep.subr.bf16.mxu0 0
    %3442 = vmatpush2.bf16.msra.mxu0 0
    %3443 = vmatprep.subr.bf16.mxu0 0
    %3444 = vmatpush2.bf16.msra.mxu0 0
    %3445 = vmatprep.subr.bf16.mxu0 0
    %3446 = vmatpush2.bf16.msra.mxu0 0
    %3447 = vmatprep.subr.bf16.mxu0 0
    %3448 = vmatpush2.bf16.msra.mxu0 0
    %3449 = vmatprep.subr.bf16.mxu0 0
    %3450 = vmatpush2.bf16.msra.mxu0 0
    %3451 = vmatprep.subr.bf16.mxu0 0
    %3452 = vmatpush2.bf16.msra.mxu0 0
    %3453 = vmatprep.mubr.bf16.mxu0 0
    %3454 = vmatmul.mubr.bf16.gmra.mxu0 %v3413
    %v3455 = vpop.f32.mrf.mxu0
    %v3456 = vadd.f32 0.0, %v3455
    %v3457 = vpop.f32.mrf.mxu0
    %v3458 = vpop.f32.mrf.mxu0
    %v3459 = vadd.f32 0.0, %v3458
    %v3460 = vpop.f32.mrf.mxu0
    %3461 = vmatprep.mubr.bf16.mxu0 0
    %3462 = vmatmul.mubr.bf16.gmra.mxu0 %v3416
    %v3463 = vpop.f32.mrf.mxu0
    %v3464 = vadd.f32 0.0, %v3463
    %v3465 = vpop.f32.mrf.mxu0
    %v3466 = vpop.f32.mrf.mxu0
    %v3467 = vpop.f32.mrf.mxu0
    %3468 = vdwg.mxu0
    %v3469 = vpack.c.bf16 %v3459, %v3456
    %v3470 = vld [vmem:[#allocation7 + $0x8] sm:$0xf]
    %v3471 = vld [vmem:[#allocation7 + $0x20] sm:$0xf]
    %v3472 = vld [vmem:[#allocation7 + $0x38] sm:$0xf]
    %v3473 = vld [vmem:[#allocation7 + $0x50] sm:$0xf]
    %v3474 = vld [vmem:[#allocation7 + $0x68] sm:$0xf]
    %v3475 = vld [vmem:[#allocation7 + $0x80] sm:$0xf]
    %v3476 = vld [vmem:[#allocation7 + $0x98] sm:$0xf]
    %v3477 = vld [vmem:[#allocation7 + $0xb0] sm:$0xf]
    %v3478 = vld [vmem:[#allocation7 + $0xc8] sm:$0xf]
    %v3479 = vld [vmem:[#allocation7 + $0xe0] sm:$0xf]
    %v3480 = vld [vmem:[#allocation7 + $0xf8] sm:$0xf]
    %v3481 = vld [vmem:[#allocation7 + $0x110] sm:$0xf]
    %v3482 = vld [vmem:[#allocation7 + $0x128] sm:$0xf]
    %v3483 = vld [vmem:[#allocation7 + $0x140] sm:$0xf]
    %v3484 = vld [vmem:[#allocation7 + $0x158] sm:$0xf]
    %v3485 = vld [vmem:[#allocation7 + $0x170] sm:$0xf]
    %v3486 = vld [vmem:[#allocation9 + $0x1c] sm:$0x1]
    %v3488 = vlaneseq
    %v3489 = vshrl.u32 %v3488, 7
    %v3490 = vsub.s32 0, %v3489
    %v3491 = vrot.slane %v3486, %v3490
    %v3509 = vunpack.c.l.b16 %v3470
    %v3510 = vunpack.c.l.b16 %v3471
    %v3511 = vunpack.c.l.b16 %v3472
    %v3512 = vunpack.c.l.b16 %v3473
    %v3513 = vunpack.c.l.b16 %v3474
    %v3514 = vunpack.c.l.b16 %v3475
    %v3515 = vunpack.c.l.b16 %v3476
    %v3516 = vunpack.c.l.b16 %v3477
    %v3517 = vunpack.c.l.b16 %v3478
    %v3518 = vunpack.c.l.b16 %v3479
    %v3519 = vunpack.c.l.b16 %v3480
    %v3520 = vunpack.c.l.b16 %v3481
    %v3521 = vunpack.c.l.b16 %v3482
    %v3522 = vunpack.c.l.b16 %v3483
    %v3523 = vunpack.c.l.b16 %v3484
    %v3524 = vunpack.c.l.b16 %v3485
    %v3525 = vpack.c.b16 %v3510, %v3509
    %v3526 = vpack.c.b16 %v3512, %v3511
    %v3527 = vpack.c.b16 %v3514, %v3513
    %v3528 = vpack.c.b16 %v3516, %v3515
    %v3529 = vpack.c.b16 %v3518, %v3517
    %v3530 = vpack.c.b16 %v3520, %v3519
    %v3531 = vpack.c.b16 %v3522, %v3521
    %v3532 = vpack.c.b16 %v3524, %v3523
    %3541 = vmatprep.subr.bf16.mxu0 0
    %3542 = vmatpush1.bf16.msra.mxu0 %v3532
    %3543 = vmatprep.subr.bf16.mxu0 0
    %3544 = vmatpush1.bf16.msra.mxu0 %v3531
    %3545 = vmatprep.subr.bf16.mxu0 0
    %3546 = vmatpush1.bf16.msra.mxu0 %v3530
    %3547 = vmatprep.subr.bf16.mxu0 0
    %3548 = vmatpush1.bf16.msra.mxu0 %v3529
    %3549 = vmatprep.subr.bf16.mxu0 0
    %3550 = vmatpush1.bf16.msra.mxu0 %v3528
    %3551 = vmatprep.subr.bf16.mxu0 0
    %3552 = vmatpush1.bf16.msra.mxu0 %v3527
    %3553 = vmatprep.subr.bf16.mxu0 0
    %3554 = vmatpush1.bf16.msra.mxu0 %v3526
    %3555 = vmatprep.subr.bf16.mxu0 0
    %3556 = vmatpush1.bf16.msra.mxu0 %v3525
    %3557 = vmatprep.subr.bf16.mxu0 0
    %3558 = vmatpush2.bf16.msra.mxu0 0
    %3559 = vmatprep.subr.bf16.mxu0 0
    %3560 = vmatpush2.bf16.msra.mxu0 0
    %3561 = vmatprep.subr.bf16.mxu0 0
    %3562 = vmatpush2.bf16.msra.mxu0 0
    %3563 = vmatprep.subr.bf16.mxu0 0
    %3564 = vmatpush2.bf16.msra.mxu0 0
    %3565 = vmatprep.subr.bf16.mxu0 0
    %3566 = vmatpush2.bf16.msra.mxu0 0
    %3567 = vmatprep.subr.bf16.mxu0 0
    %3568 = vmatpush2.bf16.msra.mxu0 0
    %3569 = vmatprep.subr.bf16.mxu0 0
    %3570 = vmatpush2.bf16.msra.mxu0 0
    %3571 = vmatprep.subr.bf16.mxu0 0
    %3572 = vmatpush2.bf16.msra.mxu0 0
    %3573 = vmatprep.mubr.bf16.mxu0 0
    %3574 = vmatmul.mubr.bf16.gmra.mxu0 %v3469
    %v3575 = vpop.f32.mrf.mxu0
    %v3576 = vadd.f32 %v3491, %v3575
    %v3577 = vpop.f32.mrf.mxu0
    %v3578 = vpop.f32.mrf.mxu0
    %v3579 = vadd.f32 %v3491, %v3578
    %v3580 = vpop.f32.mrf.mxu0
    %3581 = vdwg.mxu0
    %v3582 = vpack.c.bf16 %v3464, %v3464
    %v3583 = vld [vmem:[#allocation7 + $0x10] sm:$0xf]
    %v3584 = vld [vmem:[#allocation7 + $0x28] sm:$0xf]
    %v3585 = vld [vmem:[#allocation7 + $0x40] sm:$0xf]
    %v3586 = vld [vmem:[#allocation7 + $0x58] sm:$0xf]
    %v3587 = vld [vmem:[#allocation7 + $0x70] sm:$0xf]
    %v3588 = vld [vmem:[#allocation7 + $0x88] sm:$0xf]
    %v3589 = vld [vmem:[#allocation7 + $0xa0] sm:$0xf]
    %v3590 = vld [vmem:[#allocation7 + $0xb8] sm:$0xf]
    %v3591 = vld [vmem:[#allocation7 + $0xd0] sm:$0xf]
    %v3592 = vld [vmem:[#allocation7 + $0xe8] sm:$0xf]
    %v3593 = vld [vmem:[#allocation7 + $0x100] sm:$0xf]
    %v3594 = vld [vmem:[#allocation7 + $0x118] sm:$0xf]
    %v3595 = vld [vmem:[#allocation7 + $0x130] sm:$0xf]
    %v3596 = vld [vmem:[#allocation7 + $0x148] sm:$0xf]
    %v3597 = vld [vmem:[#allocation7 + $0x160] sm:$0xf]
    %v3598 = vld [vmem:[#allocation7 + $0x178] sm:$0xf]
    %v3599 = vld [vmem:[#allocation9 + $0x1e] sm:$0x1]
    %v3601 = vlaneseq
    %v3602 = vshrl.u32 %v3601, 7
    %v3603 = vsub.s32 0, %v3602
    %v3604 = vrot.slane %v3599, %v3603
    %v3622 = vunpack.c.l.b16 %v3583
    %v3623 = vunpack.c.l.b16 %v3584
    %v3624 = vunpack.c.l.b16 %v3585
    %v3625 = vunpack.c.l.b16 %v3586
    %v3626 = vunpack.c.l.b16 %v3587
    %v3627 = vunpack.c.l.b16 %v3588
    %v3628 = vunpack.c.l.b16 %v3589
    %v3629 = vunpack.c.l.b16 %v3590
    %v3630 = vunpack.c.l.b16 %v3591
    %v3631 = vunpack.c.l.b16 %v3592
    %v3632 = vunpack.c.l.b16 %v3593
    %v3633 = vunpack.c.l.b16 %v3594
    %v3634 = vunpack.c.l.b16 %v3595
    %v3635 = vunpack.c.l.b16 %v3596
    %v3636 = vunpack.c.l.b16 %v3597
    %v3637 = vunpack.c.l.b16 %v3598
    %v3638 = vpack.c.b16 %v3623, %v3622
    %v3639 = vpack.c.b16 %v3625, %v3624
    %v3640 = vpack.c.b16 %v3627, %v3626
    %v3641 = vpack.c.b16 %v3629, %v3628
    %v3642 = vpack.c.b16 %v3631, %v3630
    %v3643 = vpack.c.b16 %v3633, %v3632
    %v3644 = vpack.c.b16 %v3635, %v3634
    %v3645 = vpack.c.b16 %v3637, %v3636
    %3654 = vmatprep.subr.bf16.mxu0 0
    %3655 = vmatpush1.bf16.msra.mxu0 %v3645
    %3656 = vmatprep.subr.bf16.mxu0 0
    %3657 = vmatpush1.bf16.msra.mxu0 %v3644
    %3658 = vmatprep.subr.bf16.mxu0 0
    %3659 = vmatpush1.bf16.msra.mxu0 %v3643
    %3660 = vmatprep.subr.bf16.mxu0 0
    %3661 = vmatpush1.bf16.msra.mxu0 %v3642
    %3662 = vmatprep.subr.bf16.mxu0 0
    %3663 = vmatpush1.bf16.msra.mxu0 %v3641
    %3664 = vmatprep.subr.bf16.mxu0 0
    %3665 = vmatpush1.bf16.msra.mxu0 %v3640
    %3666 = vmatprep.subr.bf16.mxu0 0
    %3667 = vmatpush1.bf16.msra.mxu0 %v3639
    %3668 = vmatprep.subr.bf16.mxu0 0
    %3669 = vmatpush1.bf16.msra.mxu0 %v3638
    %3670 = vmatprep.subr.bf16.mxu0 0
    %3671 = vmatpush2.bf16.msra.mxu0 0
    %3672 = vmatprep.subr.bf16.mxu0 0
    %3673 = vmatpush2.bf16.msra.mxu0 0
    %3674 = vmatprep.subr.bf16.mxu0 0
    %3675 = vmatpush2.bf16.msra.mxu0 0
    %3676 = vmatprep.subr.bf16.mxu0 0
    %3677 = vmatpush2.bf16.msra.mxu0 0
    %3678 = vmatprep.subr.bf16.mxu0 0
    %3679 = vmatpush2.bf16.msra.mxu0 0
    %3680 = vmatprep.subr.bf16.mxu0 0
    %3681 = vmatpush2.bf16.msra.mxu0 0
    %3682 = vmatprep.subr.bf16.mxu0 0
    %3683 = vmatpush2.bf16.msra.mxu0 0
    %3684 = vmatprep.subr.bf16.mxu0 0
    %3685 = vmatpush2.bf16.msra.mxu0 0
    %3686 = vmatprep.mubr.bf16.mxu0 0
    %3687 = vmatmul.mubr.bf16.gmra.mxu0 %v3582
    %v3688 = vpop.f32.mrf.mxu0
    %v3689 = vadd.f32 %v3604, %v3688
    %v3690 = vpop.f32.mrf.mxu0
    %v3691 = vpop.f32.mrf.mxu0
    %v3692 = vpop.f32.mrf.mxu0
    %3693 = vdwg.mxu0
    %v3694 = vpack.c.bf16 %v3047, %v3043
    %v3695 = vpack.c.bf16 %v3278, %v3278
    %v3696 = vpack.c.bf16 %v3088, %v3084
    %v3697 = vpack.c.bf16 %v3317, %v3317
    %3698 = vmatprep.subr.bf16.mxu0 0
    %3699 = vmatpush1.bf16.xpose.msra.mxu0 0
    %3700 = vmatprep.subr.bf16.mxu0 0
    %3701 = vmatpush1.bf16.xpose.msra.mxu0 0
    %3702 = vmatprep.subr.bf16.mxu0 0
    %3703 = vmatpush1.bf16.xpose.msra.mxu0 0
    %3704 = vmatprep.subr.bf16.mxu0 0
    %3705 = vmatpush1.bf16.xpose.msra.mxu0 0
    %3706 = vmatprep.subr.bf16.mxu0 0
    %3707 = vmatpush1.bf16.xpose.msra.mxu0 0
    %3708 = vmatprep.subr.bf16.mxu0 0
    %3709 = vmatpush1.bf16.xpose.msra.mxu0 0
    %3710 = vmatprep.subr.bf16.mxu0 0
    %3711 = vmatpush1.bf16.xpose.msra.mxu0 %v3697
    %3712 = vmatprep.subr.bf16.mxu0 0
    %3713 = vmatpush1.bf16.xpose.msra.mxu0 %v3696
    %3714 = vmatprep.subr.bf16.mxu0 0
    %3715 = vmatpush2.bf16.xpose.msra.mxu0 0
    %3716 = vmatprep.subr.bf16.mxu0 0
    %3717 = vmatpush2.bf16.xpose.msra.mxu0 0
    %3718 = vmatprep.subr.bf16.mxu0 0
    %3719 = vmatpush2.bf16.xpose.msra.mxu0 0
    %3720 = vmatprep.subr.bf16.mxu0 0
    %3721 = vmatpush2.bf16.xpose.msra.mxu0 0
    %3722 = vmatprep.subr.bf16.mxu0 0
    %3723 = vmatpush2.bf16.xpose.msra.mxu0 0
    %3724 = vmatprep.subr.bf16.mxu0 0
    %3725 = vmatpush2.bf16.xpose.msra.mxu0 0
    %3726 = vmatprep.subr.bf16.mxu0 0
    %3727 = vmatpush2.bf16.xpose.msra.mxu0 0
    %3728 = vmatprep.subr.bf16.mxu0 0
    %3729 = vmatpush2.bf16.xpose.msra.mxu0 0
    %3730 = vmatprep.mubr.bf16.mxu0 0
    %3731 = vmatmul.mubr.bf16.gmra.mxu0 %v3694
    %v3732 = vpop.f32.mrf.mxu0
    %v3733 = vadd.f32 0.0, %v3732
    %v3734 = vpop.f32.mrf.mxu0
    %v3735 = vpop.f32.mrf.mxu0
    %v3736 = vadd.f32 0.0, %v3735
    %v3737 = vpop.f32.mrf.mxu0
    %3738 = vmatprep.mubr.bf16.mxu0 0
    %3739 = vmatmul.mubr.bf16.gmra.mxu0 %v3695
    %v3740 = vpop.f32.mrf.mxu0
    %v3741 = vadd.f32 0.0, %v3740
    %v3742 = vpop.f32.mrf.mxu0
    %v3743 = vpop.f32.mrf.mxu0
    %v3744 = vpop.f32.mrf.mxu0
    %3745 = vdwg.mxu0
    %v3746 = vsel %vm1144, %v3733, -inf
    %3747 = vmax.xlane.f32.xlu0 %v3746
    %v3748 = vpop.xlane.xlu0 %3747
    %v3749 = vsel %vm1144, %v3736, -inf
    %3750 = vmax.xlane.f32.xlu0 %v3749
    %v3751 = vpop.xlane.xlu0 %3750
    %v3752 = vsel %vm1144, %v3741, -inf
    %3753 = vmax.xlane.f32.xlu0 %v3752
    %v3754 = vpop.xlane.xlu0 %3753
    %v3755 = vsub.f32 %v3733, %v3748
    %v3756 = vsub.f32 %v3736, %v3751
    %v3757 = vsub.f32 %v3741, %v3754
    %v3758 = vmul.f32 %v3755, 1.442695
    %v3759 = vpow.pop %v3758
    %v3760 = vmul.f32 %v3756, 1.442695
    %v3761 = vpow.pop %v3760
    %v3762 = vmul.f32 %v3757, 1.442695
    %v3763 = vpow.pop %v3762
    %v3764 = vsel %vm1144, %v3759, 0.0
    %3765 = vadd.xlane.f32.xlu0 %v3764
    %v3766 = vpop.xlane.xlu0 %3765
    %v3767 = vsel %vm1144, %v3761, 0.0
    %3768 = vadd.xlane.f32.xlu0 %v3767
    %v3769 = vpop.xlane.xlu0 %3768
    %v3770 = vsel %vm1144, %v3763, 0.0
    %3771 = vadd.xlane.f32.xlu0 %v3770
    %v3772 = vpop.xlane.xlu0 %3771
    %v3773 = vrcp.pop %v3766
    %v3774 = vrcp.pop %v3769
    %v3775 = vrcp.pop %v3772
    %v3776 = vmul.f32 %v3759, %v3773
    %v3777 = vmul.f32 %v3761, %v3774
    %v3778 = vmul.f32 %v3763, %v3775
    %v3779 = vpack.c.bf16 %v3777, %v3776
    %v3780 = vpack.c.bf16 %v3778, %v3778
    %v3781 = vpack.c.bf16 %v3090, %v3086
    %v3782 = vpack.c.bf16 %v3319, %v3319
    %v3784 = vsel %vm1144, %v3779, 0
    %v3787 = vsel %vm1144, %v3780, 0
    %v3790 = vsel %vm1188, %v3782, 0
    %3792 = vmatprep.subr.bf16.mxu0 0
    %3793 = vmatpush1.bf16.msra.mxu0 0
    %3794 = vmatprep.subr.bf16.mxu0 0
    %3795 = vmatpush1.bf16.msra.mxu0 0
    %3796 = vmatprep.subr.bf16.mxu0 0
    %3797 = vmatpush1.bf16.msra.mxu0 0
    %3798 = vmatprep.subr.bf16.mxu0 0
    %3799 = vmatpush1.bf16.msra.mxu0 0
    %3800 = vmatprep.subr.bf16.mxu0 0
    %3801 = vmatpush1.bf16.msra.mxu0 0
    %3802 = vmatprep.subr.bf16.mxu0 0
    %3803 = vmatpush1.bf16.msra.mxu0 0
    %3804 = vmatprep.subr.bf16.mxu0 0
    %3805 = vmatpush1.bf16.msra.mxu0 %v3790
    %3806 = vmatprep.subr.bf16.mxu0 0
    %3807 = vmatpush1.bf16.msra.mxu0 %v3781
    %3808 = vmatprep.subr.bf16.mxu0 0
    %3809 = vmatpush2.bf16.msra.mxu0 0
    %3810 = vmatprep.subr.bf16.mxu0 0
    %3811 = vmatpush2.bf16.msra.mxu0 0
    %3812 = vmatprep.subr.bf16.mxu0 0
    %3813 = vmatpush2.bf16.msra.mxu0 0
    %3814 = vmatprep.subr.bf16.mxu0 0
    %3815 = vmatpush2.bf16.msra.mxu0 0
    %3816 = vmatprep.subr.bf16.mxu0 0
    %3817 = vmatpush2.bf16.msra.mxu0 0
    %3818 = vmatprep.subr.bf16.mxu0 0
    %3819 = vmatpush2.bf16.msra.mxu0 0
    %3820 = vmatprep.subr.bf16.mxu0 0
    %3821 = vmatpush2.bf16.msra.mxu0 0
    %3822 = vmatprep.subr.bf16.mxu0 0
    %3823 = vmatpush2.bf16.msra.mxu0 0
    %3824 = vmatprep.mubr.bf16.mxu0 0
    %3825 = vmatmul.mubr.bf16.gmra.mxu0 %v3784
    %v3826 = vpop.f32.mrf.mxu0
    %v3827 = vadd.f32 0.0, %v3826
    %v3828 = vpop.f32.mrf.mxu0
    %v3829 = vpop.f32.mrf.mxu0
    %v3830 = vadd.f32 0.0, %v3829
    %v3831 = vpop.f32.mrf.mxu0
    %3832 = vmatprep.mubr.bf16.mxu0 0
    %3833 = vmatmul.mubr.bf16.gmra.mxu0 %v3787
    %v3834 = vpop.f32.mrf.mxu0
    %v3835 = vadd.f32 0.0, %v3834
    %v3836 = vpop.f32.mrf.mxu0
    %v3837 = vpop.f32.mrf.mxu0
    %v3838 = vpop.f32.mrf.mxu0
    %3839 = vdwg.mxu0
    %v3840 = vpack.c.bf16 %v3830, %v3827
    %v3841 = vld [vmem:[#allocation7 + $0xc] sm:$0xf]
    %v3842 = vld [vmem:[#allocation7 + $0x24] sm:$0xf]
    %v3843 = vld [vmem:[#allocation7 + $0x3c] sm:$0xf]
    %v3844 = vld [vmem:[#allocation7 + $0x54] sm:$0xf]
    %v3845 = vld [vmem:[#allocation7 + $0x6c] sm:$0xf]
    %v3846 = vld [vmem:[#allocation7 + $0x84] sm:$0xf]
    %v3847 = vld [vmem:[#allocation7 + $0x9c] sm:$0xf]
    %v3848 = vld [vmem:[#allocation7 + $0xb4] sm:$0xf]
    %v3849 = vld [vmem:[#allocation7 + $0xcc] sm:$0xf]
    %v3850 = vld [vmem:[#allocation7 + $0xe4] sm:$0xf]
    %v3851 = vld [vmem:[#allocation7 + $0xfc] sm:$0xf]
    %v3852 = vld [vmem:[#allocation7 + $0x114] sm:$0xf]
    %v3853 = vld [vmem:[#allocation7 + $0x12c] sm:$0xf]
    %v3854 = vld [vmem:[#allocation7 + $0x144] sm:$0xf]
    %v3855 = vld [vmem:[#allocation7 + $0x15c] sm:$0xf]
    %v3856 = vld [vmem:[#allocation7 + $0x174] sm:$0xf]
    %v3857 = vld [vmem:[#allocation9 + $0x1d] sm:$0x1]
    %v3859 = vlaneseq
    %v3860 = vshrl.u32 %v3859, 7
    %v3861 = vsub.s32 0, %v3860
    %v3862 = vrot.slane %v3857, %v3861
    %v3880 = vunpack.c.l.b16 %v3841
    %v3881 = vunpack.c.l.b16 %v3842
    %v3882 = vunpack.c.l.b16 %v3843
    %v3883 = vunpack.c.l.b16 %v3844
    %v3884 = vunpack.c.l.b16 %v3845
    %v3885 = vunpack.c.l.b16 %v3846
    %v3886 = vunpack.c.l.b16 %v3847
    %v3887 = vunpack.c.l.b16 %v3848
    %v3888 = vunpack.c.l.b16 %v3849
    %v3889 = vunpack.c.l.b16 %v3850
    %v3890 = vunpack.c.l.b16 %v3851
    %v3891 = vunpack.c.l.b16 %v3852
    %v3892 = vunpack.c.l.b16 %v3853
    %v3893 = vunpack.c.l.b16 %v3854
    %v3894 = vunpack.c.l.b16 %v3855
    %v3895 = vunpack.c.l.b16 %v3856
    %v3896 = vpack.c.b16 %v3881, %v3880
    %v3897 = vpack.c.b16 %v3883, %v3882
    %v3898 = vpack.c.b16 %v3885, %v3884
    %v3899 = vpack.c.b16 %v3887, %v3886
    %v3900 = vpack.c.b16 %v3889, %v3888
    %v3901 = vpack.c.b16 %v3891, %v3890
    %v3902 = vpack.c.b16 %v3893, %v3892
    %v3903 = vpack.c.b16 %v3895, %v3894
    %3912 = vmatprep.subr.bf16.mxu0 0
    %3913 = vmatpush1.bf16.msra.mxu0 %v3903
    %3914 = vmatprep.subr.bf16.mxu0 0
    %3915 = vmatpush1.bf16.msra.mxu0 %v3902
    %3916 = vmatprep.subr.bf16.mxu0 0
    %3917 = vmatpush1.bf16.msra.mxu0 %v3901
    %3918 = vmatprep.subr.bf16.mxu0 0
    %3919 = vmatpush1.bf16.msra.mxu0 %v3900
    %3920 = vmatprep.subr.bf16.mxu0 0
    %3921 = vmatpush1.bf16.msra.mxu0 %v3899
    %3922 = vmatprep.subr.bf16.mxu0 0
    %3923 = vmatpush1.bf16.msra.mxu0 %v3898
    %3924 = vmatprep.subr.bf16.mxu0 0
    %3925 = vmatpush1.bf16.msra.mxu0 %v3897
    %3926 = vmatprep.subr.bf16.mxu0 0
    %3927 = vmatpush1.bf16.msra.mxu0 %v3896
    %3928 = vmatprep.subr.bf16.mxu0 0
    %3929 = vmatpush2.bf16.msra.mxu0 0
    %3930 = vmatprep.subr.bf16.mxu0 0
    %3931 = vmatpush2.bf16.msra.mxu0 0
    %3932 = vmatprep.subr.bf16.mxu0 0
    %3933 = vmatpush2.bf16.msra.mxu0 0
    %3934 = vmatprep.subr.bf16.mxu0 0
    %3935 = vmatpush2.bf16.msra.mxu0 0
    %3936 = vmatprep.subr.bf16.mxu0 0
    %3937 = vmatpush2.bf16.msra.mxu0 0
    %3938 = vmatprep.subr.bf16.mxu0 0
    %3939 = vmatpush2.bf16.msra.mxu0 0
    %3940 = vmatprep.subr.bf16.mxu0 0
    %3941 = vmatpush2.bf16.msra.mxu0 0
    %3942 = vmatprep.subr.bf16.mxu0 0
    %3943 = vmatpush2.bf16.msra.mxu0 0
    %3944 = vmatprep.mubr.bf16.mxu0 0
    %3945 = vmatmul.mubr.bf16.gmra.mxu0 %v3840
    %v3946 = vpop.f32.mrf.mxu0
    %v3947 = vadd.f32 %v3862, %v3946
    %v3948 = vpop.f32.mrf.mxu0
    %v3949 = vpop.f32.mrf.mxu0
    %v3950 = vadd.f32 %v3862, %v3949
    %v3951 = vpop.f32.mrf.mxu0
    %3952 = vdwg.mxu0
    %v3953 = vpack.c.bf16 %v3835, %v3835
    %v3954 = vld [vmem:[#allocation7 + $0x14] sm:$0xf]
    %v3955 = vld [vmem:[#allocation7 + $0x2c] sm:$0xf]
    %v3956 = vld [vmem:[#allocation7 + $0x44] sm:$0xf]
    %v3957 = vld [vmem:[#allocation7 + $0x5c] sm:$0xf]
    %v3958 = vld [vmem:[#allocation7 + $0x74] sm:$0xf]
    %v3959 = vld [vmem:[#allocation7 + $0x8c] sm:$0xf]
    %v3960 = vld [vmem:[#allocation7 + $0xa4] sm:$0xf]
    %v3961 = vld [vmem:[#allocation7 + $0xbc] sm:$0xf]
    %v3962 = vld [vmem:[#allocation7 + $0xd4] sm:$0xf]
    %v3963 = vld [vmem:[#allocation7 + $0xec] sm:$0xf]
    %v3964 = vld [vmem:[#allocation7 + $0x104] sm:$0xf]
    %v3965 = vld [vmem:[#allocation7 + $0x11c] sm:$0xf]
    %v3966 = vld [vmem:[#allocation7 + $0x134] sm:$0xf]
    %v3967 = vld [vmem:[#allocation7 + $0x14c] sm:$0xf]
    %v3968 = vld [vmem:[#allocation7 + $0x164] sm:$0xf]
    %v3969 = vld [vmem:[#allocation7 + $0x17c] sm:$0xf]
    %v3970 = vld [vmem:[#allocation9 + $0x1f] sm:$0x1]
    %v3972 = vlaneseq
    %v3973 = vshrl.u32 %v3972, 7
    %v3974 = vsub.s32 0, %v3973
    %v3975 = vrot.slane %v3970, %v3974
    %v3993 = vunpack.c.l.b16 %v3954
    %v3994 = vunpack.c.l.b16 %v3955
    %v3995 = vunpack.c.l.b16 %v3956
    %v3996 = vunpack.c.l.b16 %v3957
    %v3997 = vunpack.c.l.b16 %v3958
    %v3998 = vunpack.c.l.b16 %v3959
    %v3999 = vunpack.c.l.b16 %v3960
    %v4000 = vunpack.c.l.b16 %v3961
    %v4001 = vunpack.c.l.b16 %v3962
    %v4002 = vunpack.c.l.b16 %v3963
    %v4003 = vunpack.c.l.b16 %v3964
    %v4004 = vunpack.c.l.b16 %v3965
    %v4005 = vunpack.c.l.b16 %v3966
    %v4006 = vunpack.c.l.b16 %v3967
    %v4007 = vunpack.c.l.b16 %v3968
    %v4008 = vunpack.c.l.b16 %v3969
    %v4009 = vpack.c.b16 %v3994, %v3993
    %v4010 = vpack.c.b16 %v3996, %v3995
    %v4011 = vpack.c.b16 %v3998, %v3997
    %v4012 = vpack.c.b16 %v4000, %v3999
    %v4013 = vpack.c.b16 %v4002, %v4001
    %v4014 = vpack.c.b16 %v4004, %v4003
    %v4015 = vpack.c.b16 %v4006, %v4005
    %v4016 = vpack.c.b16 %v4008, %v4007
    %4025 = vmatprep.subr.bf16.mxu0 0
    %4026 = vmatpush1.bf16.msra.mxu0 %v4016
    %4027 = vmatprep.subr.bf16.mxu0 0
    %4028 = vmatpush1.bf16.msra.mxu0 %v4015
    %4029 = vmatprep.subr.bf16.mxu0 0
    %4030 = vmatpush1.bf16.msra.mxu0 %v4014
    %4031 = vmatprep.subr.bf16.mxu0 0
    %4032 = vmatpush1.bf16.msra.mxu0 %v4013
    %4033 = vmatprep.subr.bf16.mxu0 0
    %4034 = vmatpush1.bf16.msra.mxu0 %v4012
    %4035 = vmatprep.subr.bf16.mxu0 0
    %4036 = vmatpush1.bf16.msra.mxu0 %v4011
    %4037 = vmatprep.subr.bf16.mxu0 0
    %4038 = vmatpush1.bf16.msra.mxu0 %v4010
    %4039 = vmatprep.subr.bf16.mxu0 0
    %4040 = vmatpush1.bf16.msra.mxu0 %v4009
    %4041 = vmatprep.subr.bf16.mxu0 0
    %4042 = vmatpush2.bf16.msra.mxu0 0
    %4043 = vmatprep.subr.bf16.mxu0 0
    %4044 = vmatpush2.bf16.msra.mxu0 0
    %4045 = vmatprep.subr.bf16.mxu0 0
    %4046 = vmatpush2.bf16.msra.mxu0 0
    %4047 = vmatprep.subr.bf16.mxu0 0
    %4048 = vmatpush2.bf16.msra.mxu0 0
    %4049 = vmatprep.subr.bf16.mxu0 0
    %4050 = vmatpush2.bf16.msra.mxu0 0
    %4051 = vmatprep.subr.bf16.mxu0 0
    %4052 = vmatpush2.bf16.msra.mxu0 0
    %4053 = vmatprep.subr.bf16.mxu0 0
    %4054 = vmatpush2.bf16.msra.mxu0 0
    %4055 = vmatprep.subr.bf16.mxu0 0
    %4056 = vmatpush2.bf16.msra.mxu0 0
    %4057 = vmatprep.mubr.bf16.mxu0 0
    %4058 = vmatmul.mubr.bf16.gmra.mxu0 %v3953
    %v4059 = vpop.f32.mrf.mxu0
    %v4060 = vadd.f32 %v3975, %v4059
    %v4061 = vpop.f32.mrf.mxu0
    %v4062 = vpop.f32.mrf.mxu0
    %v4063 = vpop.f32.mrf.mxu0
    %4064 = vdwg.mxu0
    %v4065 = vadd.f32 %v3576, %v3947
    %v4066 = vadd.f32 %v3579, %v3950
    %v4067 = vadd.f32 %v3689, %v4060
    %v4068 = vlaneseq
    %v4069 = vshrl.u32 %v4068, 7
    %v4070 = vsub.s32 0, %v4069
    %v4071 = vrot.slane %v2622, %v4070
    %v4072 = vmul.f32 %v4071, %v4065
    %v4073 = vmul.f32 %v4071, %v4066
    %v4074 = vadd.f32 %v2321, %v4072
    %v4075 = vadd.f32 %v2322, %v4073
    %v4076 = vsel %vm310, %v4074, 0.0
    %4077 = vadd.xlane.f32.xlu0 %v4076
    %v4078 = vpop.xlane.xlu0 %4077
    %v4079 = vsel %vm310, %v4075, 0.0
    %4080 = vadd.xlane.f32.xlu0 %v4079
    %v4081 = vpop.xlane.xlu0 %4080
    %v4082 = vmul.f32 %v4078, %v566
    %v4083 = vmul.f32 %v4081, %v566
    %v4084 = vsub.f32 %v4074, %v4082
    %v4085 = vsub.f32 %v4075, %v4083
    %v4086 = vmul.f32 %v4084, %v4084
    %v4087 = vmul.f32 %v4085, %v4085
    %v4088 = vsel %vm310, %v4086, 0.0
    %4089 = vadd.xlane.f32.xlu0 %v4088
    %v4090 = vpop.xlane.xlu0 %4089
    %v4091 = vsel %vm310, %v4087, 0.0
    %4092 = vadd.xlane.f32.xlu0 %v4091
    %v4093 = vpop.xlane.xlu0 %4092
    %v4094 = vmul.f32 %v4090, %v566
    %v4095 = vmul.f32 %v4093, %v566
    %v4096 = vadd.f32 %v4094, 1e-06
    %v4097 = vadd.f32 %v4095, 1e-06
    %v4098 = vrsqrt.pop %v4096
    %v4099 = vrsqrt.pop %v4097
    %v4100 = vmul.f32 %v4084, %v4098
    %v4101 = vmul.f32 %v4085, %v4099
    %v4102 = vadd.f32 %v2663, 1.0
    %v4103 = vlaneseq
    %v4104 = vshrl.u32 %v4103, 7
    %v4105 = vsub.s32 0, %v4104
    %v4106 = vrot.slane %v4102, %v4105
    %v4107 = vmul.f32 %v4100, %v4106
    %v4108 = vmul.f32 %v4101, %v4106
    %v4109 = vlaneseq
    %v4110 = vshrl.u32 %v4109, 7
    %v4111 = vsub.s32 0, %v4110
    %v4112 = vrot.slane %v2624, %v4111
    %v4113 = vadd.f32 %v4107, %v4112
    %v4114 = vadd.f32 %v4108, %v4112
    %v4115 = vpack.c.bf16 %v4114, %v4113
    %v4116 = vld [vmem:[#allocation6 + $0x60] sm:$0xf]
    %v4117 = vld [vmem:[#allocation6 + $0xc8] sm:$0xf]
    %v4118 = vld [vmem:[#allocation6 + $0x130] sm:$0xf]
    %v4119 = vld [vmem:[#allocation6 + $0x198] sm:$0xf]
    %v4120 = vld [vmem:[#allocation9 + $0x18] sm:$0x1]
    %v4122 = vlaneseq
    %v4123 = vshrl.u32 %v4122, 7
    %v4124 = vsub.s32 0, %v4123
    %v4125 = vrot.slane %v4120, %v4124
    %v4131 = vunpack.c.l.b16 %v4116
    %v4132 = vunpack.c.l.b16 %v4117
    %v4133 = vunpack.c.l.b16 %v4118
    %v4134 = vunpack.c.l.b16 %v4119
    %v4135 = vpack.c.b16 %v4132, %v4131
    %v4136 = vpack.c.b16 %v4134, %v4133
    %v4140 = vsel %vm310, %v4115, 0
    %4142 = vmatprep.subr.bf16.mxu0 0
    %4143 = vmatpush1.bf16.msra.mxu0 0
    %4144 = vmatprep.subr.bf16.mxu0 0
    %4145 = vmatpush1.bf16.msra.mxu0 0
    %4146 = vmatprep.subr.bf16.mxu0 0
    %4147 = vmatpush1.bf16.msra.mxu0 0
    %4148 = vmatprep.subr.bf16.mxu0 0
    %4149 = vmatpush1.bf16.msra.mxu0 0
    %4150 = vmatprep.subr.bf16.mxu0 0
    %4151 = vmatpush1.bf16.msra.mxu0 0
    %4152 = vmatprep.subr.bf16.mxu0 0
    %4153 = vmatpush1.bf16.msra.mxu0 0
    %4154 = vmatprep.subr.bf16.mxu0 0
    %4155 = vmatpush1.bf16.msra.mxu0 %v4136
    %4156 = vmatprep.subr.bf16.mxu0 0
    %4157 = vmatpush1.bf16.msra.mxu0 %v4135
    %4158 = vmatprep.subr.bf16.mxu0 0
    %4159 = vmatpush2.bf16.msra.mxu0 0
    %4160 = vmatprep.subr.bf16.mxu0 0
    %4161 = vmatpush2.bf16.msra.mxu0 0
    %4162 = vmatprep.subr.bf16.mxu0 0
    %4163 = vmatpush2.bf16.msra.mxu0 0
    %4164 = vmatprep.subr.bf16.mxu0 0
    %4165 = vmatpush2.bf16.msra.mxu0 0
    %4166 = vmatprep.subr.bf16.mxu0 0
    %4167 = vmatpush2.bf16.msra.mxu0 0
    %4168 = vmatprep.subr.bf16.mxu0 0
    %4169 = vmatpush2.bf16.msra.mxu0 0
    %4170 = vmatprep.subr.bf16.mxu0 0
    %4171 = vmatpush2.bf16.msra.mxu0 0
    %4172 = vmatprep.subr.bf16.mxu0 0
    %4173 = vmatpush2.bf16.msra.mxu0 0
    %4174 = vmatprep.mubr.bf16.mxu0 0
    %4175 = vmatmul.mubr.bf16.gmra.mxu0 %v4140
    %v4176 = vpop.f32.mrf.mxu0
    %v4177 = vadd.f32 %v4125, %v4176
    %v4178 = vpop.f32.mrf.mxu0
    %v4179 = vpop.f32.mrf.mxu0
    %v4180 = vadd.f32 %v4125, %v4179
    %v4181 = vpop.f32.mrf.mxu0
    %4182 = vdwg.mxu0
    %v4183 = vmul.f32 %v4177, 0.5
    %v4184 = vmul.f32 %v4180, 0.5
    %v4185 = vmul.f32 %v4177, 0.044715
    %v4186 = vmul.f32 %v4180, 0.044715
    %v4187 = vmul.f32 %v4185, %v4177
    %v4188 = vmul.f32 %v4186, %v4180
    %v4189 = vmul.f32 %v4187, %v4177
    %v4190 = vmul.f32 %v4188, %v4180
    %v4191 = vadd.f32 %v4177, %v4189
    %v4192 = vadd.f32 %v4180, %v4190
    %v4193 = vmul.f32 %v4191, 0.7978846
    %v4194 = vmul.f32 %v4192, 0.7978846
    %v4195 = vtanh.pop %v4193
    %v4196 = vtanh.pop %v4194
    %v4197 = vadd.f32 %v4195, 1.0
    %v4198 = vadd.f32 %v4196, 1.0
    %v4199 = vmul.f32 %v4183, %v4197
    %v4200 = vmul.f32 %v4184, %v4198
    %v4201 = vpack.c.bf16 %v4200, %v4199
    %v4202 = vld [vmem:[#allocation7] sm:$0xf]
    %v4203 = vld [vmem:[#allocation7 + $0x18] sm:$0xf]
    %v4204 = vld [vmem:[#allocation7 + $0x30] sm:$0xf]
    %v4205 = vld [vmem:[#allocation7 + $0x48] sm:$0xf]
    %v4206 = vld [vmem:[#allocation7 + $0x60] sm:$0xf]
    %v4207 = vld [vmem:[#allocation7 + $0x78] sm:$0xf]
    %v4208 = vld [vmem:[#allocation7 + $0x90] sm:$0xf]
    %v4209 = vld [vmem:[#allocation7 + $0xa8] sm:$0xf]
    %v4210 = vld [vmem:[#allocation7 + $0xc0] sm:$0xf]
    %v4211 = vld [vmem:[#allocation7 + $0xd8] sm:$0xf]
    %v4212 = vld [vmem:[#allocation7 + $0xf0] sm:$0xf]
    %v4213 = vld [vmem:[#allocation7 + $0x108] sm:$0xf]
    %v4214 = vld [vmem:[#allocation7 + $0x120] sm:$0xf]
    %v4215 = vld [vmem:[#allocation7 + $0x138] sm:$0xf]
    %v4216 = vld [vmem:[#allocation7 + $0x150] sm:$0xf]
    %v4217 = vld [vmem:[#allocation7 + $0x168] sm:$0xf]
    %v4218 = vld [vmem:[#allocation9 + $0x1a] sm:$0x1]
    %v4220 = vlaneseq
    %v4221 = vshrl.u32 %v4220, 7
    %v4222 = vsub.s32 0, %v4221
    %v4223 = vrot.slane %v4218, %v4222
    %v4241 = vunpack.c.l.b16 %v4202
    %v4242 = vunpack.c.l.b16 %v4203
    %v4243 = vunpack.c.l.b16 %v4204
    %v4244 = vunpack.c.l.b16 %v4205
    %v4245 = vunpack.c.l.b16 %v4206
    %v4246 = vunpack.c.l.b16 %v4207
    %v4247 = vunpack.c.l.b16 %v4208
    %v4248 = vunpack.c.l.b16 %v4209
    %v4249 = vunpack.c.l.b16 %v4210
    %v4250 = vunpack.c.l.b16 %v4211
    %v4251 = vunpack.c.l.b16 %v4212
    %v4252 = vunpack.c.l.b16 %v4213
    %v4253 = vunpack.c.l.b16 %v4214
    %v4254 = vunpack.c.l.b16 %v4215
    %v4255 = vunpack.c.l.b16 %v4216
    %v4256 = vunpack.c.l.b16 %v4217
    %v4257 = vpack.c.b16 %v4242, %v4241
    %v4258 = vpack.c.b16 %v4244, %v4243
    %v4259 = vpack.c.b16 %v4246, %v4245
    %v4260 = vpack.c.b16 %v4248, %v4247
    %v4261 = vpack.c.b16 %v4250, %v4249
    %v4262 = vpack.c.b16 %v4252, %v4251
    %v4263 = vpack.c.b16 %v4254, %v4253
    %v4264 = vpack.c.b16 %v4256, %v4255
    %4273 = vmatprep.subr.bf16.mxu0 0
    %4274 = vmatpush1.bf16.msra.mxu0 %v4264
    %4275 = vmatprep.subr.bf16.mxu0 0
    %4276 = vmatpush1.bf16.msra.mxu0 %v4263
    %4277 = vmatprep.subr.bf16.mxu0 0
    %4278 = vmatpush1.bf16.msra.mxu0 %v4262
    %4279 = vmatprep.subr.bf16.mxu0 0
    %4280 = vmatpush1.bf16.msra.mxu0 %v4261
    %4281 = vmatprep.subr.bf16.mxu0 0
    %4282 = vmatpush1.bf16.msra.mxu0 %v4260
    %4283 = vmatprep.subr.bf16.mxu0 0
    %4284 = vmatpush1.bf16.msra.mxu0 %v4259
    %4285 = vmatprep.subr.bf16.mxu0 0
    %4286 = vmatpush1.bf16.msra.mxu0 %v4258
    %4287 = vmatprep.subr.bf16.mxu0 0
    %4288 = vmatpush1.bf16.msra.mxu0 %v4257
    %4289 = vmatprep.subr.bf16.mxu0 0
    %4290 = vmatpush2.bf16.msra.mxu0 0
    %4291 = vmatprep.subr.bf16.mxu0 0
    %4292 = vmatpush2.bf16.msra.mxu0 0
    %4293 = vmatprep.subr.bf16.mxu0 0
    %4294 = vmatpush2.bf16.msra.mxu0 0
    %4295 = vmatprep.subr.bf16.mxu0 0
    %4296 = vmatpush2.bf16.msra.mxu0 0
    %4297 = vmatprep.subr.bf16.mxu0 0
    %4298 = vmatpush2.bf16.msra.mxu0 0
    %4299 = vmatprep.subr.bf16.mxu0 0
    %4300 = vmatpush2.bf16.msra.mxu0 0
    %4301 = vmatprep.subr.bf16.mxu0 0
    %4302 = vmatpush2.bf16.msra.mxu0 0
    %4303 = vmatprep.subr.bf16.mxu0 0
    %4304 = vmatpush2.bf16.msra.mxu0 0
    %4305 = vmatprep.mubr.bf16.mxu0 0
    %4306 = vmatmul.mubr.bf16.gmra.mxu0 %v4201
    %v4307 = vpop.f32.mrf.mxu0
    %v4308 = vadd.f32 %v4223, %v4307
    %v4309 = vpop.f32.mrf.mxu0
    %v4310 = vpop.f32.mrf.mxu0
    %v4311 = vadd.f32 %v4223, %v4310
    %v4312 = vpop.f32.mrf.mxu0
    %4313 = vdwg.mxu0
    %v4314 = vlaneseq
    %v4315 = vshrl.u32 %v4314, 7
    %v4316 = vsub.s32 0, %v4315
    %v4317 = vrot.slane %v2665, %v4316
    %v4318 = vmul.f32 %v4317, %v4308
    %v4319 = vmul.f32 %v4317, %v4311
    %v4320 = vadd.f32 %v4074, %v4318
    %v4321 = vadd.f32 %v4075, %v4319
    %v4322 = vlaneseq
    %v4323 = vshrl.u32 %v4322, 7
    %v4324 = vsub.s32 0, %v4323
    %v4325 = vrot.slane %v2745, %v4324
    %v4326 = vmul.f32 %v4325, %v4067
    %v4327 = vadd.f32 %v2324, %v4326
    %v4328 = vsel %vm310, %v4327, 0.0
    %4329 = vadd.xlane.f32.xlu0 %v4328
    %v4330 = vpop.xlane.xlu0 %4329
    %v4331 = vmul.f32 %v4330, %v566
    %v4332 = vsub.f32 %v4327, %v4331
    %v4333 = vmul.f32 %v4332, %v4332
    %v4334 = vsel %vm310, %v4333, 0.0
    %4335 = vadd.xlane.f32.xlu0 %v4334
    %v4336 = vpop.xlane.xlu0 %4335
    %v4337 = vmul.f32 %v4336, %v566
    %v4338 = vadd.f32 %v4337, 1e-06
    %v4339 = vrsqrt.pop %v4338
    %v4340 = vmul.f32 %v4332, %v4339
    %v4341 = vadd.f32 %v2786, 1.0
    %v4342 = vlaneseq
    %v4343 = vshrl.u32 %v4342, 7
    %v4344 = vsub.s32 0, %v4343
    %v4345 = vrot.slane %v4341, %v4344
    %v4346 = vmul.f32 %v4340, %v4345
    %v4347 = vlaneseq
    %v4348 = vshrl.u32 %v4347, 7
    %v4349 = vsub.s32 0, %v4348
    %v4350 = vrot.slane %v2747, %v4349
    %v4351 = vadd.f32 %v4346, %v4350
    %v4352 = vpack.c.bf16 %v4351, %v4351
    %v4353 = vld [vmem:[#allocation6 + $0x64] sm:$0xf]
    %v4354 = vld [vmem:[#allocation6 + $0xcc] sm:$0xf]
    %v4355 = vld [vmem:[#allocation6 + $0x134] sm:$0xf]
    %v4356 = vld [vmem:[#allocation6 + $0x19c] sm:$0xf]
    %v4357 = vld [vmem:[#allocation9 + $0x19] sm:$0x1]
    %v4359 = vlaneseq
    %v4360 = vshrl.u32 %v4359, 7
    %v4361 = vsub.s32 0, %v4360
    %v4362 = vrot.slane %v4357, %v4361
    %v4368 = vunpack.c.l.b16 %v4353
    %v4369 = vunpack.c.l.b16 %v4354
    %v4370 = vunpack.c.l.b16 %v4355
    %v4371 = vunpack.c.l.b16 %v4356
    %v4372 = vpack.c.b16 %v4369, %v4368
    %v4373 = vpack.c.b16 %v4371, %v4370
    %v4377 = vsel %vm310, %v4352, 0
    %4379 = vmatprep.subr.bf16.mxu0 0
    %4380 = vmatpush1.bf16.msra.mxu0 0
    %4381 = vmatprep.subr.bf16.mxu0 0
    %4382 = vmatpush1.bf16.msra.mxu0 0
    %4383 = vmatprep.subr.bf16.mxu0 0
    %4384 = vmatpush1.bf16.msra.mxu0 0
    %4385 = vmatprep.subr.bf16.mxu0 0
    %4386 = vmatpush1.bf16.msra.mxu0 0
    %4387 = vmatprep.subr.bf16.mxu0 0
    %4388 = vmatpush1.bf16.msra.mxu0 0
    %4389 = vmatprep.subr.bf16.mxu0 0
    %4390 = vmatpush1.bf16.msra.mxu0 0
    %4391 = vmatprep.subr.bf16.mxu0 0
    %4392 = vmatpush1.bf16.msra.mxu0 %v4373
    %4393 = vmatprep.subr.bf16.mxu0 0
    %4394 = vmatpush1.bf16.msra.mxu0 %v4372
    %4395 = vmatprep.subr.bf16.mxu0 0
    %4396 = vmatpush2.bf16.msra.mxu0 0
    %4397 = vmatprep.subr.bf16.mxu0 0
    %4398 = vmatpush2.bf16.msra.mxu0 0
    %4399 = vmatprep.subr.bf16.mxu0 0
    %4400 = vmatpush2.bf16.msra.mxu0 0
    %4401 = vmatprep.subr.bf16.mxu0 0
    %4402 = vmatpush2.bf16.msra.mxu0 0
    %4403 = vmatprep.subr.bf16.mxu0 0
    %4404 = vmatpush2.bf16.msra.mxu0 0
    %4405 = vmatprep.subr.bf16.mxu0 0
    %4406 = vmatpush2.bf16.msra.mxu0 0
    %4407 = vmatprep.subr.bf16.mxu0 0
    %4408 = vmatpush2.bf16.msra.mxu0 0
    %4409 = vmatprep.subr.bf16.mxu0 0
    %4410 = vmatpush2.bf16.msra.mxu0 0
    %4411 = vmatprep.mubr.bf16.mxu0 0
    %4412 = vmatmul.mubr.bf16.gmra.mxu0 %v4377
    %v4413 = vpop.f32.mrf.mxu0
    %v4414 = vadd.f32 %v4362, %v4413
    %v4415 = vpop.f32.mrf.mxu0
    %v4416 = vpop.f32.mrf.mxu0
    %v4417 = vpop.f32.mrf.mxu0
    %4418 = vdwg.mxu0
    %v4419 = vmul.f32 %v4414, 0.5
    %v4420 = vmul.f32 %v4414, 0.044715
    %v4421 = vmul.f32 %v4420, %v4414
    %v4422 = vmul.f32 %v4421, %v4414
    %v4423 = vadd.f32 %v4414, %v4422
    %v4424 = vmul.f32 %v4423, 0.7978846
    %v4425 = vtanh.pop %v4424
    %v4426 = vadd.f32 %v4425, 1.0
    %v4427 = vmul.f32 %v4419, %v4426
    %v4428 = vpack.c.bf16 %v4427, %v4427
    %v4429 = vld [vmem:[#allocation7 + $0x4] sm:$0xf]
    %v4430 = vld [vmem:[#allocation7 + $0x1c] sm:$0xf]
    %v4431 = vld [vmem:[#allocation7 + $0x34] sm:$0xf]
    %v4432 = vld [vmem:[#allocation7 + $0x4c] sm:$0xf]
    %v4433 = vld [vmem:[#allocation7 + $0x64] sm:$0xf]
    %v4434 = vld [vmem:[#allocation7 + $0x7c] sm:$0xf]
    %v4435 = vld [vmem:[#allocation7 + $0x94] sm:$0xf]
    %v4436 = vld [vmem:[#allocation7 + $0xac] sm:$0xf]
    %v4437 = vld [vmem:[#allocation7 + $0xc4] sm:$0xf]
    %v4438 = vld [vmem:[#allocation7 + $0xdc] sm:$0xf]
    %v4439 = vld [vmem:[#allocation7 + $0xf4] sm:$0xf]
    %v4440 = vld [vmem:[#allocation7 + $0x10c] sm:$0xf]
    %v4441 = vld [vmem:[#allocation7 + $0x124] sm:$0xf]
    %v4442 = vld [vmem:[#allocation7 + $0x13c] sm:$0xf]
    %v4443 = vld [vmem:[#allocation7 + $0x154] sm:$0xf]
    %v4444 = vld [vmem:[#allocation7 + $0x16c] sm:$0xf]
    %v4445 = vld [vmem:[#allocation9 + $0x1b] sm:$0x1]
    %v4447 = vlaneseq
    %v4448 = vshrl.u32 %v4447, 7
    %v4449 = vsub.s32 0, %v4448
    %v4450 = vrot.slane %v4445, %v4449
    %v4468 = vunpack.c.l.b16 %v4429
    %v4469 = vunpack.c.l.b16 %v4430
    %v4470 = vunpack.c.l.b16 %v4431
    %v4471 = vunpack.c.l.b16 %v4432
    %v4472 = vunpack.c.l.b16 %v4433
    %v4473 = vunpack.c.l.b16 %v4434
    %v4474 = vunpack.c.l.b16 %v4435
    %v4475 = vunpack.c.l.b16 %v4436
    %v4476 = vunpack.c.l.b16 %v4437
    %v4477 = vunpack.c.l.b16 %v4438
    %v4478 = vunpack.c.l.b16 %v4439
    %v4479 = vunpack.c.l.b16 %v4440
    %v4480 = vunpack.c.l.b16 %v4441
    %v4481 = vunpack.c.l.b16 %v4442
    %v4482 = vunpack.c.l.b16 %v4443
    %v4483 = vunpack.c.l.b16 %v4444
    %v4484 = vpack.c.b16 %v4469, %v4468
    %v4485 = vpack.c.b16 %v4471, %v4470
    %v4486 = vpack.c.b16 %v4473, %v4472
    %v4487 = vpack.c.b16 %v4475, %v4474
    %v4488 = vpack.c.b16 %v4477, %v4476
    %v4489 = vpack.c.b16 %v4479, %v4478
    %v4490 = vpack.c.b16 %v4481, %v4480
    %v4491 = vpack.c.b16 %v4483, %v4482
    %4500 = vmatprep.subr.bf16.mxu0 0
    %4501 = vmatpush1.bf16.msra.mxu0 %v4491
    %4502 = vmatprep.subr.bf16.mxu0 0
    %4503 = vmatpush1.bf16.msra.mxu0 %v4490
    %4504 = vmatprep.subr.bf16.mxu0 0
    %4505 = vmatpush1.bf16.msra.mxu0 %v4489
    %4506 = vmatprep.subr.bf16.mxu0 0
    %4507 = vmatpush1.bf16.msra.mxu0 %v4488
    %4508 = vmatprep.subr.bf16.mxu0 0
    %4509 = vmatpush1.bf16.msra.mxu0 %v4487
    %4510 = vmatprep.subr.bf16.mxu0 0
    %4511 = vmatpush1.bf16.msra.mxu0 %v4486
    %4512 = vmatprep.subr.bf16.mxu0 0
    %4513 = vmatpush1.bf16.msra.mxu0 %v4485
    %4514 = vmatprep.subr.bf16.mxu0 0
    %4515 = vmatpush1.bf16.msra.mxu0 %v4484
    %4516 = vmatprep.subr.bf16.mxu0 0
    %4517 = vmatpush2.bf16.msra.mxu0 0
    %4518 = vmatprep.subr.bf16.mxu0 0
    %4519 = vmatpush2.bf16.msra.mxu0 0
    %4520 = vmatprep.subr.bf16.mxu0 0
    %4521 = vmatpush2.bf16.msra.mxu0 0
    %4522 = vmatprep.subr.bf16.mxu0 0
    %4523 = vmatpush2.bf16.msra.mxu0 0
    %4524 = vmatprep.subr.bf16.mxu0 0
    %4525 = vmatpush2.bf16.msra.mxu0 0
    %4526 = vmatprep.subr.bf16.mxu0 0
    %4527 = vmatpush2.bf16.msra.mxu0 0
    %4528 = vmatprep.subr.bf16.mxu0 0
    %4529 = vmatpush2.bf16.msra.mxu0 0
    %4530 = vmatprep.subr.bf16.mxu0 0
    %4531 = vmatpush2.bf16.msra.mxu0 0
    %4532 = vmatprep.mubr.bf16.mxu0 0
    %4533 = vmatmul.mubr.bf16.gmra.mxu0 %v4428
    %v4534 = vpop.f32.mrf.mxu0
    %v4535 = vadd.f32 %v4450, %v4534
    %v4536 = vpop.f32.mrf.mxu0
    %v4537 = vpop.f32.mrf.mxu0
    %v4538 = vpop.f32.mrf.mxu0
    %4539 = vdwg.mxu0
    %v4540 = vlaneseq
    %v4541 = vshrl.u32 %v4540, 7
    %v4542 = vsub.s32 0, %v4541
    %v4543 = vrot.slane %v2788, %v4542
    %v4544 = vmul.f32 %v4543, %v4535
    %v4545 = vadd.f32 %v4327, %v4544
    %s4546 = scalar_lea.vmem %s6, 24
    %4547 = vst.msk [vmem:[%s4546] sm:$0xff] %vm310, %v4320
    %4548 = vst.msk [vmem:[%s4546 + $0x8] sm:$0xff] %vm310, %v4321
    %4549 = vst.msk [vmem:[%s4546 + $0x10] sm:$0xff] %vm310, %v4545
    // Predicated region
    $region46: #{sd3_block.1} parent=1 // pred_check
      _
    $region47: #{sd3_block.1} parent=1 // pred_check_branch
      %4551 = sbr.rel (0) target = $region49
    $region48: #{sd3_block.1} parent=1 // pred_region
      _
    $region49: #{sd3_block.1} parent=1 // pred_fallthru
      _
    // Predicated region
    $region50: #{sd3_block.1} parent=1 // pred_check
      _
    $region51: #{sd3_block.1} parent=1 // pred_check_branch
      %4553 = sbr.rel (0) target = $region53
    $region52: #{sd3_block.1} parent=1 // pred_region
      _
    $region53: #{sd3_block.1} parent=1 // pred_fallthru
      _
    %4554 = vsyncpa [#allocation3], 1
    %4555 = vsyncpa [#allocation5], 1
    %4556 = vsyncpa [#allocation8], 1

</llo_original>
